<compile_context>
chip_gen: v6e
topology: v6e:2x2x1
jax: 0.10.0
libtpu: 0.0.40
codegen_flags: <defaults>
</compile_context>

<pallas_src>
import functools

import jax
import jax.numpy as jnp
from jax.experimental import pallas as pl
from jax.experimental.pallas import tpu as pltpu


# ----------------------------------------------------------------------------
# Fused per-image kernel (grid=(B,))
# ----------------------------------------------------------------------------
def _forward_kernel(x_ref, band1_ref, b1row_ref, band2_ref, b2row_ref,
                    fcw_ref, fcb_ref, bandp_ref, bcrow_ref, w1y_ref, b1l_ref,
                    w2_ref, b2l_ref, w3_ref, b3l_ref,
                    out_ref, p1_ref, p2_ref, pp_ref, wy_ref, *, C, H, W, k, P):
    f32 = jnp.float32
    H2, W2 = H // 2, W // 2
    Wp, Pp = W + 2, P + 2

    # ------------------------- KeypointDetector -------------------------
    # Zero-padded image scratch, lanes = c*(W+2) + x_pad (channel-major blocks).
    p1_ref[...] = jnp.zeros_like(p1_ref)
    for c in range(C):
        p1_ref[1:H + 1, c * Wp + 1:c * Wp + 1 + W] = x_ref[0, c]

    # conv1 (3x3, pad 1, C->16) as 3 banded matmuls.  Output lanes are
    # x-parity-major so MaxPool2d(2) over x is a single max of two lane halves.
    a1 = jnp.dot(p1_ref[0:H, :], band1_ref[0], preferred_element_type=f32)
    a1 += jnp.dot(p1_ref[1:H + 1, :], band1_ref[1], preferred_element_type=f32)
    a1 += jnp.dot(p1_ref[2:H + 2, :], band1_ref[2], preferred_element_type=f32)
    a1 = jnp.maximum(a1 + b1row_ref[...], 0.0)                     # (H, W*16)

    half = W2 * 16
    xpool = jnp.maximum(a1[:, 0:half], a1[:, half:2 * half])       # (H, W2*16)
    # y-pooling, written into the zero-padded conv2 input (lanes = x2_pad*16+c).
    p2_ref[...] = jnp.zeros_like(p2_ref)
    for y2 in range(H2):
        p2_ref[1 + y2:2 + y2, 16:16 + half] = jnp.maximum(
            xpool[2 * y2:2 * y2 + 1, :], xpool[2 * y2 + 1:2 * y2 + 2, :])

    # conv2 (3x3, pad 1, 16->32) + ReLU.  AdaptiveAvgPool2d(1) + fc are folded:
    # fcw already contains fc.weight.T tiled over x2 and divided by H2*W2.
    a2 = jnp.dot(p2_ref[0:H2, :], band2_ref[0], preferred_element_type=f32)
    a2 += jnp.dot(p2_ref[1:H2 + 1, :], band2_ref[1], preferred_element_type=f32)
    a2 += jnp.dot(p2_ref[2:H2 + 2, :], band2_ref[2], preferred_element_type=f32)
    a2 = jnp.maximum(a2 + b2row_ref[...], 0.0)                     # (H2, W2*32)
    s2 = jnp.sum(a2, axis=0, keepdims=True)                        # (1, W2*32)
    coords = jnp.clip(
        jnp.dot(s2, fcw_ref[...], preferred_element_type=f32) + fcb_ref[...],
        -1.0, 1.0)                                                 # (1, 2k)

    # --------------- extract_patches (separable bilinear grid_sample) --------
    r = float(P) / float(H)                 # patch_radius = patch_size / H
    step = 2.0 * r / float(P - 1)           # linspace(-r, r, P) step
    coords_p = jnp.broadcast_to(coords, (P, 2 * k))   # row-broadcast copies
    coords_w = jnp.broadcast_to(coords, (W, 2 * k))

    def axis_weights(center_col, npix, patch_dim):
        """Bilinear weights (align_corners=True, zeros padding) for one axis.
        patch_dim==0 -> (P, npix), rows are patch positions;
        patch_dim==1 -> (npix, P), cols are patch positions."""
        shape = (P, npix) if patch_dim == 0 else (npix, P)
        pidx = jax.lax.broadcasted_iota(jnp.int32, shape, patch_dim).astype(f32)
        gidx = jax.lax.broadcasted_iota(jnp.int32, shape, 1 - patch_dim).astype(f32)
        pos = (center_col + 2.0 * (pidx * step - r) + 1.0) * 0.5 * (npix - 1)
        p0 = jnp.floor(pos)
        w1 = pos - p0
        # out-of-range corners match no pixel -> zero weight == zeros padding
        return ((1.0 - w1) * (gidx == p0).astype(f32)
                + w1 * (gidx == p0 + 1.0).astype(f32))

    wxt = []
    for kp in range(k):
        cy_col = coords_p[:, 2 * kp + 1:2 * kp + 2]          # (P, 1)
        cx_col = coords_w[:, 2 * kp:2 * kp + 1]              # (W, 1)
        wy_ref[kp * P:(kp + 1) * P, :] = axis_weights(cy_col, H, 0)   # (P, H)
        wxt.append(axis_weights(cx_col, W, 1))               # (W, P)

    # stage 1: one matmul batched over keypoints and channels (the zero pad
    # lanes of p1 just produce unused zero columns).
    t_all = jnp.dot(wy_ref[...], p1_ref[1:H + 1, :],
                    preferred_element_type=f32)               # (k*P, (W+2)*C)

    # stage 2: (P,W)@(W,P) per (keypoint, channel) straight into the
    # zero-padded patch buffer the classifier conv reads
    # (lanes = (kp*C + c)*(P+2) + x_pad).
    pp_ref[...] = jnp.zeros_like(pp_ref)
    for kp in range(k):
        for c in range(C):
            t_kc = t_all[kp * P:(kp + 1) * P, c * Wp + 1:c * Wp + 1 + W]
            patch = jnp.dot(t_kc, wxt[kp], preferred_element_type=f32)  # (P, P)
            base = (kp * C + c) * Pp + 1
            pp_ref[1:P + 1, base:base + P] = patch

    # ------------------------- PatchClassifier -------------------------
    # conv (3x3, pad 1, C->8) over all k patches at once (block-diagonal bands).
    cc = jnp.dot(pp_ref[0:P, :], bandp_ref[0], preferred_element_type=f32)
    cc += jnp.dot(pp_ref[1:P + 1, :], bandp_ref[1], preferred_element_type=f32)
    cc += jnp.dot(pp_ref[2:P + 2, :], bandp_ref[2], preferred_element_type=f32)
    cc = jnp.maximum(cc + bcrow_ref[...], 0.0)                 # (P, k*P*8)

    # channel-first Flatten + Linear(8*P*P, 64) + view(B, k*64): w1y already has
    # the flatten permutation and the per-keypoint block structure baked in.
    feats = jnp.dot(cc[0:1, :], w1y_ref[0], preferred_element_type=f32)
    for y in range(1, P):
        feats += jnp.dot(cc[y:y + 1, :], w1y_ref[y], preferred_element_type=f32)
    feats = jnp.maximum(feats + b1l_ref[...], 0.0)             # (1, k*64)

    # TODO(synk): Dropout(0.25)/Dropout(0.5) are identity at inference; training
    # mode would need pltpu.prng_* masks in-kernel.
    h = jnp.dot(feats, w2_ref[...], preferred_element_type=f32) + b2l_ref[...]
    logits = jnp.dot(h, w3_ref[...], preferred_element_type=f32) + b3l_ref[...]
    out_ref[0] = logits                                        # (1, num_classes)


# ----------------------------------------------------------------------------
# One-time parameter re-layout (analogous to inference-time weight fusion).
# ----------------------------------------------------------------------------
def prepare_kernel_params(params, *, k, patch_size, channels, H, W):
    f32 = jnp.float32
    P = patch_size
    H2, W2 = H // 2, W // 2

    def conv_bands(w, width):
        """PyTorch conv weight (O, Cin, 3, 3) -> (3, (width+2)*Cin, width*O)
        banded matrices: rows indexed xin*Cin + c, cols indexed x*O + o."""
        bands = []
        for dy in range(3):
            m = 0.0
            for dx in range(3):
                m = m + jnp.kron(jnp.eye(width + 2, width, k=-dx, dtype=f32),
                                 w[:, :, dy, dx].astype(f32).T)
            bands.append(m)
        return jnp.stack(bands)

    def rows_channel_major(b, width, cin):
        three, rows, cols = b.shape
        return (b.reshape(three, width + 2, cin, cols)
                 .transpose(0, 2, 1, 3).reshape(three, rows, cols))

    def cols_parity_major(b, width, o):
        three, rows, cols = b.shape
        return (b.reshape(three, rows, width // 2, 2, o)
                 .transpose(0, 1, 3, 2, 4).reshape(three, rows, cols))

    # detector conv1: rows match the channel-major padded-image scratch; cols are
    # x-parity-major so the kernel's MaxPool over x is one max of two lane halves.
    band1 = conv_bands(params["det_c1_w"], W)
    band1 = cols_parity_major(rows_channel_major(band1, W, channels), W, 16)
    b1row = jnp.tile(params["det_c1_b"].astype(f32), W).reshape(1, -1)

    # detector conv2: rows already match the pooled scratch layout (x-major).
    band2 = conv_bands(params["det_c2_w"], W2)
    b2row = jnp.tile(params["det_c2_b"].astype(f32), W2).reshape(1, -1)

    # AdaptiveAvgPool2d(1) + fc folded into a single (W2*32, 2k) matrix.
    fcw = jnp.tile(params["det_fc_w"].astype(f32).T, (W2, 1)) / float(H2 * W2)
    fcb = params["det_fc_b"].astype(f32).reshape(1, -1)

    # classifier conv over all k patches at once: block-diagonal banded weights.
    bandp = rows_channel_major(conv_bands(params["cls_c1_w"], P), P, channels)
    eye_k = jnp.eye(k, dtype=f32)
    bandp = jnp.stack([jnp.kron(eye_k, bandp[d]) for d in range(3)])
    bcrow = jnp.tile(params["cls_c1_b"].astype(f32), k * P).reshape(1, -1)

    # channel-first Flatten + Linear(8*P*P, 64) + view(B, k*64): fold the
    # flatten permutation and keypoint block structure into the weight.
    w1 = params["cls_l1_w"].astype(f32).reshape(64, 8, P, P)       # [n, o, y, x]
    w1r = w1.transpose(2, 3, 1, 0).reshape(P, P * 8, 64)           # [y][x*8+o, n]
    w1y = jnp.stack([jnp.kron(eye_k, w1r[y]) for y in range(P)])   # (P, k*P*8, k*64)
    b1l = jnp.tile(params["cls_l1_b"].astype(f32), k).reshape(1, -1)

    w2 = params["cls_l2_w"].astype(f32).T
    b2l = params["cls_l2_b"].astype(f32).reshape(1, -1)
    w3 = params["cls_l3_w"].astype(f32).T
    b3l = params["cls_l3_b"].astype(f32).reshape(1, -1)

    return {"band1": band1, "b1row": b1row, "band2": band2, "b2row": b2row,
            "fcw": fcw, "fcb": fcb, "bandp": bandp, "bcrow": bcrow,
            "w1y": w1y, "b1l": b1l, "w2": w2, "b2l": b2l, "w3": w3, "b3l": b3l}


# ----------------------------------------------------------------------------
# Forward pass = one pallas_call
# ----------------------------------------------------------------------------
def keypoint_patch_forward(kparams, x, *, k, patch_size, num_classes):
    """x: (B, C, H, W) float32 (NCHW).  Returns logits (B, num_classes)."""
    B, C, H, W = x.shape
    P = patch_size
    H2, W2 = H // 2, W // 2

    names = ("band1", "b1row", "band2", "b2row", "fcw", "fcb", "bandp", "bcrow",
             "w1y", "b1l", "w2", "b2l", "w3", "b3l")
    weights = [kparams[n] for n in names]

    def const_spec(a):
        zeros = (0,) * a.ndim
        return pl.BlockSpec(a.shape, lambda b, _z=zeros: _z)

    out = pl.pallas_call(
        functools.partial(_forward_kernel, C=C, H=H, W=W, k=k, P=P),
        out_shape=jax.ShapeDtypeStruct((B, 1, num_classes), jnp.float32),
        grid=(B,),
        in_specs=[pl.BlockSpec((1, C, H, W), lambda b: (b, 0, 0, 0))]
                 + [const_spec(w) for w in weights],
        out_specs=pl.BlockSpec((1, 1, num_classes), lambda b: (b, 0, 0)),
        scratch_shapes=[
            pltpu.VMEM((H + 2, (W + 2) * C), jnp.float32),      # padded image
            pltpu.VMEM((H2 + 2, (W2 + 2) * 16), jnp.float32),   # padded pooled map
            pltpu.VMEM((P + 2, k * (P + 2) * C), jnp.float32),  # padded patches
            pltpu.VMEM((k * P, H), jnp.float32),                # stacked wy
        ],
        compiler_params=pltpu.CompilerParams(
            dimension_semantics=("parallel",)),
    )(x.astype(jnp.float32), *weights)
    return out.reshape(B, num_classes)


# ----------------------------------------------------------------------------
# Parameter initialization (deterministic, PyTorch-default-like uniform)
# ----------------------------------------------------------------------------
def _uniform(key, shape, fan_in):
    bound = 1.0 / jnp.sqrt(jnp.float32(fan_in))
    return jax.random.uniform(key, shape, jnp.float32, -bound, bound)


def init_params(key, k, patch_size, channels, num_classes):
    keys = jax.random.split(key, 16)
    P = patch_size
    return {
        # detector
        "det_c1_w": _uniform(keys[0], (16, channels, 3, 3), channels * 9),
        "det_c1_b": _uniform(keys[1], (16,), channels * 9),
        "det_c2_w": _uniform(keys[2], (32, 16, 3, 3), 16 * 9),
        "det_c2_b": _uniform(keys[3], (32,), 16 * 9),
        "det_fc_w": _uniform(keys[4], (2 * k, 32), 32),
        "det_fc_b": _uniform(keys[5], (2 * k,), 32),
        # classifier
        "cls_c1_w": _uniform(keys[6], (8, channels, 3, 3), channels * 9),
        "cls_c1_b": _uniform(keys[7], (8,), channels * 9),
        "cls_l1_w": _uniform(keys[8], (64, 8 * P * P), 8 * P * P),
        "cls_l1_b": _uniform(keys[9], (64,), 8 * P * P),
        "cls_l2_w": _uniform(keys[10], (64 * k, 64 * k), 64 * k),
        "cls_l2_b": _uniform(keys[11], (64 * k,), 64 * k),
        "cls_l3_w": _uniform(keys[12], (num_classes, 64 * k), 64 * k),
        "cls_l3_b": _uniform(keys[13], (num_classes,), 64 * k),
    }


# ----------------------------------------------------------------------------
if __name__ == "__main__":
    # Small shapes consistent with the module: image_shape = (C, H, W)
    B, C, H, W = 2, 4, 16, 16
    k, patch_size, num_classes = 3, 5, 10

    key = jax.random.PRNGKey(0)
    kx, kparams_key = jax.random.split(key)
    x = jax.random.normal(kx, (B, C, H, W), dtype=jnp.float32)
    params = init_params(kparams_key, k, patch_size, C, num_classes)

    # One-time weight re-layout (kept out of the per-call jitted forward).
    kernel_params = prepare_kernel_params(params, k=k, patch_size=patch_size,
                                          channels=C, H=H, W=W)

    fwd = jax.jit(functools.partial(keypoint_patch_forward, k=k,
                                    patch_size=patch_size,
                                    num_classes=num_classes))
    out = jax.block_until_ready(fwd(kernel_params, x))
    assert out.shape == (B, num_classes)
    assert jnp.all(jnp.isfinite(out))
    print("KERNEL_OK")
</pallas_src>

<mosaic_0001>
module attributes {stable_mosaic.version = 11 : i64} {
  func.func @_forward_kernel(%arg0: i32, %arg1: memref<1x4x16x16xf32, #tpu.memory_space<vmem>>, %arg2: memref<3x72x256xf32, #tpu.memory_space<vmem>>, %arg3: memref<1x256xf32, #tpu.memory_space<vmem>>, %arg4: memref<3x160x256xf32, #tpu.memory_space<vmem>>, %arg5: memref<1x256xf32, #tpu.memory_space<vmem>>, %arg6: memref<256x6xf32, #tpu.memory_space<vmem>>, %arg7: memref<1x6xf32, #tpu.memory_space<vmem>>, %arg8: memref<3x84x120xf32, #tpu.memory_space<vmem>>, %arg9: memref<1x120xf32, #tpu.memory_space<vmem>>, %arg10: memref<5x120x192xf32, #tpu.memory_space<vmem>>, %arg11: memref<1x192xf32, #tpu.memory_space<vmem>>, %arg12: memref<192x192xf32, #tpu.memory_space<vmem>>, %arg13: memref<1x192xf32, #tpu.memory_space<vmem>>, %arg14: memref<192x10xf32, #tpu.memory_space<vmem>>, %arg15: memref<1x10xf32, #tpu.memory_space<vmem>>, %arg16: memref<1x1x10xf32, #tpu.memory_space<vmem>>, %arg17: memref<18x72xf32, #tpu.memory_space<vmem>>, %arg18: memref<10x160xf32, #tpu.memory_space<vmem>>, %arg19: memref<7x84xf32, #tpu.memory_space<vmem>>, %arg20: memref<15x16xf32, #tpu.memory_space<vmem>>) attributes {dimension_semantics = [#tpu.dimension_semantics<parallel>], iteration_bounds = array<i64: 2>, scalar_prefetch = 0 : i64, scratch_operands = 4 : i64, tpu.core_type = #tpu.core_type<tc>, window_params = [{transform_indices = @transform_0, window_bounds = array<i64: 1, 4, 16, 16>}, {pipeline_mode = #tpu.pipeline_mode<synchronous>, transform_indices = @transform_1, window_bounds = array<i64: 3, 72, 256>}, {pipeline_mode = #tpu.pipeline_mode<synchronous>, transform_indices = @transform_2, window_bounds = array<i64: 1, 256>}, {pipeline_mode = #tpu.pipeline_mode<synchronous>, transform_indices = @transform_3, window_bounds = array<i64: 3, 160, 256>}, {pipeline_mode = #tpu.pipeline_mode<synchronous>, transform_indices = @transform_4, window_bounds = array<i64: 1, 256>}, {pipeline_mode = #tpu.pipeline_mode<synchronous>, transform_indices = @transform_5, window_bounds = array<i64: 256, 6>}, {pipeline_mode = #tpu.pipeline_mode<synchronous>, transform_indices = @transform_6, window_bounds = array<i64: 1, 6>}, {pipeline_mode = #tpu.pipeline_mode<synchronous>, transform_indices = @transform_7, window_bounds = array<i64: 3, 84, 120>}, {pipeline_mode = #tpu.pipeline_mode<synchronous>, transform_indices = @transform_8, window_bounds = array<i64: 1, 120>}, {pipeline_mode = #tpu.pipeline_mode<synchronous>, transform_indices = @transform_9, window_bounds = array<i64: 5, 120, 192>}, {pipeline_mode = #tpu.pipeline_mode<synchronous>, transform_indices = @transform_10, window_bounds = array<i64: 1, 192>}, {pipeline_mode = #tpu.pipeline_mode<synchronous>, transform_indices = @transform_11, window_bounds = array<i64: 192, 192>}, {pipeline_mode = #tpu.pipeline_mode<synchronous>, transform_indices = @transform_12, window_bounds = array<i64: 1, 192>}, {pipeline_mode = #tpu.pipeline_mode<synchronous>, transform_indices = @transform_13, window_bounds = array<i64: 192, 10>}, {pipeline_mode = #tpu.pipeline_mode<synchronous>, transform_indices = @transform_14, window_bounds = array<i64: 1, 10>}, {transform_indices = @transform_15, window_bounds = array<i64: 1, 1, 10>}]} {
    %cst = arith.constant 0.000000e+00 : f32
    %0 = vector.broadcast %cst : f32 to vector<18x72xf32>
    %c0 = arith.constant 0 : index
    %c0_0 = arith.constant 0 : index
    %1 = vector.load %arg17[%c0, %c0_0] : memref<18x72xf32, #tpu.memory_space<vmem>>, vector<18x72xf32>
    tpu.vector_store %arg17[%c0, %c0_0], %0 {strides = array<i32>} : memref<18x72xf32, #tpu.memory_space<vmem>>, vector<18x72xf32>,
    %c0_1 = arith.constant 0 : index
    %c0_2 = arith.constant 0 : index
    %c0_3 = arith.constant 0 : index
    %c0_4 = arith.constant 0 : index
    %2 = vector.load %arg1[%c0_1, %c0_2, %c0_3, %c0_4] : memref<1x4x16x16xf32, #tpu.memory_space<vmem>>, vector<1x1x16x16xf32>
    %3 = vector.shape_cast %2 : vector<1x1x16x16xf32> to vector<16x16xf32>
    %c1 = arith.constant 1 : index
    %c1_5 = arith.constant 1 : index
    %4 = vector.load %arg17[%c1, %c1_5] : memref<18x72xf32, #tpu.memory_space<vmem>>, vector<16x16xf32>
    tpu.vector_store %arg17[%c1, %c1_5], %3 {strides = array<i32>} : memref<18x72xf32, #tpu.memory_space<vmem>>, vector<16x16xf32>,
    %c0_6 = arith.constant 0 : index
    %c1_7 = arith.constant 1 : index
    %c0_8 = arith.constant 0 : index
    %c0_9 = arith.constant 0 : index
    %5 = vector.load %arg1[%c0_6, %c1_7, %c0_8, %c0_9] : memref<1x4x16x16xf32, #tpu.memory_space<vmem>>, vector<1x1x16x16xf32>
    %6 = vector.shape_cast %5 : vector<1x1x16x16xf32> to vector<16x16xf32>
    %c1_10 = arith.constant 1 : index
    %c19 = arith.constant 19 : index
    %7 = vector.load %arg17[%c1_10, %c19] : memref<18x72xf32, #tpu.memory_space<vmem>>, vector<16x16xf32>
    tpu.vector_store %arg17[%c1_10, %c19], %6 {strides = array<i32>} : memref<18x72xf32, #tpu.memory_space<vmem>>, vector<16x16xf32>,
    %c0_11 = arith.constant 0 : index
    %c2 = arith.constant 2 : index
    %c0_12 = arith.constant 0 : index
    %c0_13 = arith.constant 0 : index
    %8 = vector.load %arg1[%c0_11, %c2, %c0_12, %c0_13] : memref<1x4x16x16xf32, #tpu.memory_space<vmem>>, vector<1x1x16x16xf32>
    %9 = vector.shape_cast %8 : vector<1x1x16x16xf32> to vector<16x16xf32>
    %c1_14 = arith.constant 1 : index
    %c37 = arith.constant 37 : index
    %10 = vector.load %arg17[%c1_14, %c37] : memref<18x72xf32, #tpu.memory_space<vmem>>, vector<16x16xf32>
    tpu.vector_store %arg17[%c1_14, %c37], %9 {strides = array<i32>} : memref<18x72xf32, #tpu.memory_space<vmem>>, vector<16x16xf32>,
    %c0_15 = arith.constant 0 : index
    %c3 = arith.constant 3 : index
    %c0_16 = arith.constant 0 : index
    %c0_17 = arith.constant 0 : index
    %11 = vector.load %arg1[%c0_15, %c3, %c0_16, %c0_17] : memref<1x4x16x16xf32, #tpu.memory_space<vmem>>, vector<1x1x16x16xf32>
    %12 = vector.shape_cast %11 : vector<1x1x16x16xf32> to vector<16x16xf32>
    %c1_18 = arith.constant 1 : index
    %c55 = arith.constant 55 : index
    %13 = vector.load %arg17[%c1_18, %c55] : memref<18x72xf32, #tpu.memory_space<vmem>>, vector<16x16xf32>
    tpu.vector_store %arg17[%c1_18, %c55], %12 {strides = array<i32>} : memref<18x72xf32, #tpu.memory_space<vmem>>, vector<16x16xf32>,
    %c0_19 = arith.constant 0 : index
    %c0_20 = arith.constant 0 : index
    %14 = vector.load %arg17[%c0_19, %c0_20] : memref<18x72xf32, #tpu.memory_space<vmem>>, vector<16x72xf32>
    %c0_21 = arith.constant 0 : index
    %c0_22 = arith.constant 0 : index
    %c0_23 = arith.constant 0 : index
    %15 = vector.load %arg2[%c0_21, %c0_22, %c0_23] : memref<3x72x256xf32, #tpu.memory_space<vmem>>, vector<1x72x256xf32>
    %16 = vector.shape_cast %15 : vector<1x72x256xf32> to vector<72x256xf32>
    %cst_24 = arith.constant dense<0.000000e+00> : vector<16x256xf32>
    %17 = tpu.matmul %14, %16, %cst_24 {dimension_numbers = #tpu.dot_dimension_numbers<[1], [0], [0], [1], [0, 0, 1, 1], [], []>} : vector<16x72xf32>, vector<72x256xf32>, vector<16x256xf32> -> vector<16x256xf32>
    %c1_25 = arith.constant 1 : index
    %c0_26 = arith.constant 0 : index
    %18 = vector.load %arg17[%c1_25, %c0_26] : memref<18x72xf32, #tpu.memory_space<vmem>>, vector<16x72xf32>
    %c1_27 = arith.constant 1 : index
    %c0_28 = arith.constant 0 : index
    %c0_29 = arith.constant 0 : index
    %19 = vector.load %arg2[%c1_27, %c0_28, %c0_29] : memref<3x72x256xf32, #tpu.memory_space<vmem>>, vector<1x72x256xf32>
    %20 = vector.shape_cast %19 : vector<1x72x256xf32> to vector<72x256xf32>
    %cst_30 = arith.constant dense<0.000000e+00> : vector<16x256xf32>
    %21 = tpu.matmul %18, %20, %cst_30 {dimension_numbers = #tpu.dot_dimension_numbers<[1], [0], [0], [1], [0, 0, 1, 1], [], []>} : vector<16x72xf32>, vector<72x256xf32>, vector<16x256xf32> -> vector<16x256xf32>
    %22 = arith.addf %17, %21 : vector<16x256xf32>
    %c2_31 = arith.constant 2 : index
    %c0_32 = arith.constant 0 : index
    %23 = vector.load %arg17[%c2_31, %c0_32] : memref<18x72xf32, #tpu.memory_space<vmem>>, vector<16x72xf32>
    %c2_33 = arith.constant 2 : index
    %c0_34 = arith.constant 0 : index
    %c0_35 = arith.constant 0 : index
    %24 = vector.load %arg2[%c2_33, %c0_34, %c0_35] : memref<3x72x256xf32, #tpu.memory_space<vmem>>, vector<1x72x256xf32>
    %25 = vector.shape_cast %24 : vector<1x72x256xf32> to vector<72x256xf32>
    %cst_36 = arith.constant dense<0.000000e+00> : vector<16x256xf32>
    %26 = tpu.matmul %23, %25, %cst_36 {dimension_numbers = #tpu.dot_dimension_numbers<[1], [0], [0], [1], [0, 0, 1, 1], [], []>} : vector<16x72xf32>, vector<72x256xf32>, vector<16x256xf32> -> vector<16x256xf32>
    %27 = arith.addf %22, %26 : vector<16x256xf32>
    %c0_37 = arith.constant 0 : index
    %c0_38 = arith.constant 0 : index
    %28 = vector.load %arg3[%c0_37, %c0_38] : memref<1x256xf32, #tpu.memory_space<vmem>>, vector<1x256xf32>
    %29 = vector.broadcast %28 : vector<1x256xf32> to vector<16x256xf32>
    %30 = arith.addf %27, %29 : vector<16x256xf32>
    %cst_39 = arith.constant 0.000000e+00 : f32
    %31 = vector.broadcast %cst_39 : f32 to vector<16x256xf32>
    %32 = arith.maximumf %30, %31 : vector<16x256xf32>
    %33 = vector.extract_strided_slice %32 {offsets = [0, 0], sizes = [16, 128], strides = [1, 1]} : vector<16x256xf32> to vector<16x128xf32>
    %34 = vector.extract_strided_slice %32 {offsets = [0, 128], sizes = [16, 128], strides = [1, 1]} : vector<16x256xf32> to vector<16x128xf32>
    %35 = arith.maximumf %33, %34 : vector<16x128xf32>
    %cst_40 = arith.constant 0.000000e+00 : f32
    %36 = vector.broadcast %cst_40 : f32 to vector<10x160xf32>
    %c0_41 = arith.constant 0 : index
    %c0_42 = arith.constant 0 : index
    %37 = vector.load %arg18[%c0_41, %c0_42] : memref<10x160xf32, #tpu.memory_space<vmem>>, vector<10x160xf32>
    tpu.vector_store %arg18[%c0_41, %c0_42], %36 {strides = array<i32>} : memref<10x160xf32, #tpu.memory_space<vmem>>, vector<10x160xf32>,
    %38 = vector.extract_strided_slice %35 {offsets = [0, 0], sizes = [1, 128], strides = [1, 1]} : vector<16x128xf32> to vector<1x128xf32>
    %39 = vector.extract_strided_slice %35 {offsets = [1, 0], sizes = [1, 128], strides = [1, 1]} : vector<16x128xf32> to vector<1x128xf32>
    %40 = arith.maximumf %38, %39 : vector<1x128xf32>
    %c1_43 = arith.constant 1 : index
    %c16 = arith.constant 16 : index
    %41 = vector.load %arg18[%c1_43, %c16] : memref<10x160xf32, #tpu.memory_space<vmem>>, vector<1x128xf32>
    tpu.vector_store %arg18[%c1_43, %c16], %40 {strides = array<i32>} : memref<10x160xf32, #tpu.memory_space<vmem>>, vector<1x128xf32>,
    %42 = vector.extract_strided_slice %35 {offsets = [2, 0], sizes = [1, 128], strides = [1, 1]} : vector<16x128xf32> to vector<1x128xf32>
    %43 = vector.extract_strided_slice %35 {offsets = [3, 0], sizes = [1, 128], strides = [1, 1]} : vector<16x128xf32> to vector<1x128xf32>
    %44 = arith.maximumf %42, %43 : vector<1x128xf32>
    %c2_44 = arith.constant 2 : index
    %c16_45 = arith.constant 16 : index
    %45 = vector.load %arg18[%c2_44, %c16_45] : memref<10x160xf32, #tpu.memory_space<vmem>>, vector<1x128xf32>
    tpu.vector_store %arg18[%c2_44, %c16_45], %44 {strides = array<i32>} : memref<10x160xf32, #tpu.memory_space<vmem>>, vector<1x128xf32>,
    %46 = vector.extract_strided_slice %35 {offsets = [4, 0], sizes = [1, 128], strides = [1, 1]} : vector<16x128xf32> to vector<1x128xf32>
    %47 = vector.extract_strided_slice %35 {offsets = [5, 0], sizes = [1, 128], strides = [1, 1]} : vector<16x128xf32> to vector<1x128xf32>
    %48 = arith.maximumf %46, %47 : vector<1x128xf32>
    %c3_46 = arith.constant 3 : index
    %c16_47 = arith.constant 16 : index
    %49 = vector.load %arg18[%c3_46, %c16_47] : memref<10x160xf32, #tpu.memory_space<vmem>>, vector<1x128xf32>
    tpu.vector_store %arg18[%c3_46, %c16_47], %48 {strides = array<i32>} : memref<10x160xf32, #tpu.memory_space<vmem>>, vector<1x128xf32>,
    %50 = vector.extract_strided_slice %35 {offsets = [6, 0], sizes = [1, 128], strides = [1, 1]} : vector<16x128xf32> to vector<1x128xf32>
    %51 = vector.extract_strided_slice %35 {offsets = [7, 0], sizes = [1, 128], strides = [1, 1]} : vector<16x128xf32> to vector<1x128xf32>
    %52 = arith.maximumf %50, %51 : vector<1x128xf32>
    %c4 = arith.constant 4 : index
    %c16_48 = arith.constant 16 : index
    %53 = vector.load %arg18[%c4, %c16_48] : memref<10x160xf32, #tpu.memory_space<vmem>>, vector<1x128xf32>
    tpu.vector_store %arg18[%c4, %c16_48], %52 {strides = array<i32>} : memref<10x160xf32, #tpu.memory_space<vmem>>, vector<1x128xf32>,
    %54 = vector.extract_strided_slice %35 {offsets = [8, 0], sizes = [1, 128], strides = [1, 1]} : vector<16x128xf32> to vector<1x128xf32>
    %55 = vector.extract_strided_slice %35 {offsets = [9, 0], sizes = [1, 128], strides = [1, 1]} : vector<16x128xf32> to vector<1x128xf32>
    %56 = arith.maximumf %54, %55 : vector<1x128xf32>
    %c5 = arith.constant 5 : index
    %c16_49 = arith.constant 16 : index
    %57 = vector.load %arg18[%c5, %c16_49] : memref<10x160xf32, #tpu.memory_space<vmem>>, vector<1x128xf32>
    tpu.vector_store %arg18[%c5, %c16_49], %56 {strides = array<i32>} : memref<10x160xf32, #tpu.memory_space<vmem>>, vector<1x128xf32>,
    %58 = vector.extract_strided_slice %35 {offsets = [10, 0], sizes = [1, 128], strides = [1, 1]} : vector<16x128xf32> to vector<1x128xf32>
    %59 = vector.extract_strided_slice %35 {offsets = [11, 0], sizes = [1, 128], strides = [1, 1]} : vector<16x128xf32> to vector<1x128xf32>
    %60 = arith.maximumf %58, %59 : vector<1x128xf32>
    %c6 = arith.constant 6 : index
    %c16_50 = arith.constant 16 : index
    %61 = vector.load %arg18[%c6, %c16_50] : memref<10x160xf32, #tpu.memory_space<vmem>>, vector<1x128xf32>
    tpu.vector_store %arg18[%c6, %c16_50], %60 {strides = array<i32>} : memref<10x160xf32, #tpu.memory_space<vmem>>, vector<1x128xf32>,
    %62 = vector.extract_strided_slice %35 {offsets = [12, 0], sizes = [1, 128], strides = [1, 1]} : vector<16x128xf32> to vector<1x128xf32>
    %63 = vector.extract_strided_slice %35 {offsets = [13, 0], sizes = [1, 128], strides = [1, 1]} : vector<16x128xf32> to vector<1x128xf32>
    %64 = arith.maximumf %62, %63 : vector<1x128xf32>
    %c7 = arith.constant 7 : index
    %c16_51 = arith.constant 16 : index
    %65 = vector.load %arg18[%c7, %c16_51] : memref<10x160xf32, #tpu.memory_space<vmem>>, vector<1x128xf32>
    tpu.vector_store %arg18[%c7, %c16_51], %64 {strides = array<i32>} : memref<10x160xf32, #tpu.memory_space<vmem>>, vector<1x128xf32>,
    %66 = vector.extract_strided_slice %35 {offsets = [14, 0], sizes = [1, 128], strides = [1, 1]} : vector<16x128xf32> to vector<1x128xf32>
    %67 = vector.extract_strided_slice %35 {offsets = [15, 0], sizes = [1, 128], strides = [1, 1]} : vector<16x128xf32> to vector<1x128xf32>
    %68 = arith.maximumf %66, %67 : vector<1x128xf32>
    %c8 = arith.constant 8 : index
    %c16_52 = arith.constant 16 : index
    %69 = vector.load %arg18[%c8, %c16_52] : memref<10x160xf32, #tpu.memory_space<vmem>>, vector<1x128xf32>
    tpu.vector_store %arg18[%c8, %c16_52], %68 {strides = array<i32>} : memref<10x160xf32, #tpu.memory_space<vmem>>, vector<1x128xf32>,
    %c0_53 = arith.constant 0 : index
    %c0_54 = arith.constant 0 : index
    %70 = vector.load %arg18[%c0_53, %c0_54] : memref<10x160xf32, #tpu.memory_space<vmem>>, vector<8x160xf32>
    %c0_55 = arith.constant 0 : index
    %c0_56 = arith.constant 0 : index
    %c0_57 = arith.constant 0 : index
    %71 = vector.load %arg4[%c0_55, %c0_56, %c0_57] : memref<3x160x256xf32, #tpu.memory_space<vmem>>, vector<1x160x256xf32>
    %72 = vector.shape_cast %71 : vector<1x160x256xf32> to vector<160x256xf32>
    %cst_58 = arith.constant dense<0.000000e+00> : vector<8x256xf32>
    %73 = tpu.matmul %70, %72, %cst_58 {dimension_numbers = #tpu.dot_dimension_numbers<[1], [0], [0], [1], [0, 0, 1, 1], [], []>} : vector<8x160xf32>, vector<160x256xf32>, vector<8x256xf32> -> vector<8x256xf32>
    %c1_59 = arith.constant 1 : index
    %c0_60 = arith.constant 0 : index
    %74 = vector.load %arg18[%c1_59, %c0_60] : memref<10x160xf32, #tpu.memory_space<vmem>>, vector<8x160xf32>
    %c1_61 = arith.constant 1 : index
    %c0_62 = arith.constant 0 : index
    %c0_63 = arith.constant 0 : index
    %75 = vector.load %arg4[%c1_61, %c0_62, %c0_63] : memref<3x160x256xf32, #tpu.memory_space<vmem>>, vector<1x160x256xf32>
    %76 = vector.shape_cast %75 : vector<1x160x256xf32> to vector<160x256xf32>
    %cst_64 = arith.constant dense<0.000000e+00> : vector<8x256xf32>
    %77 = tpu.matmul %74, %76, %cst_64 {dimension_numbers = #tpu.dot_dimension_numbers<[1], [0], [0], [1], [0, 0, 1, 1], [], []>} : vector<8x160xf32>, vector<160x256xf32>, vector<8x256xf32> -> vector<8x256xf32>
    %78 = arith.addf %73, %77 : vector<8x256xf32>
    %c2_65 = arith.constant 2 : index
    %c0_66 = arith.constant 0 : index
    %79 = vector.load %arg18[%c2_65, %c0_66] : memref<10x160xf32, #tpu.memory_space<vmem>>, vector<8x160xf32>
    %c2_67 = arith.constant 2 : index
    %c0_68 = arith.constant 0 : index
    %c0_69 = arith.constant 0 : index
    %80 = vector.load %arg4[%c2_67, %c0_68, %c0_69] : memref<3x160x256xf32, #tpu.memory_space<vmem>>, vector<1x160x256xf32>
    %81 = vector.shape_cast %80 : vector<1x160x256xf32> to vector<160x256xf32>
    %cst_70 = arith.constant dense<0.000000e+00> : vector<8x256xf32>
    %82 = tpu.matmul %79, %81, %cst_70 {dimension_numbers = #tpu.dot_dimension_numbers<[1], [0], [0], [1], [0, 0, 1, 1], [], []>} : vector<8x160xf32>, vector<160x256xf32>, vector<8x256xf32> -> vector<8x256xf32>
    %83 = arith.addf %78, %82 : vector<8x256xf32>
    %c0_71 = arith.constant 0 : index
    %c0_72 = arith.constant 0 : index
    %84 = vector.load %arg5[%c0_71, %c0_72] : memref<1x256xf32, #tpu.memory_space<vmem>>, vector<1x256xf32>
    %85 = vector.broadcast %84 : vector<1x256xf32> to vector<8x256xf32>
    %86 = arith.addf %83, %85 : vector<8x256xf32>
    %cst_73 = arith.constant 0.000000e+00 : f32
    %87 = vector.broadcast %cst_73 : f32 to vector<8x256xf32>
    %88 = arith.maximumf %86, %87 : vector<8x256xf32>
    %cst_74 = arith.constant dense<0.000000e+00> : vector<256xf32>
    %89 = vector.multi_reduction <add>, %88, %cst_74 [0] : vector<8x256xf32> to vector<256xf32>
    %90 = vector.shape_cast %89 : vector<256xf32> to vector<1x256xf32>
    %c0_75 = arith.constant 0 : index
    %c0_76 = arith.constant 0 : index
    %91 = vector.load %arg6[%c0_75, %c0_76] : memref<256x6xf32, #tpu.memory_space<vmem>>, vector<256x6xf32>
    %cst_77 = arith.constant dense<0.000000e+00> : vector<1x6xf32>
    %92 = tpu.matmul %90, %91, %cst_77 {dimension_numbers = #tpu.dot_dimension_numbers<[1], [0], [0], [1], [0, 0, 1, 1], [], []>} : vector<1x256xf32>, vector<256x6xf32>, vector<1x6xf32> -> vector<1x6xf32>
    %c0_78 = arith.constant 0 : index
    %c0_79 = arith.constant 0 : index
    %93 = vector.load %arg7[%c0_78, %c0_79] : memref<1x6xf32, #tpu.memory_space<vmem>>, vector<1x6xf32>
    %94 = arith.addf %92, %93 : vector<1x6xf32>
    %cst_80 = arith.constant -1.000000e+00 : f32
    %cst_81 = arith.constant 1.000000e+00 : f32
    %95 = vector.broadcast %cst_80 : f32 to vector<1x6xf32>
    %96 = arith.maximumf %95, %94 : vector<1x6xf32>
    %97 = vector.broadcast %cst_81 : f32 to vector<1x6xf32>
    %98 = arith.minimumf %97, %96 : vector<1x6xf32>
    %99 = vector.shape_cast %98 : vector<1x6xf32> to vector<1x6xf32>
    %100 = vector.broadcast %99 : vector<1x6xf32> to vector<5x6xf32>
    %101 = vector.shape_cast %98 : vector<1x6xf32> to vector<1x6xf32>
    %102 = vector.broadcast %101 : vector<1x6xf32> to vector<16x6xf32>
    %103 = vector.extract_strided_slice %100 {offsets = [0, 1], sizes = [5, 1], strides = [1, 1]} : vector<5x6xf32> to vector<5x1xf32>
    %104 = vector.extract_strided_slice %102 {offsets = [0, 0], sizes = [16, 1], strides = [1, 1]} : vector<16x6xf32> to vector<16x1xf32>
    %105 = tpu.iota {dimensions = array<i32: 0>} : vector<5x16xi32>
    %106 = arith.sitofp %105 : vector<5x16xi32> to vector<5x16xf32>
    %107 = tpu.iota {dimensions = array<i32: 1>} : vector<5x16xi32>
    %108 = arith.sitofp %107 : vector<5x16xi32> to vector<5x16xf32>
    %cst_82 = arith.constant 1.562500e-01 : f32
    %109 = vector.broadcast %cst_82 : f32 to vector<5x16xf32>
    %110 = arith.mulf %106, %109 : vector<5x16xf32>
    %cst_83 = arith.constant 3.125000e-01 : f32
    %111 = vector.broadcast %cst_83 : f32 to vector<5x16xf32>
    %112 = arith.subf %110, %111 : vector<5x16xf32>
    %cst_84 = arith.constant 2.000000e+00 : f32
    %113 = vector.broadcast %cst_84 : f32 to vector<5x16xf32>
    %114 = arith.mulf %113, %112 : vector<5x16xf32>
    %115 = vector.broadcast %103 : vector<5x1xf32> to vector<5x16xf32>
    %116 = arith.addf %115, %114 : vector<5x16xf32>
    %cst_85 = arith.constant 1.000000e+00 : f32
    %117 = vector.broadcast %cst_85 : f32 to vector<5x16xf32>
    %118 = arith.addf %116, %117 : vector<5x16xf32>
    %cst_86 = arith.constant 5.000000e-01 : f32
    %119 = vector.broadcast %cst_86 : f32 to vector<5x16xf32>
    %120 = arith.mulf %118, %119 : vector<5x16xf32>
    %cst_87 = arith.constant 1.500000e+01 : f32
    %121 = vector.broadcast %cst_87 : f32 to vector<5x16xf32>
    %122 = arith.mulf %120, %121 : vector<5x16xf32>
    %123 = math.floor %122 : vector<5x16xf32>
    %124 = arith.subf %122, %123 : vector<5x16xf32>
    %cst_88 = arith.constant 1.000000e+00 : f32
    %125 = vector.broadcast %cst_88 : f32 to vector<5x16xf32>
    %126 = arith.subf %125, %124 : vector<5x16xf32>
    %127 = arith.cmpf oeq, %108, %123 : vector<5x16xf32>
    %128 = arith.extui %127 : vector<5x16xi1> to vector<5x16xi32>
    %129 = arith.sitofp %128 : vector<5x16xi32> to vector<5x16xf32>
    %130 = arith.mulf %126, %129 : vector<5x16xf32>
    %cst_89 = arith.constant 1.000000e+00 : f32
    %131 = vector.broadcast %cst_89 : f32 to vector<5x16xf32>
    %132 = arith.addf %123, %131 : vector<5x16xf32>
    %133 = arith.cmpf oeq, %108, %132 : vector<5x16xf32>
    %134 = arith.extui %133 : vector<5x16xi1> to vector<5x16xi32>
    %135 = arith.sitofp %134 : vector<5x16xi32> to vector<5x16xf32>
    %136 = arith.mulf %124, %135 : vector<5x16xf32>
    %137 = arith.addf %130, %136 : vector<5x16xf32>
    %c0_90 = arith.constant 0 : index
    %c0_91 = arith.constant 0 : index
    %138 = vector.load %arg20[%c0_90, %c0_91] : memref<15x16xf32, #tpu.memory_space<vmem>>, vector<5x16xf32>
    tpu.vector_store %arg20[%c0_90, %c0_91], %137 {strides = array<i32>} : memref<15x16xf32, #tpu.memory_space<vmem>>, vector<5x16xf32>,
    %139 = tpu.iota {dimensions = array<i32: 1>} : vector<16x5xi32>
    %140 = arith.sitofp %139 : vector<16x5xi32> to vector<16x5xf32>
    %141 = tpu.iota {dimensions = array<i32: 0>} : vector<16x5xi32>
    %142 = arith.sitofp %141 : vector<16x5xi32> to vector<16x5xf32>
    %cst_92 = arith.constant 1.562500e-01 : f32
    %143 = vector.broadcast %cst_92 : f32 to vector<16x5xf32>
    %144 = arith.mulf %140, %143 : vector<16x5xf32>
    %cst_93 = arith.constant 3.125000e-01 : f32
    %145 = vector.broadcast %cst_93 : f32 to vector<16x5xf32>
    %146 = arith.subf %144, %145 : vector<16x5xf32>
    %cst_94 = arith.constant 2.000000e+00 : f32
    %147 = vector.broadcast %cst_94 : f32 to vector<16x5xf32>
    %148 = arith.mulf %147, %146 : vector<16x5xf32>
    %149 = vector.broadcast %104 : vector<16x1xf32> to vector<16x5xf32>
    %150 = arith.addf %149, %148 : vector<16x5xf32>
    %cst_95 = arith.constant 1.000000e+00 : f32
    %151 = vector.broadcast %cst_95 : f32 to vector<16x5xf32>
    %152 = arith.addf %150, %151 : vector<16x5xf32>
    %cst_96 = arith.constant 5.000000e-01 : f32
    %153 = vector.broadcast %cst_96 : f32 to vector<16x5xf32>
    %154 = arith.mulf %152, %153 : vector<16x5xf32>
    %cst_97 = arith.constant 1.500000e+01 : f32
    %155 = vector.broadcast %cst_97 : f32 to vector<16x5xf32>
    %156 = arith.mulf %154, %155 : vector<16x5xf32>
    %157 = math.floor %156 : vector<16x5xf32>
    %158 = arith.subf %156, %157 : vector<16x5xf32>
    %cst_98 = arith.constant 1.000000e+00 : f32
    %159 = vector.broadcast %cst_98 : f32 to vector<16x5xf32>
    %160 = arith.subf %159, %158 : vector<16x5xf32>
    %161 = arith.cmpf oeq, %142, %157 : vector<16x5xf32>
    %162 = arith.extui %161 : vector<16x5xi1> to vector<16x5xi32>
    %163 = arith.sitofp %162 : vector<16x5xi32> to vector<16x5xf32>
    %164 = arith.mulf %160, %163 : vector<16x5xf32>
    %cst_99 = arith.constant 1.000000e+00 : f32
    %165 = vector.broadcast %cst_99 : f32 to vector<16x5xf32>
    %166 = arith.addf %157, %165 : vector<16x5xf32>
    %167 = arith.cmpf oeq, %142, %166 : vector<16x5xf32>
    %168 = arith.extui %167 : vector<16x5xi1> to vector<16x5xi32>
    %169 = arith.sitofp %168 : vector<16x5xi32> to vector<16x5xf32>
    %170 = arith.mulf %158, %169 : vector<16x5xf32>
    %171 = arith.addf %164, %170 : vector<16x5xf32>
    %172 = vector.extract_strided_slice %100 {offsets = [0, 3], sizes = [5, 1], strides = [1, 1]} : vector<5x6xf32> to vector<5x1xf32>
    %173 = vector.extract_strided_slice %102 {offsets = [0, 2], sizes = [16, 1], strides = [1, 1]} : vector<16x6xf32> to vector<16x1xf32>
    %174 = tpu.iota {dimensions = array<i32: 0>} : vector<5x16xi32>
    %175 = arith.sitofp %174 : vector<5x16xi32> to vector<5x16xf32>
    %176 = tpu.iota {dimensions = array<i32: 1>} : vector<5x16xi32>
    %177 = arith.sitofp %176 : vector<5x16xi32> to vector<5x16xf32>
    %cst_100 = arith.constant 1.562500e-01 : f32
    %178 = vector.broadcast %cst_100 : f32 to vector<5x16xf32>
    %179 = arith.mulf %175, %178 : vector<5x16xf32>
    %cst_101 = arith.constant 3.125000e-01 : f32
    %180 = vector.broadcast %cst_101 : f32 to vector<5x16xf32>
    %181 = arith.subf %179, %180 : vector<5x16xf32>
    %cst_102 = arith.constant 2.000000e+00 : f32
    %182 = vector.broadcast %cst_102 : f32 to vector<5x16xf32>
    %183 = arith.mulf %182, %181 : vector<5x16xf32>
    %184 = vector.broadcast %172 : vector<5x1xf32> to vector<5x16xf32>
    %185 = arith.addf %184, %183 : vector<5x16xf32>
    %cst_103 = arith.constant 1.000000e+00 : f32
    %186 = vector.broadcast %cst_103 : f32 to vector<5x16xf32>
    %187 = arith.addf %185, %186 : vector<5x16xf32>
    %cst_104 = arith.constant 5.000000e-01 : f32
    %188 = vector.broadcast %cst_104 : f32 to vector<5x16xf32>
    %189 = arith.mulf %187, %188 : vector<5x16xf32>
    %cst_105 = arith.constant 1.500000e+01 : f32
    %190 = vector.broadcast %cst_105 : f32 to vector<5x16xf32>
    %191 = arith.mulf %189, %190 : vector<5x16xf32>
    %192 = math.floor %191 : vector<5x16xf32>
    %193 = arith.subf %191, %192 : vector<5x16xf32>
    %cst_106 = arith.constant 1.000000e+00 : f32
    %194 = vector.broadcast %cst_106 : f32 to vector<5x16xf32>
    %195 = arith.subf %194, %193 : vector<5x16xf32>
    %196 = arith.cmpf oeq, %177, %192 : vector<5x16xf32>
    %197 = arith.extui %196 : vector<5x16xi1> to vector<5x16xi32>
    %198 = arith.sitofp %197 : vector<5x16xi32> to vector<5x16xf32>
    %199 = arith.mulf %195, %198 : vector<5x16xf32>
    %cst_107 = arith.constant 1.000000e+00 : f32
    %200 = vector.broadcast %cst_107 : f32 to vector<5x16xf32>
    %201 = arith.addf %192, %200 : vector<5x16xf32>
    %202 = arith.cmpf oeq, %177, %201 : vector<5x16xf32>
    %203 = arith.extui %202 : vector<5x16xi1> to vector<5x16xi32>
    %204 = arith.sitofp %203 : vector<5x16xi32> to vector<5x16xf32>
    %205 = arith.mulf %193, %204 : vector<5x16xf32>
    %206 = arith.addf %199, %205 : vector<5x16xf32>
    %c5_108 = arith.constant 5 : index
    %c0_109 = arith.constant 0 : index
    %207 = vector.load %arg20[%c5_108, %c0_109] : memref<15x16xf32, #tpu.memory_space<vmem>>, vector<5x16xf32>
    tpu.vector_store %arg20[%c5_108, %c0_109], %206 {strides = array<i32>} : memref<15x16xf32, #tpu.memory_space<vmem>>, vector<5x16xf32>,
    %208 = tpu.iota {dimensions = array<i32: 1>} : vector<16x5xi32>
    %209 = arith.sitofp %208 : vector<16x5xi32> to vector<16x5xf32>
    %210 = tpu.iota {dimensions = array<i32: 0>} : vector<16x5xi32>
    %211 = arith.sitofp %210 : vector<16x5xi32> to vector<16x5xf32>
    %cst_110 = arith.constant 1.562500e-01 : f32
    %212 = vector.broadcast %cst_110 : f32 to vector<16x5xf32>
    %213 = arith.mulf %209, %212 : vector<16x5xf32>
    %cst_111 = arith.constant 3.125000e-01 : f32
    %214 = vector.broadcast %cst_111 : f32 to vector<16x5xf32>
    %215 = arith.subf %213, %214 : vector<16x5xf32>
    %cst_112 = arith.constant 2.000000e+00 : f32
    %216 = vector.broadcast %cst_112 : f32 to vector<16x5xf32>
    %217 = arith.mulf %216, %215 : vector<16x5xf32>
    %218 = vector.broadcast %173 : vector<16x1xf32> to vector<16x5xf32>
    %219 = arith.addf %218, %217 : vector<16x5xf32>
    %cst_113 = arith.constant 1.000000e+00 : f32
    %220 = vector.broadcast %cst_113 : f32 to vector<16x5xf32>
    %221 = arith.addf %219, %220 : vector<16x5xf32>
    %cst_114 = arith.constant 5.000000e-01 : f32
    %222 = vector.broadcast %cst_114 : f32 to vector<16x5xf32>
    %223 = arith.mulf %221, %222 : vector<16x5xf32>
    %cst_115 = arith.constant 1.500000e+01 : f32
    %224 = vector.broadcast %cst_115 : f32 to vector<16x5xf32>
    %225 = arith.mulf %223, %224 : vector<16x5xf32>
    %226 = math.floor %225 : vector<16x5xf32>
    %227 = arith.subf %225, %226 : vector<16x5xf32>
    %cst_116 = arith.constant 1.000000e+00 : f32
    %228 = vector.broadcast %cst_116 : f32 to vector<16x5xf32>
    %229 = arith.subf %228, %227 : vector<16x5xf32>
    %230 = arith.cmpf oeq, %211, %226 : vector<16x5xf32>
    %231 = arith.extui %230 : vector<16x5xi1> to vector<16x5xi32>
    %232 = arith.sitofp %231 : vector<16x5xi32> to vector<16x5xf32>
    %233 = arith.mulf %229, %232 : vector<16x5xf32>
    %cst_117 = arith.constant 1.000000e+00 : f32
    %234 = vector.broadcast %cst_117 : f32 to vector<16x5xf32>
    %235 = arith.addf %226, %234 : vector<16x5xf32>
    %236 = arith.cmpf oeq, %211, %235 : vector<16x5xf32>
    %237 = arith.extui %236 : vector<16x5xi1> to vector<16x5xi32>
    %238 = arith.sitofp %237 : vector<16x5xi32> to vector<16x5xf32>
    %239 = arith.mulf %227, %238 : vector<16x5xf32>
    %240 = arith.addf %233, %239 : vector<16x5xf32>
    %241 = vector.extract_strided_slice %100 {offsets = [0, 5], sizes = [5, 1], strides = [1, 1]} : vector<5x6xf32> to vector<5x1xf32>
    %242 = vector.extract_strided_slice %102 {offsets = [0, 4], sizes = [16, 1], strides = [1, 1]} : vector<16x6xf32> to vector<16x1xf32>
    %243 = tpu.iota {dimensions = array<i32: 0>} : vector<5x16xi32>
    %244 = arith.sitofp %243 : vector<5x16xi32> to vector<5x16xf32>
    %245 = tpu.iota {dimensions = array<i32: 1>} : vector<5x16xi32>
    %246 = arith.sitofp %245 : vector<5x16xi32> to vector<5x16xf32>
    %cst_118 = arith.constant 1.562500e-01 : f32
    %247 = vector.broadcast %cst_118 : f32 to vector<5x16xf32>
    %248 = arith.mulf %244, %247 : vector<5x16xf32>
    %cst_119 = arith.constant 3.125000e-01 : f32
    %249 = vector.broadcast %cst_119 : f32 to vector<5x16xf32>
    %250 = arith.subf %248, %249 : vector<5x16xf32>
    %cst_120 = arith.constant 2.000000e+00 : f32
    %251 = vector.broadcast %cst_120 : f32 to vector<5x16xf32>
    %252 = arith.mulf %251, %250 : vector<5x16xf32>
    %253 = vector.broadcast %241 : vector<5x1xf32> to vector<5x16xf32>
    %254 = arith.addf %253, %252 : vector<5x16xf32>
    %cst_121 = arith.constant 1.000000e+00 : f32
    %255 = vector.broadcast %cst_121 : f32 to vector<5x16xf32>
    %256 = arith.addf %254, %255 : vector<5x16xf32>
    %cst_122 = arith.constant 5.000000e-01 : f32
    %257 = vector.broadcast %cst_122 : f32 to vector<5x16xf32>
    %258 = arith.mulf %256, %257 : vector<5x16xf32>
    %cst_123 = arith.constant 1.500000e+01 : f32
    %259 = vector.broadcast %cst_123 : f32 to vector<5x16xf32>
    %260 = arith.mulf %258, %259 : vector<5x16xf32>
    %261 = math.floor %260 : vector<5x16xf32>
    %262 = arith.subf %260, %261 : vector<5x16xf32>
    %cst_124 = arith.constant 1.000000e+00 : f32
    %263 = vector.broadcast %cst_124 : f32 to vector<5x16xf32>
    %264 = arith.subf %263, %262 : vector<5x16xf32>
    %265 = arith.cmpf oeq, %246, %261 : vector<5x16xf32>
    %266 = arith.extui %265 : vector<5x16xi1> to vector<5x16xi32>
    %267 = arith.sitofp %266 : vector<5x16xi32> to vector<5x16xf32>
    %268 = arith.mulf %264, %267 : vector<5x16xf32>
    %cst_125 = arith.constant 1.000000e+00 : f32
    %269 = vector.broadcast %cst_125 : f32 to vector<5x16xf32>
    %270 = arith.addf %261, %269 : vector<5x16xf32>
    %271 = arith.cmpf oeq, %246, %270 : vector<5x16xf32>
    %272 = arith.extui %271 : vector<5x16xi1> to vector<5x16xi32>
    %273 = arith.sitofp %272 : vector<5x16xi32> to vector<5x16xf32>
    %274 = arith.mulf %262, %273 : vector<5x16xf32>
    %275 = arith.addf %268, %274 : vector<5x16xf32>
    %c10 = arith.constant 10 : index
    %c0_126 = arith.constant 0 : index
    %276 = vector.load %arg20[%c10, %c0_126] : memref<15x16xf32, #tpu.memory_space<vmem>>, vector<5x16xf32>
    tpu.vector_store %arg20[%c10, %c0_126], %275 {strides = array<i32>} : memref<15x16xf32, #tpu.memory_space<vmem>>, vector<5x16xf32>,
    %277 = tpu.iota {dimensions = array<i32: 1>} : vector<16x5xi32>
    %278 = arith.sitofp %277 : vector<16x5xi32> to vector<16x5xf32>
    %279 = tpu.iota {dimensions = array<i32: 0>} : vector<16x5xi32>
    %280 = arith.sitofp %279 : vector<16x5xi32> to vector<16x5xf32>
    %cst_127 = arith.constant 1.562500e-01 : f32
    %281 = vector.broadcast %cst_127 : f32 to vector<16x5xf32>
    %282 = arith.mulf %278, %281 : vector<16x5xf32>
    %cst_128 = arith.constant 3.125000e-01 : f32
    %283 = vector.broadcast %cst_128 : f32 to vector<16x5xf32>
    %284 = arith.subf %282, %283 : vector<16x5xf32>
    %cst_129 = arith.constant 2.000000e+00 : f32
    %285 = vector.broadcast %cst_129 : f32 to vector<16x5xf32>
    %286 = arith.mulf %285, %284 : vector<16x5xf32>
    %287 = vector.broadcast %242 : vector<16x1xf32> to vector<16x5xf32>
    %288 = arith.addf %287, %286 : vector<16x5xf32>
    %cst_130 = arith.constant 1.000000e+00 : f32
    %289 = vector.broadcast %cst_130 : f32 to vector<16x5xf32>
    %290 = arith.addf %288, %289 : vector<16x5xf32>
    %cst_131 = arith.constant 5.000000e-01 : f32
    %291 = vector.broadcast %cst_131 : f32 to vector<16x5xf32>
    %292 = arith.mulf %290, %291 : vector<16x5xf32>
    %cst_132 = arith.constant 1.500000e+01 : f32
    %293 = vector.broadcast %cst_132 : f32 to vector<16x5xf32>
    %294 = arith.mulf %292, %293 : vector<16x5xf32>
    %295 = math.floor %294 : vector<16x5xf32>
    %296 = arith.subf %294, %295 : vector<16x5xf32>
    %cst_133 = arith.constant 1.000000e+00 : f32
    %297 = vector.broadcast %cst_133 : f32 to vector<16x5xf32>
    %298 = arith.subf %297, %296 : vector<16x5xf32>
    %299 = arith.cmpf oeq, %280, %295 : vector<16x5xf32>
    %300 = arith.extui %299 : vector<16x5xi1> to vector<16x5xi32>
    %301 = arith.sitofp %300 : vector<16x5xi32> to vector<16x5xf32>
    %302 = arith.mulf %298, %301 : vector<16x5xf32>
    %cst_134 = arith.constant 1.000000e+00 : f32
    %303 = vector.broadcast %cst_134 : f32 to vector<16x5xf32>
    %304 = arith.addf %295, %303 : vector<16x5xf32>
    %305 = arith.cmpf oeq, %280, %304 : vector<16x5xf32>
    %306 = arith.extui %305 : vector<16x5xi1> to vector<16x5xi32>
    %307 = arith.sitofp %306 : vector<16x5xi32> to vector<16x5xf32>
    %308 = arith.mulf %296, %307 : vector<16x5xf32>
    %309 = arith.addf %302, %308 : vector<16x5xf32>
    %c0_135 = arith.constant 0 : index
    %c0_136 = arith.constant 0 : index
    %310 = vector.load %arg20[%c0_135, %c0_136] : memref<15x16xf32, #tpu.memory_space<vmem>>, vector<15x16xf32>
    %c1_137 = arith.constant 1 : index
    %c0_138 = arith.constant 0 : index
    %311 = vector.load %arg17[%c1_137, %c0_138] : memref<18x72xf32, #tpu.memory_space<vmem>>, vector<16x72xf32>
    %cst_139 = arith.constant dense<0.000000e+00> : vector<15x72xf32>
    %312 = tpu.matmul %310, %311, %cst_139 {dimension_numbers = #tpu.dot_dimension_numbers<[1], [0], [0], [1], [0, 0, 1, 1], [], []>} : vector<15x16xf32>, vector<16x72xf32>, vector<15x72xf32> -> vector<15x72xf32>
    %cst_140 = arith.constant 0.000000e+00 : f32
    %313 = vector.broadcast %cst_140 : f32 to vector<7x84xf32>
    %c0_141 = arith.constant 0 : index
    %c0_142 = arith.constant 0 : index
    %314 = vector.load %arg19[%c0_141, %c0_142] : memref<7x84xf32, #tpu.memory_space<vmem>>, vector<7x84xf32>
    tpu.vector_store %arg19[%c0_141, %c0_142], %313 {strides = array<i32>} : memref<7x84xf32, #tpu.memory_space<vmem>>, vector<7x84xf32>,
    %315 = vector.extract_strided_slice %312 {offsets = [0, 1], sizes = [5, 16], strides = [1, 1]} : vector<15x72xf32> to vector<5x16xf32>
    %cst_143 = arith.constant dense<0.000000e+00> : vector<5x5xf32>
    %316 = tpu.matmul %315, %171, %cst_143 {dimension_numbers = #tpu.dot_dimension_numbers<[1], [0], [0], [1], [0, 0, 1, 1], [], []>} : vector<5x16xf32>, vector<16x5xf32>, vector<5x5xf32> -> vector<5x5xf32>
    %c1_144 = arith.constant 1 : index
    %c1_145 = arith.constant 1 : index
    %317 = vector.load %arg19[%c1_144, %c1_145] : memref<7x84xf32, #tpu.memory_space<vmem>>, vector<5x5xf32>
    tpu.vector_store %arg19[%c1_144, %c1_145], %316 {strides = array<i32>} : memref<7x84xf32, #tpu.memory_space<vmem>>, vector<5x5xf32>,
    %318 = vector.extract_strided_slice %312 {offsets = [0, 19], sizes = [5, 16], strides = [1, 1]} : vector<15x72xf32> to vector<5x16xf32>
    %cst_146 = arith.constant dense<0.000000e+00> : vector<5x5xf32>
    %319 = tpu.matmul %318, %171, %cst_146 {dimension_numbers = #tpu.dot_dimension_numbers<[1], [0], [0], [1], [0, 0, 1, 1], [], []>} : vector<5x16xf32>, vector<16x5xf32>, vector<5x5xf32> -> vector<5x5xf32>
    %c1_147 = arith.constant 1 : index
    %c8_148 = arith.constant 8 : index
    %320 = vector.load %arg19[%c1_147, %c8_148] : memref<7x84xf32, #tpu.memory_space<vmem>>, vector<5x5xf32>
    tpu.vector_store %arg19[%c1_147, %c8_148], %319 {strides = array<i32>} : memref<7x84xf32, #tpu.memory_space<vmem>>, vector<5x5xf32>,
    %321 = vector.extract_strided_slice %312 {offsets = [0, 37], sizes = [5, 16], strides = [1, 1]} : vector<15x72xf32> to vector<5x16xf32>
    %cst_149 = arith.constant dense<0.000000e+00> : vector<5x5xf32>
    %322 = tpu.matmul %321, %171, %cst_149 {dimension_numbers = #tpu.dot_dimension_numbers<[1], [0], [0], [1], [0, 0, 1, 1], [], []>} : vector<5x16xf32>, vector<16x5xf32>, vector<5x5xf32> -> vector<5x5xf32>
    %c1_150 = arith.constant 1 : index
    %c15 = arith.constant 15 : index
    %323 = vector.load %arg19[%c1_150, %c15] : memref<7x84xf32, #tpu.memory_space<vmem>>, vector<5x5xf32>
    tpu.vector_store %arg19[%c1_150, %c15], %322 {strides = array<i32>} : memref<7x84xf32, #tpu.memory_space<vmem>>, vector<5x5xf32>,
    %324 = vector.extract_strided_slice %312 {offsets = [0, 55], sizes = [5, 16], strides = [1, 1]} : vector<15x72xf32> to vector<5x16xf32>
    %cst_151 = arith.constant dense<0.000000e+00> : vector<5x5xf32>
    %325 = tpu.matmul %324, %171, %cst_151 {dimension_numbers = #tpu.dot_dimension_numbers<[1], [0], [0], [1], [0, 0, 1, 1], [], []>} : vector<5x16xf32>, vector<16x5xf32>, vector<5x5xf32> -> vector<5x5xf32>
    %c1_152 = arith.constant 1 : index
    %c22 = arith.constant 22 : index
    %326 = vector.load %arg19[%c1_152, %c22] : memref<7x84xf32, #tpu.memory_space<vmem>>, vector<5x5xf32>
    tpu.vector_store %arg19[%c1_152, %c22], %325 {strides = array<i32>} : memref<7x84xf32, #tpu.memory_space<vmem>>, vector<5x5xf32>,
    %327 = vector.extract_strided_slice %312 {offsets = [5, 1], sizes = [5, 16], strides = [1, 1]} : vector<15x72xf32> to vector<5x16xf32>
    %cst_153 = arith.constant dense<0.000000e+00> : vector<5x5xf32>
    %328 = tpu.matmul %327, %240, %cst_153 {dimension_numbers = #tpu.dot_dimension_numbers<[1], [0], [0], [1], [0, 0, 1, 1], [], []>} : vector<5x16xf32>, vector<16x5xf32>, vector<5x5xf32> -> vector<5x5xf32>
    %c1_154 = arith.constant 1 : index
    %c29 = arith.constant 29 : index
    %329 = vector.load %arg19[%c1_154, %c29] : memref<7x84xf32, #tpu.memory_space<vmem>>, vector<5x5xf32>
    tpu.vector_store %arg19[%c1_154, %c29], %328 {strides = array<i32>} : memref<7x84xf32, #tpu.memory_space<vmem>>, vector<5x5xf32>,
    %330 = vector.extract_strided_slice %312 {offsets = [5, 19], sizes = [5, 16], strides = [1, 1]} : vector<15x72xf32> to vector<5x16xf32>
    %cst_155 = arith.constant dense<0.000000e+00> : vector<5x5xf32>
    %331 = tpu.matmul %330, %240, %cst_155 {dimension_numbers = #tpu.dot_dimension_numbers<[1], [0], [0], [1], [0, 0, 1, 1], [], []>} : vector<5x16xf32>, vector<16x5xf32>, vector<5x5xf32> -> vector<5x5xf32>
    %c1_156 = arith.constant 1 : index
    %c36 = arith.constant 36 : index
    %332 = vector.load %arg19[%c1_156, %c36] : memref<7x84xf32, #tpu.memory_space<vmem>>, vector<5x5xf32>
    tpu.vector_store %arg19[%c1_156, %c36], %331 {strides = array<i32>} : memref<7x84xf32, #tpu.memory_space<vmem>>, vector<5x5xf32>,
    %333 = vector.extract_strided_slice %312 {offsets = [5, 37], sizes = [5, 16], strides = [1, 1]} : vector<15x72xf32> to vector<5x16xf32>
    %cst_157 = arith.constant dense<0.000000e+00> : vector<5x5xf32>
    %334 = tpu.matmul %333, %240, %cst_157 {dimension_numbers = #tpu.dot_dimension_numbers<[1], [0], [0], [1], [0, 0, 1, 1], [], []>} : vector<5x16xf32>, vector<16x5xf32>, vector<5x5xf32> -> vector<5x5xf32>
    %c1_158 = arith.constant 1 : index
    %c43 = arith.constant 43 : index
    %335 = vector.load %arg19[%c1_158, %c43] : memref<7x84xf32, #tpu.memory_space<vmem>>, vector<5x5xf32>
    tpu.vector_store %arg19[%c1_158, %c43], %334 {strides = array<i32>} : memref<7x84xf32, #tpu.memory_space<vmem>>, vector<5x5xf32>,
    %336 = vector.extract_strided_slice %312 {offsets = [5, 55], sizes = [5, 16], strides = [1, 1]} : vector<15x72xf32> to vector<5x16xf32>
    %cst_159 = arith.constant dense<0.000000e+00> : vector<5x5xf32>
    %337 = tpu.matmul %336, %240, %cst_159 {dimension_numbers = #tpu.dot_dimension_numbers<[1], [0], [0], [1], [0, 0, 1, 1], [], []>} : vector<5x16xf32>, vector<16x5xf32>, vector<5x5xf32> -> vector<5x5xf32>
    %c1_160 = arith.constant 1 : index
    %c50 = arith.constant 50 : index
    %338 = vector.load %arg19[%c1_160, %c50] : memref<7x84xf32, #tpu.memory_space<vmem>>, vector<5x5xf32>
    tpu.vector_store %arg19[%c1_160, %c50], %337 {strides = array<i32>} : memref<7x84xf32, #tpu.memory_space<vmem>>, vector<5x5xf32>,
    %339 = vector.extract_strided_slice %312 {offsets = [10, 1], sizes = [5, 16], strides = [1, 1]} : vector<15x72xf32> to vector<5x16xf32>
    %cst_161 = arith.constant dense<0.000000e+00> : vector<5x5xf32>
    %340 = tpu.matmul %339, %309, %cst_161 {dimension_numbers = #tpu.dot_dimension_numbers<[1], [0], [0], [1], [0, 0, 1, 1], [], []>} : vector<5x16xf32>, vector<16x5xf32>, vector<5x5xf32> -> vector<5x5xf32>
    %c1_162 = arith.constant 1 : index
    %c57 = arith.constant 57 : index
    %341 = vector.load %arg19[%c1_162, %c57] : memref<7x84xf32, #tpu.memory_space<vmem>>, vector<5x5xf32>
    tpu.vector_store %arg19[%c1_162, %c57], %340 {strides = array<i32>} : memref<7x84xf32, #tpu.memory_space<vmem>>, vector<5x5xf32>,
    %342 = vector.extract_strided_slice %312 {offsets = [10, 19], sizes = [5, 16], strides = [1, 1]} : vector<15x72xf32> to vector<5x16xf32>
    %cst_163 = arith.constant dense<0.000000e+00> : vector<5x5xf32>
    %343 = tpu.matmul %342, %309, %cst_163 {dimension_numbers = #tpu.dot_dimension_numbers<[1], [0], [0], [1], [0, 0, 1, 1], [], []>} : vector<5x16xf32>, vector<16x5xf32>, vector<5x5xf32> -> vector<5x5xf32>
    %c1_164 = arith.constant 1 : index
    %c64 = arith.constant 64 : index
    %344 = vector.load %arg19[%c1_164, %c64] : memref<7x84xf32, #tpu.memory_space<vmem>>, vector<5x5xf32>
    tpu.vector_store %arg19[%c1_164, %c64], %343 {strides = array<i32>} : memref<7x84xf32, #tpu.memory_space<vmem>>, vector<5x5xf32>,
    %345 = vector.extract_strided_slice %312 {offsets = [10, 37], sizes = [5, 16], strides = [1, 1]} : vector<15x72xf32> to vector<5x16xf32>
    %cst_165 = arith.constant dense<0.000000e+00> : vector<5x5xf32>
    %346 = tpu.matmul %345, %309, %cst_165 {dimension_numbers = #tpu.dot_dimension_numbers<[1], [0], [0], [1], [0, 0, 1, 1], [], []>} : vector<5x16xf32>, vector<16x5xf32>, vector<5x5xf32> -> vector<5x5xf32>
    %c1_166 = arith.constant 1 : index
    %c71 = arith.constant 71 : index
    %347 = vector.load %arg19[%c1_166, %c71] : memref<7x84xf32, #tpu.memory_space<vmem>>, vector<5x5xf32>
    tpu.vector_store %arg19[%c1_166, %c71], %346 {strides = array<i32>} : memref<7x84xf32, #tpu.memory_space<vmem>>, vector<5x5xf32>,
    %348 = vector.extract_strided_slice %312 {offsets = [10, 55], sizes = [5, 16], strides = [1, 1]} : vector<15x72xf32> to vector<5x16xf32>
    %cst_167 = arith.constant dense<0.000000e+00> : vector<5x5xf32>
    %349 = tpu.matmul %348, %309, %cst_167 {dimension_numbers = #tpu.dot_dimension_numbers<[1], [0], [0], [1], [0, 0, 1, 1], [], []>} : vector<5x16xf32>, vector<16x5xf32>, vector<5x5xf32> -> vector<5x5xf32>
    %c1_168 = arith.constant 1 : index
    %c78 = arith.constant 78 : index
    %350 = vector.load %arg19[%c1_168, %c78] : memref<7x84xf32, #tpu.memory_space<vmem>>, vector<5x5xf32>
    tpu.vector_store %arg19[%c1_168, %c78], %349 {strides = array<i32>} : memref<7x84xf32, #tpu.memory_space<vmem>>, vector<5x5xf32>,
    %c0_169 = arith.constant 0 : index
    %c0_170 = arith.constant 0 : index
    %351 = vector.load %arg19[%c0_169, %c0_170] : memref<7x84xf32, #tpu.memory_space<vmem>>, vector<5x84xf32>
    %c0_171 = arith.constant 0 : index
    %c0_172 = arith.constant 0 : index
    %c0_173 = arith.constant 0 : index
    %352 = vector.load %arg8[%c0_171, %c0_172, %c0_173] : memref<3x84x120xf32, #tpu.memory_space<vmem>>, vector<1x84x120xf32>
    %353 = vector.shape_cast %352 : vector<1x84x120xf32> to vector<84x120xf32>
    %cst_174 = arith.constant dense<0.000000e+00> : vector<5x120xf32>
    %354 = tpu.matmul %351, %353, %cst_174 {dimension_numbers = #tpu.dot_dimension_numbers<[1], [0], [0], [1], [0, 0, 1, 1], [], []>} : vector<5x84xf32>, vector<84x120xf32>, vector<5x120xf32> -> vector<5x120xf32>
    %c1_175 = arith.constant 1 : index
    %c0_176 = arith.constant 0 : index
    %355 = vector.load %arg19[%c1_175, %c0_176] : memref<7x84xf32, #tpu.memory_space<vmem>>, vector<5x84xf32>
    %c1_177 = arith.constant 1 : index
    %c0_178 = arith.constant 0 : index
    %c0_179 = arith.constant 0 : index
    %356 = vector.load %arg8[%c1_177, %c0_178, %c0_179] : memref<3x84x120xf32, #tpu.memory_space<vmem>>, vector<1x84x120xf32>
    %357 = vector.shape_cast %356 : vector<1x84x120xf32> to vector<84x120xf32>
    %cst_180 = arith.constant dense<0.000000e+00> : vector<5x120xf32>
    %358 = tpu.matmul %355, %357, %cst_180 {dimension_numbers = #tpu.dot_dimension_numbers<[1], [0], [0], [1], [0, 0, 1, 1], [], []>} : vector<5x84xf32>, vector<84x120xf32>, vector<5x120xf32> -> vector<5x120xf32>
    %359 = arith.addf %354, %358 : vector<5x120xf32>
    %c2_181 = arith.constant 2 : index
    %c0_182 = arith.constant 0 : index
    %360 = vector.load %arg19[%c2_181, %c0_182] : memref<7x84xf32, #tpu.memory_space<vmem>>, vector<5x84xf32>
    %c2_183 = arith.constant 2 : index
    %c0_184 = arith.constant 0 : index
    %c0_185 = arith.constant 0 : index
    %361 = vector.load %arg8[%c2_183, %c0_184, %c0_185] : memref<3x84x120xf32, #tpu.memory_space<vmem>>, vector<1x84x120xf32>
    %362 = vector.shape_cast %361 : vector<1x84x120xf32> to vector<84x120xf32>
    %cst_186 = arith.constant dense<0.000000e+00> : vector<5x120xf32>
    %363 = tpu.matmul %360, %362, %cst_186 {dimension_numbers = #tpu.dot_dimension_numbers<[1], [0], [0], [1], [0, 0, 1, 1], [], []>} : vector<5x84xf32>, vector<84x120xf32>, vector<5x120xf32> -> vector<5x120xf32>
    %364 = arith.addf %359, %363 : vector<5x120xf32>
    %c0_187 = arith.constant 0 : index
    %c0_188 = arith.constant 0 : index
    %365 = vector.load %arg9[%c0_187, %c0_188] : memref<1x120xf32, #tpu.memory_space<vmem>>, vector<1x120xf32>
    %366 = vector.broadcast %365 : vector<1x120xf32> to vector<5x120xf32>
    %367 = arith.addf %364, %366 : vector<5x120xf32>
    %cst_189 = arith.constant 0.000000e+00 : f32
    %368 = vector.broadcast %cst_189 : f32 to vector<5x120xf32>
    %369 = arith.maximumf %367, %368 : vector<5x120xf32>
    %370 = vector.extract_strided_slice %369 {offsets = [0, 0], sizes = [1, 120], strides = [1, 1]} : vector<5x120xf32> to vector<1x120xf32>
    %c0_190 = arith.constant 0 : index
    %c0_191 = arith.constant 0 : index
    %c0_192 = arith.constant 0 : index
    %371 = vector.load %arg10[%c0_190, %c0_191, %c0_192] : memref<5x120x192xf32, #tpu.memory_space<vmem>>, vector<1x120x192xf32>
    %372 = vector.shape_cast %371 : vector<1x120x192xf32> to vector<120x192xf32>
    %cst_193 = arith.constant dense<0.000000e+00> : vector<1x192xf32>
    %373 = tpu.matmul %370, %372, %cst_193 {dimension_numbers = #tpu.dot_dimension_numbers<[1], [0], [0], [1], [0, 0, 1, 1], [], []>} : vector<1x120xf32>, vector<120x192xf32>, vector<1x192xf32> -> vector<1x192xf32>
    %374 = vector.extract_strided_slice %369 {offsets = [1, 0], sizes = [1, 120], strides = [1, 1]} : vector<5x120xf32> to vector<1x120xf32>
    %c1_194 = arith.constant 1 : index
    %c0_195 = arith.constant 0 : index
    %c0_196 = arith.constant 0 : index
    %375 = vector.load %arg10[%c1_194, %c0_195, %c0_196] : memref<5x120x192xf32, #tpu.memory_space<vmem>>, vector<1x120x192xf32>
    %376 = vector.shape_cast %375 : vector<1x120x192xf32> to vector<120x192xf32>
    %cst_197 = arith.constant dense<0.000000e+00> : vector<1x192xf32>
    %377 = tpu.matmul %374, %376, %cst_197 {dimension_numbers = #tpu.dot_dimension_numbers<[1], [0], [0], [1], [0, 0, 1, 1], [], []>} : vector<1x120xf32>, vector<120x192xf32>, vector<1x192xf32> -> vector<1x192xf32>
    %378 = arith.addf %373, %377 : vector<1x192xf32>
    %379 = vector.extract_strided_slice %369 {offsets = [2, 0], sizes = [1, 120], strides = [1, 1]} : vector<5x120xf32> to vector<1x120xf32>
    %c2_198 = arith.constant 2 : index
    %c0_199 = arith.constant 0 : index
    %c0_200 = arith.constant 0 : index
    %380 = vector.load %arg10[%c2_198, %c0_199, %c0_200] : memref<5x120x192xf32, #tpu.memory_space<vmem>>, vector<1x120x192xf32>
    %381 = vector.shape_cast %380 : vector<1x120x192xf32> to vector<120x192xf32>
    %cst_201 = arith.constant dense<0.000000e+00> : vector<1x192xf32>
    %382 = tpu.matmul %379, %381, %cst_201 {dimension_numbers = #tpu.dot_dimension_numbers<[1], [0], [0], [1], [0, 0, 1, 1], [], []>} : vector<1x120xf32>, vector<120x192xf32>, vector<1x192xf32> -> vector<1x192xf32>
    %383 = arith.addf %378, %382 : vector<1x192xf32>
    %384 = vector.extract_strided_slice %369 {offsets = [3, 0], sizes = [1, 120], strides = [1, 1]} : vector<5x120xf32> to vector<1x120xf32>
    %c3_202 = arith.constant 3 : index
    %c0_203 = arith.constant 0 : index
    %c0_204 = arith.constant 0 : index
    %385 = vector.load %arg10[%c3_202, %c0_203, %c0_204] : memref<5x120x192xf32, #tpu.memory_space<vmem>>, vector<1x120x192xf32>
    %386 = vector.shape_cast %385 : vector<1x120x192xf32> to vector<120x192xf32>
    %cst_205 = arith.constant dense<0.000000e+00> : vector<1x192xf32>
    %387 = tpu.matmul %384, %386, %cst_205 {dimension_numbers = #tpu.dot_dimension_numbers<[1], [0], [0], [1], [0, 0, 1, 1], [], []>} : vector<1x120xf32>, vector<120x192xf32>, vector<1x192xf32> -> vector<1x192xf32>
    %388 = arith.addf %383, %387 : vector<1x192xf32>
    %389 = vector.extract_strided_slice %369 {offsets = [4, 0], sizes = [1, 120], strides = [1, 1]} : vector<5x120xf32> to vector<1x120xf32>
    %c4_206 = arith.constant 4 : index
    %c0_207 = arith.constant 0 : index
    %c0_208 = arith.constant 0 : index
    %390 = vector.load %arg10[%c4_206, %c0_207, %c0_208] : memref<5x120x192xf32, #tpu.memory_space<vmem>>, vector<1x120x192xf32>
    %391 = vector.shape_cast %390 : vector<1x120x192xf32> to vector<120x192xf32>
    %cst_209 = arith.constant dense<0.000000e+00> : vector<1x192xf32>
    %392 = tpu.matmul %389, %391, %cst_209 {dimension_numbers = #tpu.dot_dimension_numbers<[1], [0], [0], [1], [0, 0, 1, 1], [], []>} : vector<1x120xf32>, vector<120x192xf32>, vector<1x192xf32> -> vector<1x192xf32>
    %393 = arith.addf %388, %392 : vector<1x192xf32>
    %c0_210 = arith.constant 0 : index
    %c0_211 = arith.constant 0 : index
    %394 = vector.load %arg11[%c0_210, %c0_211] : memref<1x192xf32, #tpu.memory_space<vmem>>, vector<1x192xf32>
    %395 = arith.addf %393, %394 : vector<1x192xf32>
    %cst_212 = arith.constant 0.000000e+00 : f32
    %396 = vector.broadcast %cst_212 : f32 to vector<1x192xf32>
    %397 = arith.maximumf %395, %396 : vector<1x192xf32>
    %c0_213 = arith.constant 0 : index
    %c0_214 = arith.constant 0 : index
    %398 = vector.load %arg12[%c0_213, %c0_214] : memref<192x192xf32, #tpu.memory_space<vmem>>, vector<192x192xf32>
    %cst_215 = arith.constant dense<0.000000e+00> : vector<1x192xf32>
    %399 = tpu.matmul %397, %398, %cst_215 {dimension_numbers = #tpu.dot_dimension_numbers<[1], [0], [0], [1], [0, 0, 1, 1], [], []>} : vector<1x192xf32>, vector<192x192xf32>, vector<1x192xf32> -> vector<1x192xf32>
    %c0_216 = arith.constant 0 : index
    %c0_217 = arith.constant 0 : index
    %400 = vector.load %arg13[%c0_216, %c0_217] : memref<1x192xf32, #tpu.memory_space<vmem>>, vector<1x192xf32>
    %401 = arith.addf %399, %400 : vector<1x192xf32>
    %c0_218 = arith.constant 0 : index
    %c0_219 = arith.constant 0 : index
    %402 = vector.load %arg14[%c0_218, %c0_219] : memref<192x10xf32, #tpu.memory_space<vmem>>, vector<192x10xf32>
    %cst_220 = arith.constant dense<0.000000e+00> : vector<1x10xf32>
    %403 = tpu.matmul %401, %402, %cst_220 {dimension_numbers = #tpu.dot_dimension_numbers<[1], [0], [0], [1], [0, 0, 1, 1], [], []>} : vector<1x192xf32>, vector<192x10xf32>, vector<1x10xf32> -> vector<1x10xf32>
    %c0_221 = arith.constant 0 : index
    %c0_222 = arith.constant 0 : index
    %404 = vector.load %arg15[%c0_221, %c0_222] : memref<1x10xf32, #tpu.memory_space<vmem>>, vector<1x10xf32>
    %405 = arith.addf %403, %404 : vector<1x10xf32>
    %c0_223 = arith.constant 0 : index
    %c0_224 = arith.constant 0 : index
    %c0_225 = arith.constant 0 : index
    %406 = vector.load %arg16[%c0_223, %c0_224, %c0_225] : memref<1x1x10xf32, #tpu.memory_space<vmem>>, vector<1x1x10xf32>
    %407 = vector.shape_cast %406 : vector<1x1x10xf32> to vector<1x10xf32>
    %408 = vector.shape_cast %405 : vector<1x10xf32> to vector<1x1x10xf32>
    tpu.vector_store %arg16[%c0_223, %c0_224, %c0_225], %408 {strides = array<i32>} : memref<1x1x10xf32, #tpu.memory_space<vmem>>, vector<1x1x10xf32>,
    return
  }
  func.func @transform_0(%arg0: i32) -> (i32, i32, i32, i32) {
    %c0_i32 = arith.constant 0 : i32
    %c0_i32_0 = arith.constant 0 : i32
    %c0_i32_1 = arith.constant 0 : i32
    %c0_i32_2 = arith.constant 0 : i32
    return %arg0, %c0_i32, %c0_i32_0, %c0_i32_1 : i32, i32, i32, i32
  }
  func.func @transform_1(%arg0: i32) -> (i32, i32, i32) {
    %c0_i32 = arith.constant 0 : i32
    %c0_i32_0 = arith.constant 0 : i32
    %c0_i32_1 = arith.constant 0 : i32
    %c0_i32_2 = arith.constant 0 : i32
    return %c0_i32, %c0_i32_0, %c0_i32_1 : i32, i32, i32
  }
  func.func @transform_2(%arg0: i32) -> (i32, i32) {
    %c0_i32 = arith.constant 0 : i32
    %c0_i32_0 = arith.constant 0 : i32
    %c0_i32_1 = arith.constant 0 : i32
    return %c0_i32, %c0_i32_0 : i32, i32
  }
  func.func @transform_3(%arg0: i32) -> (i32, i32, i32) {
    %c0_i32 = arith.constant 0 : i32
    %c0_i32_0 = arith.constant 0 : i32
    %c0_i32_1 = arith.constant 0 : i32
    %c0_i32_2 = arith.constant 0 : i32
    return %c0_i32, %c0_i32_0, %c0_i32_1 : i32, i32, i32
  }
  func.func @transform_4(%arg0: i32) -> (i32, i32) {
    %c0_i32 = arith.constant 0 : i32
    %c0_i32_0 = arith.constant 0 : i32
    %c0_i32_1 = arith.constant 0 : i32
    return %c0_i32, %c0_i32_0 : i32, i32
  }
  func.func @transform_5(%arg0: i32) -> (i32, i32) {
    %c0_i32 = arith.constant 0 : i32
    %c0_i32_0 = arith.constant 0 : i32
    %c0_i32_1 = arith.constant 0 : i32
    return %c0_i32, %c0_i32_0 : i32, i32
  }
  func.func @transform_6(%arg0: i32) -> (i32, i32) {
    %c0_i32 = arith.constant 0 : i32
    %c0_i32_0 = arith.constant 0 : i32
    %c0_i32_1 = arith.constant 0 : i32
    return %c0_i32, %c0_i32_0 : i32, i32
  }
  func.func @transform_7(%arg0: i32) -> (i32, i32, i32) {
    %c0_i32 = arith.constant 0 : i32
    %c0_i32_0 = arith.constant 0 : i32
    %c0_i32_1 = arith.constant 0 : i32
    %c0_i32_2 = arith.constant 0 : i32
    return %c0_i32, %c0_i32_0, %c0_i32_1 : i32, i32, i32
  }
  func.func @transform_8(%arg0: i32) -> (i32, i32) {
    %c0_i32 = arith.constant 0 : i32
    %c0_i32_0 = arith.constant 0 : i32
    %c0_i32_1 = arith.constant 0 : i32
    return %c0_i32, %c0_i32_0 : i32, i32
  }
  func.func @transform_9(%arg0: i32) -> (i32, i32, i32) {
    %c0_i32 = arith.constant 0 : i32
    %c0_i32_0 = arith.constant 0 : i32
    %c0_i32_1 = arith.constant 0 : i32
    %c0_i32_2 = arith.constant 0 : i32
    return %c0_i32, %c0_i32_0, %c0_i32_1 : i32, i32, i32
  }
  func.func @transform_10(%arg0: i32) -> (i32, i32) {
    %c0_i32 = arith.constant 0 : i32
    %c0_i32_0 = arith.constant 0 : i32
    %c0_i32_1 = arith.constant 0 : i32
    return %c0_i32, %c0_i32_0 : i32, i32
  }
  func.func @transform_11(%arg0: i32) -> (i32, i32) {
    %c0_i32 = arith.constant 0 : i32
    %c0_i32_0 = arith.constant 0 : i32
    %c0_i32_1 = arith.constant 0 : i32
    return %c0_i32, %c0_i32_0 : i32, i32
  }
  func.func @transform_12(%arg0: i32) -> (i32, i32) {
    %c0_i32 = arith.constant 0 : i32
    %c0_i32_0 = arith.constant 0 : i32
    %c0_i32_1 = arith.constant 0 : i32
    return %c0_i32, %c0_i32_0 : i32, i32
  }
  func.func @transform_13(%arg0: i32) -> (i32, i32) {
    %c0_i32 = arith.constant 0 : i32
    %c0_i32_0 = arith.constant 0 : i32
    %c0_i32_1 = arith.constant 0 : i32
    return %c0_i32, %c0_i32_0 : i32, i32
  }
  func.func @transform_14(%arg0: i32) -> (i32, i32) {
    %c0_i32 = arith.constant 0 : i32
    %c0_i32_0 = arith.constant 0 : i32
    %c0_i32_1 = arith.constant 0 : i32
    return %c0_i32, %c0_i32_0 : i32, i32
  }
  func.func @transform_15(%arg0: i32) -> (i32, i32, i32) {
    %c0_i32 = arith.constant 0 : i32
    %c0_i32_0 = arith.constant 0 : i32
    %c0_i32_1 = arith.constant 0 : i32
    return %arg0, %c0_i32, %c0_i32_0 : i32, i32, i32
  }
}

</mosaic_0001>

<llo_original>
// kernel: keypoint_patch_forward.1
$region0: #{keypoint_patch_forward.1}
  #allocation0 [shape = 'u32[]', space=smem, size = 0x4, offset = 0x4, fixed_abs, tag = 'smem constant byte address 0x4 - core index']
  #allocation1 [shape = 'u32[144,128]{1,0:T(1,128)}', space=vmem, size = 0x12000, scoped, tag = 'internal scratch']
  #allocation2 [shape = 'f32[18,72]{1,0:T(8,128)}', space=vmem, size = 0x3000, scoped, tag = 'scratch operand']
  #allocation3 [shape = 'f32[10,160]{1,0:T(8,128)}', space=vmem, size = 0x4000, scoped, tag = 'scratch operand']
  #allocation4 [shape = 'f32[7,84]{1,0:T(8,128)}', space=vmem, size = 0x1000, scoped, tag = 'scratch operand']
  #allocation5 [shape = 'f32[15,16]{1,0:T(8,128)}', space=vmem, size = 0x2000, scoped, tag = 'scratch operand']
  %s0 = inlined_call_operand.vmem [shape: f32[2,4,16,16], index: 0, kind: input, shape index: {}]
  %s1 = inlined_call_operand.vmem [shape: f32[3,72,256], index: 1, kind: input, shape index: {}]
  %s2 = inlined_call_operand.vmem [shape: f32[1,256], index: 2, kind: input, shape index: {}]
  %s3 = inlined_call_operand.vmem [shape: f32[3,160,256], index: 3, kind: input, shape index: {}]
  %s4 = inlined_call_operand.vmem [shape: f32[1,256], index: 4, kind: input, shape index: {}]
  %s5 = inlined_call_operand.vmem [shape: f32[256,6], index: 5, kind: input, shape index: {}]
  %s6 = inlined_call_operand.vmem [shape: f32[1,6], index: 6, kind: input, shape index: {}]
  %s7 = inlined_call_operand.vmem [shape: f32[3,84,120], index: 7, kind: input, shape index: {}]
  %s8 = inlined_call_operand.vmem [shape: f32[1,120], index: 8, kind: input, shape index: {}]
  %s9 = inlined_call_operand.vmem [shape: f32[5,120,192], index: 9, kind: input, shape index: {}]
  %s10 = inlined_call_operand.vmem [shape: f32[1,192], index: 10, kind: input, shape index: {}]
  %s11 = inlined_call_operand.vmem [shape: f32[192,192], index: 11, kind: input, shape index: {}]
  %s12 = inlined_call_operand.vmem [shape: f32[1,192], index: 12, kind: input, shape index: {}]
  %s13 = inlined_call_operand.vmem [shape: f32[192,10], index: 13, kind: input, shape index: {}]
  %s14 = inlined_call_operand.vmem [shape: f32[1,10], index: 14, kind: input, shape index: {}]
  %s15 = inlined_call_operand.hbm [shape: f32[2,1,10], index: 15, kind: output, shape index: {}]
  %s16 = sld [smem:[#allocation0]]
  $region93: #{keypoint_patch_forward.1} parent=0
    _
  %s18 = ssub.s32 1, %s16
  %s19 = scalar_select 0, %s18, %s16
  $region1: #{keypoint_patch_forward.1} parent=0
    #allocation6 [shape = 'u8[1024]{0}', space=vmem, size = 0x400, scoped, tag = 'output window, operand 0']
    #allocation7 [shape = 's32[2]{0}', space=sflag, size = 0x8, scoped, tag = 'scoped memory for keypoint_patch_forward.1']
    %20 = vsyncpa [#allocation7], 0
    %s21 = scalar_lea.sflag [#allocation7], 1
    %22 = vsyncpa %s21, 0
    loop: start=0, step=1, limit=4
    $region2: #{keypoint_patch_forward.1} parent=1 // loop_pre_header
      _
    $region3: #{keypoint_patch_forward.1} parent=1 // loop_header
      %s24 = sphi 0, %s28
      %p25 = scmp.ge.s32.totalorder %s24, 4
      %s34 = sphi 0, %s36
      %s37 = sphi 0, %s34
      %s38 = sphi 0, %s37
      %s54 = sphi 0, %s38
      %s58 = sphi 0, %s58
      %s60 = sphi 0, %s58
      %s61 = sphi 0, %s60
      %s75 = sphi 0, %s61
      %s79 = sphi 0, %s79
      %s81 = sphi 0, %s79
      %s82 = sphi 0, %s81
      %s96 = sphi 0, %s82
      %s100 = sphi 0, %s100
      %s102 = sphi 0, %s100
      %s103 = sphi 0, %s102
      %s117 = sphi 0, %s103
      %s121 = sphi 0, %s121
      %s123 = sphi 0, %s121
      %s124 = sphi 0, %s123
      %s138 = sphi 0, %s124
      %s142 = sphi 0, %s142
      %s144 = sphi 0, %s142
      %s145 = sphi 0, %s144
      %s159 = sphi 0, %s145
      %s163 = sphi 0, %s163
      %s165 = sphi 0, %s163
      %s166 = sphi 0, %s165
      %s180 = sphi 0, %s166
      %s184 = sphi 0, %s184
      %s186 = sphi 0, %s184
      %s187 = sphi 0, %s186
      %s201 = sphi 0, %s187
      %s205 = sphi 0, %s205
      %s207 = sphi 0, %s205
      %s208 = sphi 0, %s207
      %s222 = sphi 0, %s208
      %s226 = sphi 0, %s226
      %s228 = sphi 0, %s226
      %s229 = sphi 0, %s228
      %s243 = sphi 0, %s229
      %s247 = sphi 0, %s247
      %s249 = sphi 0, %s247
      %s250 = sphi 0, %s249
      %s264 = sphi 0, %s250
      %s268 = sphi 0, %s268
      %s270 = sphi 0, %s268
      %s271 = sphi 0, %s270
      %s285 = sphi 0, %s271
      %s289 = sphi 0, %s289
      %s291 = sphi 0, %s289
      %s292 = sphi 0, %s291
      %s306 = sphi 0, %s292
      %s310 = sphi 0, %s310
      %s312 = sphi 0, %s310
      %s313 = sphi 0, %s312
      %s327 = sphi 0, %s313
      %s331 = sphi 0, %s331
      %s333 = sphi 0, %s331
      %s334 = sphi 0, %s333
      %s348 = sphi 0, %s334
      %s354 = sphi 0, %s356
      %s357 = sphi 0, %s354
      %s358 = sphi 0, %s357
      %s374 = sphi 0, %s358
    $region4: #{keypoint_patch_forward.1} parent=1 // loop_header_branch
      %27 = sbr.rel (%p25) target = $region8
    $region5: #{keypoint_patch_forward.1} parent=1 // loop_body
      %s29 = ssub.s32 %s24, 1
      %s30 = ssub.s32 %s24, 2
      %s31 = sadd.s32 %s24, 1
      %s32 = ssub.s32 %s24, %s31
      %p33 = scmp.eq.s32.totalorder %s32, 0
      %s35 = sadd.s32 %s34, 1
      %s36 = scalar_select %p33, %s34, %s35
      %p39 = pneg %p33
      %p40 = scmp.eq.s32.totalorder %s24, 1
      %p41 = por %p39, %p40
      %p42 = scmp.ne.s32.totalorder %s34, %s37
      %p43 = scmp.eq.s32.totalorder %s24, 0
      %p44 = por %p42, %p43
      %p45 = scmp.ne.s32.totalorder %s34, %s37
      %p46 = scmp.eq.s32.totalorder %s29, 1
      %p47 = por %p45, %p46
      %p48 = scmp.ne.s32.totalorder %s37, %s38
      %p49 = scmp.eq.s32.totalorder %s29, 0
      %p50 = por %p48, %p49
      %p51 = scmp.ne.s32.totalorder %s37, %s38
      %p52 = scmp.eq.s32.totalorder %s30, 1
      %p53 = por %p51, %p52
      %p55 = scmp.ne.s32.totalorder %s38, %s54
      %p56 = scmp.eq.s32.totalorder %s30, 0
      %p57 = por %p55, %p56
      %s59 = sadd.s32 %s58, 1
      %p62 = scmp.eq.s32.totalorder %s24, 1
      %p63 = scmp.ne.s32.totalorder %s58, %s60
      %p64 = scmp.eq.s32.totalorder %s24, 0
      %p65 = por %p63, %p64
      %p66 = scmp.ne.s32.totalorder %s58, %s60
      %p67 = scmp.eq.s32.totalorder %s29, 1
      %p68 = por %p66, %p67
      %p69 = scmp.ne.s32.totalorder %s60, %s61
      %p70 = scmp.eq.s32.totalorder %s29, 0
      %p71 = por %p69, %p70
      %p72 = scmp.ne.s32.totalorder %s60, %s61
      %p73 = scmp.eq.s32.totalorder %s30, 1
      %p74 = por %p72, %p73
      %p76 = scmp.ne.s32.totalorder %s61, %s75
      %p77 = scmp.eq.s32.totalorder %s30, 0
      %p78 = por %p76, %p77
      %s80 = sadd.s32 %s79, 1
      %p83 = scmp.eq.s32.totalorder %s24, 1
      %p84 = scmp.ne.s32.totalorder %s79, %s81
      %p85 = scmp.eq.s32.totalorder %s24, 0
      %p86 = por %p84, %p85
      %p87 = scmp.ne.s32.totalorder %s79, %s81
      %p88 = scmp.eq.s32.totalorder %s29, 1
      %p89 = por %p87, %p88
      %p90 = scmp.ne.s32.totalorder %s81, %s82
      %p91 = scmp.eq.s32.totalorder %s29, 0
      %p92 = por %p90, %p91
      %p93 = scmp.ne.s32.totalorder %s81, %s82
      %p94 = scmp.eq.s32.totalorder %s30, 1
      %p95 = por %p93, %p94
      %p97 = scmp.ne.s32.totalorder %s82, %s96
      %p98 = scmp.eq.s32.totalorder %s30, 0
      %p99 = por %p97, %p98
      %s101 = sadd.s32 %s100, 1
      %p104 = scmp.eq.s32.totalorder %s24, 1
      %p105 = scmp.ne.s32.totalorder %s100, %s102
      %p106 = scmp.eq.s32.totalorder %s24, 0
      %p107 = por %p105, %p106
      %p108 = scmp.ne.s32.totalorder %s100, %s102
      %p109 = scmp.eq.s32.totalorder %s29, 1
      %p110 = por %p108, %p109
      %p111 = scmp.ne.s32.totalorder %s102, %s103
      %p112 = scmp.eq.s32.totalorder %s29, 0
      %p113 = por %p111, %p112
      %p114 = scmp.ne.s32.totalorder %s102, %s103
      %p115 = scmp.eq.s32.totalorder %s30, 1
      %p116 = por %p114, %p115
      %p118 = scmp.ne.s32.totalorder %s103, %s117
      %p119 = scmp.eq.s32.totalorder %s30, 0
      %p120 = por %p118, %p119
      %s122 = sadd.s32 %s121, 1
      %p125 = scmp.eq.s32.totalorder %s24, 1
      %p126 = scmp.ne.s32.totalorder %s121, %s123
      %p127 = scmp.eq.s32.totalorder %s24, 0
      %p128 = por %p126, %p127
      %p129 = scmp.ne.s32.totalorder %s121, %s123
      %p130 = scmp.eq.s32.totalorder %s29, 1
      %p131 = por %p129, %p130
      %p132 = scmp.ne.s32.totalorder %s123, %s124
      %p133 = scmp.eq.s32.totalorder %s29, 0
      %p134 = por %p132, %p133
      %p135 = scmp.ne.s32.totalorder %s123, %s124
      %p136 = scmp.eq.s32.totalorder %s30, 1
      %p137 = por %p135, %p136
      %p139 = scmp.ne.s32.totalorder %s124, %s138
      %p140 = scmp.eq.s32.totalorder %s30, 0
      %p141 = por %p139, %p140
      %s143 = sadd.s32 %s142, 1
      %p146 = scmp.eq.s32.totalorder %s24, 1
      %p147 = scmp.ne.s32.totalorder %s142, %s144
      %p148 = scmp.eq.s32.totalorder %s24, 0
      %p149 = por %p147, %p148
      %p150 = scmp.ne.s32.totalorder %s142, %s144
      %p151 = scmp.eq.s32.totalorder %s29, 1
      %p152 = por %p150, %p151
      %p153 = scmp.ne.s32.totalorder %s144, %s145
      %p154 = scmp.eq.s32.totalorder %s29, 0
      %p155 = por %p153, %p154
      %p156 = scmp.ne.s32.totalorder %s144, %s145
      %p157 = scmp.eq.s32.totalorder %s30, 1
      %p158 = por %p156, %p157
      %p160 = scmp.ne.s32.totalorder %s145, %s159
      %p161 = scmp.eq.s32.totalorder %s30, 0
      %p162 = por %p160, %p161
      %s164 = sadd.s32 %s163, 1
      %p167 = scmp.eq.s32.totalorder %s24, 1
      %p168 = scmp.ne.s32.totalorder %s163, %s165
      %p169 = scmp.eq.s32.totalorder %s24, 0
      %p170 = por %p168, %p169
      %p171 = scmp.ne.s32.totalorder %s163, %s165
      %p172 = scmp.eq.s32.totalorder %s29, 1
      %p173 = por %p171, %p172
      %p174 = scmp.ne.s32.totalorder %s165, %s166
      %p175 = scmp.eq.s32.totalorder %s29, 0
      %p176 = por %p174, %p175
      %p177 = scmp.ne.s32.totalorder %s165, %s166
      %p178 = scmp.eq.s32.totalorder %s30, 1
      %p179 = por %p177, %p178
      %p181 = scmp.ne.s32.totalorder %s166, %s180
      %p182 = scmp.eq.s32.totalorder %s30, 0
      %p183 = por %p181, %p182
      %s185 = sadd.s32 %s184, 1
      %p188 = scmp.eq.s32.totalorder %s24, 1
      %p189 = scmp.ne.s32.totalorder %s184, %s186
      %p190 = scmp.eq.s32.totalorder %s24, 0
      %p191 = por %p189, %p190
      %p192 = scmp.ne.s32.totalorder %s184, %s186
      %p193 = scmp.eq.s32.totalorder %s29, 1
      %p194 = por %p192, %p193
      %p195 = scmp.ne.s32.totalorder %s186, %s187
      %p196 = scmp.eq.s32.totalorder %s29, 0
      %p197 = por %p195, %p196
      %p198 = scmp.ne.s32.totalorder %s186, %s187
      %p199 = scmp.eq.s32.totalorder %s30, 1
      %p200 = por %p198, %p199
      %p202 = scmp.ne.s32.totalorder %s187, %s201
      %p203 = scmp.eq.s32.totalorder %s30, 0
      %p204 = por %p202, %p203
      %s206 = sadd.s32 %s205, 1
      %p209 = scmp.eq.s32.totalorder %s24, 1
      %p210 = scmp.ne.s32.totalorder %s205, %s207
      %p211 = scmp.eq.s32.totalorder %s24, 0
      %p212 = por %p210, %p211
      %p213 = scmp.ne.s32.totalorder %s205, %s207
      %p214 = scmp.eq.s32.totalorder %s29, 1
      %p215 = por %p213, %p214
      %p216 = scmp.ne.s32.totalorder %s207, %s208
      %p217 = scmp.eq.s32.totalorder %s29, 0
      %p218 = por %p216, %p217
      %p219 = scmp.ne.s32.totalorder %s207, %s208
      %p220 = scmp.eq.s32.totalorder %s30, 1
      %p221 = por %p219, %p220
      %p223 = scmp.ne.s32.totalorder %s208, %s222
      %p224 = scmp.eq.s32.totalorder %s30, 0
      %p225 = por %p223, %p224
      %s227 = sadd.s32 %s226, 1
      %p230 = scmp.eq.s32.totalorder %s24, 1
      %p231 = scmp.ne.s32.totalorder %s226, %s228
      %p232 = scmp.eq.s32.totalorder %s24, 0
      %p233 = por %p231, %p232
      %p234 = scmp.ne.s32.totalorder %s226, %s228
      %p235 = scmp.eq.s32.totalorder %s29, 1
      %p236 = por %p234, %p235
      %p237 = scmp.ne.s32.totalorder %s228, %s229
      %p238 = scmp.eq.s32.totalorder %s29, 0
      %p239 = por %p237, %p238
      %p240 = scmp.ne.s32.totalorder %s228, %s229
      %p241 = scmp.eq.s32.totalorder %s30, 1
      %p242 = por %p240, %p241
      %p244 = scmp.ne.s32.totalorder %s229, %s243
      %p245 = scmp.eq.s32.totalorder %s30, 0
      %p246 = por %p244, %p245
      %s248 = sadd.s32 %s247, 1
      %p251 = scmp.eq.s32.totalorder %s24, 1
      %p252 = scmp.ne.s32.totalorder %s247, %s249
      %p253 = scmp.eq.s32.totalorder %s24, 0
      %p254 = por %p252, %p253
      %p255 = scmp.ne.s32.totalorder %s247, %s249
      %p256 = scmp.eq.s32.totalorder %s29, 1
      %p257 = por %p255, %p256
      %p258 = scmp.ne.s32.totalorder %s249, %s250
      %p259 = scmp.eq.s32.totalorder %s29, 0
      %p260 = por %p258, %p259
      %p261 = scmp.ne.s32.totalorder %s249, %s250
      %p262 = scmp.eq.s32.totalorder %s30, 1
      %p263 = por %p261, %p262
      %p265 = scmp.ne.s32.totalorder %s250, %s264
      %p266 = scmp.eq.s32.totalorder %s30, 0
      %p267 = por %p265, %p266
      %s269 = sadd.s32 %s268, 1
      %p272 = scmp.eq.s32.totalorder %s24, 1
      %p273 = scmp.ne.s32.totalorder %s268, %s270
      %p274 = scmp.eq.s32.totalorder %s24, 0
      %p275 = por %p273, %p274
      %p276 = scmp.ne.s32.totalorder %s268, %s270
      %p277 = scmp.eq.s32.totalorder %s29, 1
      %p278 = por %p276, %p277
      %p279 = scmp.ne.s32.totalorder %s270, %s271
      %p280 = scmp.eq.s32.totalorder %s29, 0
      %p281 = por %p279, %p280
      %p282 = scmp.ne.s32.totalorder %s270, %s271
      %p283 = scmp.eq.s32.totalorder %s30, 1
      %p284 = por %p282, %p283
      %p286 = scmp.ne.s32.totalorder %s271, %s285
      %p287 = scmp.eq.s32.totalorder %s30, 0
      %p288 = por %p286, %p287
      %s290 = sadd.s32 %s289, 1
      %p293 = scmp.eq.s32.totalorder %s24, 1
      %p294 = scmp.ne.s32.totalorder %s289, %s291
      %p295 = scmp.eq.s32.totalorder %s24, 0
      %p296 = por %p294, %p295
      %p297 = scmp.ne.s32.totalorder %s289, %s291
      %p298 = scmp.eq.s32.totalorder %s29, 1
      %p299 = por %p297, %p298
      %p300 = scmp.ne.s32.totalorder %s291, %s292
      %p301 = scmp.eq.s32.totalorder %s29, 0
      %p302 = por %p300, %p301
      %p303 = scmp.ne.s32.totalorder %s291, %s292
      %p304 = scmp.eq.s32.totalorder %s30, 1
      %p305 = por %p303, %p304
      %p307 = scmp.ne.s32.totalorder %s292, %s306
      %p308 = scmp.eq.s32.totalorder %s30, 0
      %p309 = por %p307, %p308
      %s311 = sadd.s32 %s310, 1
      %p314 = scmp.eq.s32.totalorder %s24, 1
      %p315 = scmp.ne.s32.totalorder %s310, %s312
      %p316 = scmp.eq.s32.totalorder %s24, 0
      %p317 = por %p315, %p316
      %p318 = scmp.ne.s32.totalorder %s310, %s312
      %p319 = scmp.eq.s32.totalorder %s29, 1
      %p320 = por %p318, %p319
      %p321 = scmp.ne.s32.totalorder %s312, %s313
      %p322 = scmp.eq.s32.totalorder %s29, 0
      %p323 = por %p321, %p322
      %p324 = scmp.ne.s32.totalorder %s312, %s313
      %p325 = scmp.eq.s32.totalorder %s30, 1
      %p326 = por %p324, %p325
      %p328 = scmp.ne.s32.totalorder %s313, %s327
      %p329 = scmp.eq.s32.totalorder %s30, 0
      %p330 = por %p328, %p329
      %s332 = sadd.s32 %s331, 1
      %p335 = scmp.eq.s32.totalorder %s24, 1
      %p336 = scmp.ne.s32.totalorder %s331, %s333
      %p337 = scmp.eq.s32.totalorder %s24, 0
      %p338 = por %p336, %p337
      %p339 = scmp.ne.s32.totalorder %s331, %s333
      %p340 = scmp.eq.s32.totalorder %s29, 1
      %p341 = por %p339, %p340
      %p342 = scmp.ne.s32.totalorder %s333, %s334
      %p343 = scmp.eq.s32.totalorder %s29, 0
      %p344 = por %p342, %p343
      %p345 = scmp.ne.s32.totalorder %s333, %s334
      %p346 = scmp.eq.s32.totalorder %s30, 1
      %p347 = por %p345, %p346
      %p349 = scmp.ne.s32.totalorder %s334, %s348
      %p350 = scmp.eq.s32.totalorder %s30, 0
      %p351 = por %p349, %p350
      %s352 = ssub.s32 %s24, %s31
      %p353 = scmp.eq.s32.totalorder %s352, 0
      %s355 = sadd.s32 %s354, 1
      %s356 = scalar_select %p353, %s354, %s355
      %p359 = pneg %p353
      %p360 = scmp.eq.s32.totalorder %s24, 1
      %p361 = por %p359, %p360
      %p362 = scmp.ne.s32.totalorder %s354, %s357
      %p363 = scmp.eq.s32.totalorder %s24, 0
      %p364 = por %p362, %p363
      %p365 = scmp.ne.s32.totalorder %s354, %s357
      %p366 = scmp.eq.s32.totalorder %s29, 1
      %p367 = por %p365, %p366
      %p368 = scmp.ne.s32.totalorder %s357, %s358
      %p369 = scmp.eq.s32.totalorder %s29, 0
      %p370 = por %p368, %p369
      %p371 = scmp.ne.s32.totalorder %s357, %s358
      %p372 = scmp.eq.s32.totalorder %s30, 1
      %p373 = por %p371, %p372
      %p375 = scmp.ne.s32.totalorder %s358, %s374
      %p376 = scmp.eq.s32.totalorder %s30, 0
      %p377 = por %p375, %p376
      %p378 = scmp.le.s32.totalorder 1, %s24
      %p379 = scmp.lt.s32.totalorder %s24, 3
      %p380 = pnand %p378, %p379
      %p381 = pneg %p380
      // Predicated region
      $region9: #{keypoint_patch_forward.1} parent=5 // pred_check
        _
      $region10: #{keypoint_patch_forward.1} parent=5 // pred_check_branch
        %383 = sbr.rel (%p380) target = $region12
      $region11: #{keypoint_patch_forward.1} parent=5 // pred_region
        %s384 = ssub.s32 %s24, 1
        // Predicated region
        $region13: #{keypoint_patch_forward.1} parent=11 // pred_check
          %p385 = pneg %p71
        $region14: #{keypoint_patch_forward.1} parent=11 // pred_check_branch
          %387 = sbr.rel (%p385) target = $region16
        $region15: #{keypoint_patch_forward.1} parent=11 // pred_region
          _
        $region16: #{keypoint_patch_forward.1} parent=11 // pred_fallthru
          _
        // Predicated region
        $region17: #{keypoint_patch_forward.1} parent=11 // pred_check
          %p388 = pneg %p92
        $region18: #{keypoint_patch_forward.1} parent=11 // pred_check_branch
          %390 = sbr.rel (%p388) target = $region20
        $region19: #{keypoint_patch_forward.1} parent=11 // pred_region
          _
        $region20: #{keypoint_patch_forward.1} parent=11 // pred_fallthru
          _
        // Predicated region
        $region21: #{keypoint_patch_forward.1} parent=11 // pred_check
          %p391 = pneg %p113
        $region22: #{keypoint_patch_forward.1} parent=11 // pred_check_branch
          %393 = sbr.rel (%p391) target = $region24
        $region23: #{keypoint_patch_forward.1} parent=11 // pred_region
          _
        $region24: #{keypoint_patch_forward.1} parent=11 // pred_fallthru
          _
        // Predicated region
        $region25: #{keypoint_patch_forward.1} parent=11 // pred_check
          %p394 = pneg %p134
        $region26: #{keypoint_patch_forward.1} parent=11 // pred_check_branch
          %396 = sbr.rel (%p394) target = $region28
        $region27: #{keypoint_patch_forward.1} parent=11 // pred_region
          _
        $region28: #{keypoint_patch_forward.1} parent=11 // pred_fallthru
          _
        // Predicated region
        $region29: #{keypoint_patch_forward.1} parent=11 // pred_check
          %p397 = pneg %p155
        $region30: #{keypoint_patch_forward.1} parent=11 // pred_check_branch
          %399 = sbr.rel (%p397) target = $region32
        $region31: #{keypoint_patch_forward.1} parent=11 // pred_region
          _
        $region32: #{keypoint_patch_forward.1} parent=11 // pred_fallthru
          _
        // Predicated region
        $region33: #{keypoint_patch_forward.1} parent=11 // pred_check
          %p400 = pneg %p176
        $region34: #{keypoint_patch_forward.1} parent=11 // pred_check_branch
          %402 = sbr.rel (%p400) target = $region36
        $region35: #{keypoint_patch_forward.1} parent=11 // pred_region
          _
        $region36: #{keypoint_patch_forward.1} parent=11 // pred_fallthru
          _
        // Predicated region
        $region37: #{keypoint_patch_forward.1} parent=11 // pred_check
          %p403 = pneg %p197
        $region38: #{keypoint_patch_forward.1} parent=11 // pred_check_branch
          %405 = sbr.rel (%p403) target = $region40
        $region39: #{keypoint_patch_forward.1} parent=11 // pred_region
          _
        $region40: #{keypoint_patch_forward.1} parent=11 // pred_fallthru
          _
        // Predicated region
        $region41: #{keypoint_patch_forward.1} parent=11 // pred_check
          %p406 = pneg %p218
        $region42: #{keypoint_patch_forward.1} parent=11 // pred_check_branch
          %408 = sbr.rel (%p406) target = $region44
        $region43: #{keypoint_patch_forward.1} parent=11 // pred_region
          _
        $region44: #{keypoint_patch_forward.1} parent=11 // pred_fallthru
          _
        // Predicated region
        $region45: #{keypoint_patch_forward.1} parent=11 // pred_check
          %p409 = pneg %p239
        $region46: #{keypoint_patch_forward.1} parent=11 // pred_check_branch
          %411 = sbr.rel (%p409) target = $region48
        $region47: #{keypoint_patch_forward.1} parent=11 // pred_region
          _
        $region48: #{keypoint_patch_forward.1} parent=11 // pred_fallthru
          _
        // Predicated region
        $region49: #{keypoint_patch_forward.1} parent=11 // pred_check
          %p412 = pneg %p260
        $region50: #{keypoint_patch_forward.1} parent=11 // pred_check_branch
          %414 = sbr.rel (%p412) target = $region52
        $region51: #{keypoint_patch_forward.1} parent=11 // pred_region
          _
        $region52: #{keypoint_patch_forward.1} parent=11 // pred_fallthru
          _
        // Predicated region
        $region53: #{keypoint_patch_forward.1} parent=11 // pred_check
          %p415 = pneg %p281
        $region54: #{keypoint_patch_forward.1} parent=11 // pred_check_branch
          %417 = sbr.rel (%p415) target = $region56
        $region55: #{keypoint_patch_forward.1} parent=11 // pred_region
          _
        $region56: #{keypoint_patch_forward.1} parent=11 // pred_fallthru
          _
        // Predicated region
        $region57: #{keypoint_patch_forward.1} parent=11 // pred_check
          %p418 = pneg %p302
        $region58: #{keypoint_patch_forward.1} parent=11 // pred_check_branch
          %420 = sbr.rel (%p418) target = $region60
        $region59: #{keypoint_patch_forward.1} parent=11 // pred_region
          _
        $region60: #{keypoint_patch_forward.1} parent=11 // pred_fallthru
          _
        // Predicated region
        $region61: #{keypoint_patch_forward.1} parent=11 // pred_check
          %p421 = pneg %p323
        $region62: #{keypoint_patch_forward.1} parent=11 // pred_check_branch
          %423 = sbr.rel (%p421) target = $region64
        $region63: #{keypoint_patch_forward.1} parent=11 // pred_region
          _
        $region64: #{keypoint_patch_forward.1} parent=11 // pred_fallthru
          _
        // Predicated region
        $region65: #{keypoint_patch_forward.1} parent=11 // pred_check
          %p424 = pneg %p344
        $region66: #{keypoint_patch_forward.1} parent=11 // pred_check_branch
          %426 = sbr.rel (%p424) target = $region68
        $region67: #{keypoint_patch_forward.1} parent=11 // pred_region
          _
        $region68: #{keypoint_patch_forward.1} parent=11 // pred_fallthru
          _
      $region12: #{keypoint_patch_forward.1} parent=5 // pred_fallthru
        _
      %p427 = scmp.lt.s32.totalorder %s24, 2
      // Predicated region
      $region69: #{keypoint_patch_forward.1} parent=5 // pred_check
        %p428 = pneg %p427
      $region70: #{keypoint_patch_forward.1} parent=5 // pred_check_branch
        %430 = sbr.rel (%p428) target = $region72
      $region71: #{keypoint_patch_forward.1} parent=5 // pred_region
        // Predicated region
        $region73: #{keypoint_patch_forward.1} parent=71 // pred_check
          %p431 = pneg %p44
        $region74: #{keypoint_patch_forward.1} parent=71 // pred_check_branch
          %433 = sbr.rel (%p431) target = $region76
        $region75: #{keypoint_patch_forward.1} parent=71 // pred_region
          %p434 = scmp.lt.s32.totalorder %s24, 1
          %s435 = scalar_select %p434, %s24, 1
          %s436 = smul.addr %s435, 8
          %s437 = smul.addr %s436, 8
          %s438 = scalar_lea.vmem %s0, %s437
        $region76: #{keypoint_patch_forward.1} parent=71 // pred_fallthru
          _
      $region72: #{keypoint_patch_forward.1} parent=5 // pred_fallthru
        _
      %p439 = scmp.le.s32.totalorder 1, %s24
      %p440 = scmp.lt.s32.totalorder %s24, 3
      %p441 = pnand %p439, %p440
      %p442 = pneg %p441
      // Predicated region
      $region77: #{keypoint_patch_forward.1} parent=5 // pred_check
        _
      $region78: #{keypoint_patch_forward.1} parent=5 // pred_check_branch
        %444 = sbr.rel (%p441) target = $region80
      $region79: #{keypoint_patch_forward.1} parent=5 // pred_region
        %s445 = ssub.s32 %s24, 1
        %p446 = scmp.lt.s32.totalorder %s29, 1
        %s447 = scalar_select %p446, %s29, 1
        %s448 = smul.addr %s447, 8
        %s449 = smul.addr %s448, 8
        %s450 = scalar_lea.vmem %s0, %s449
        %p451 = pneg %p50
        %p452 = pneg %p47
        %p453 = pneg %p71
        %p454 = pneg %p68
        %p455 = pneg %p92
        %p456 = pneg %p89
        %p457 = pneg %p113
        %p458 = pneg %p110
        %p459 = pneg %p134
        %p460 = pneg %p131
        %p461 = pneg %p155
        %p462 = pneg %p152
        %p463 = pneg %p176
        %p464 = pneg %p173
        %p465 = pneg %p197
        %p466 = pneg %p194
        %p467 = pneg %p218
        %p468 = pneg %p215
        %p469 = pneg %p239
        %p470 = pneg %p236
        %p471 = pneg %p260
        %p472 = pneg %p257
        %p473 = pneg %p281
        %p474 = pneg %p278
        %p475 = pneg %p302
        %p476 = pneg %p299
        %p477 = pneg %p323
        %p478 = pneg %p320
        %p479 = pneg %p344
        %p480 = pneg %p341
        %p481 = pneg %p370
        %p482 = pneg %p367
        %s483 = sand.u32 %s357, 1
        %s484 = scalar_lea.sflag [#allocation7], %s483
        %s485 = sand.u32 %s357, 1
        %s486 = scalar_lea.vmem [#allocation6], %s485
        %p487 = scmp.lt.s32.totalorder %s29, 1
        %s488 = scalar_select %p487, %s29, 1
        %s489 = smul.addr %s488, 8
        %s490 = smul.addr %s489, 8
        %s491 = scalar_lea.vmem %s0, %s490
        %vm492 = vcmask 588800
        %493 = vst.msk [vmem:[#allocation2] sm:$0xff] %vm492, 0.0
        %494 = vst.msk [vmem:[#allocation2 + $0x8] sm:$0xff] %vm492, 0.0
        %vm495 = vcmask 582656
        %496 = vst.msk [vmem:[#allocation2 + $0x10] sm:$0x3] %vm495, 0.0
        %v497 = vld [vmem:[%s491] sm:$0xff]
        %v498 = vld [vmem:[%s491 + $0x8] sm:$0xff]
        %501 = vrot.lane.b32.xlu0 %v497, 1
        %v502 = vpop.permute.xlu0 %501
        %503 = vrot.lane.b32.xlu0 %v498, 1
        %v504 = vpop.permute.xlu0 %503
        %vm507 = vcmask 138248
        %508 = vst.msk [vmem:[#allocation2 + $0x1] sm:$0xff] %vm507, %v502
        %509 = vst.msk [vmem:[#allocation2 + $0x9] sm:$0xff] %vm507, %v504
        %s510 = scalar_lea.vmem %s491, 16
        %v511 = vld [vmem:[%s510] sm:$0xff]
        %v512 = vld [vmem:[%s510 + $0x8] sm:$0xff]
        %515 = vrot.lane.b32.xlu0 %v511, 19
        %v516 = vpop.permute.xlu0 %515
        %517 = vrot.lane.b32.xlu0 %v512, 19
        %v518 = vpop.permute.xlu0 %517
        %vm521 = vcmask 285848
        %522 = vst.msk [vmem:[#allocation2 + $0x1] sm:$0xff] %vm521, %v516
        %523 = vst.msk [vmem:[#allocation2 + $0x9] sm:$0xff] %vm521, %v518
        %s524 = scalar_lea.vmem %s491, 32
        %v525 = vld [vmem:[%s524] sm:$0xff]
        %v526 = vld [vmem:[%s524 + $0x8] sm:$0xff]
        %529 = vrot.lane.b32.xlu0 %v525, 37
        %v530 = vpop.permute.xlu0 %529
        %531 = vrot.lane.b32.xlu0 %v526, 37
        %v532 = vpop.permute.xlu0 %531
        %vm535 = vcmask 433448
        %536 = vst.msk [vmem:[#allocation2 + $0x1] sm:$0xff] %vm535, %v530
        %537 = vst.msk [vmem:[#allocation2 + $0x9] sm:$0xff] %vm535, %v532
        %s538 = scalar_lea.vmem %s491, 48
        %v539 = vld [vmem:[%s538] sm:$0xff]
        %v540 = vld [vmem:[%s538 + $0x8] sm:$0xff]
        %543 = vrot.lane.b32.xlu0 %v539, 55
        %v544 = vpop.permute.xlu0 %543
        %545 = vrot.lane.b32.xlu0 %v540, 55
        %v546 = vpop.permute.xlu0 %545
        %vm549 = vcmask 581048
        %550 = vst.msk [vmem:[#allocation2 + $0x1] sm:$0xff] %vm549, %v544
        %551 = vst.msk [vmem:[#allocation2 + $0x9] sm:$0xff] %vm549, %v546
        %v552 = vld [vmem:[#allocation2] sm:$0xff]
        %v553 = vld [vmem:[#allocation2 + $0x8] sm:$0xff]
        %v554 = vld [vmem:[%s1] sm:$0xff]
        %v555 = vld [vmem:[%s1 + $0x8] sm:$0xff]
        %v556 = vld [vmem:[%s1 + $0x10] sm:$0xff]
        %v557 = vld [vmem:[%s1 + $0x18] sm:$0xff]
        %v558 = vld [vmem:[%s1 + $0x20] sm:$0xff]
        %v559 = vld [vmem:[%s1 + $0x28] sm:$0xff]
        %v560 = vld [vmem:[%s1 + $0x30] sm:$0xff]
        %v561 = vld [vmem:[%s1 + $0x38] sm:$0xff]
        %v562 = vld [vmem:[%s1 + $0x40] sm:$0xff]
        %v563 = vld [vmem:[%s1 + $0x48] sm:$0xff]
        %v564 = vld [vmem:[%s1 + $0x50] sm:$0xff]
        %v565 = vld [vmem:[%s1 + $0x58] sm:$0xff]
        %v566 = vld [vmem:[%s1 + $0x60] sm:$0xff]
        %v567 = vld [vmem:[%s1 + $0x68] sm:$0xff]
        %v568 = vld [vmem:[%s1 + $0x70] sm:$0xff]
        %v569 = vld [vmem:[%s1 + $0x78] sm:$0xff]
        %v570 = vld [vmem:[%s1 + $0x80] sm:$0xff]
        %v571 = vld [vmem:[%s1 + $0x88] sm:$0xff]
        %v572 = vld [vmem:[#allocation2 + $0x1] sm:$0xff]
        %v573 = vld [vmem:[#allocation2 + $0x9] sm:$0xff]
        %s574 = scalar_lea.vmem %s1, 144
        %v575 = vld [vmem:[%s574] sm:$0xff]
        %v576 = vld [vmem:[%s574 + $0x8] sm:$0xff]
        %v577 = vld [vmem:[%s574 + $0x10] sm:$0xff]
        %v578 = vld [vmem:[%s574 + $0x18] sm:$0xff]
        %v579 = vld [vmem:[%s574 + $0x20] sm:$0xff]
        %v580 = vld [vmem:[%s574 + $0x28] sm:$0xff]
        %v581 = vld [vmem:[%s574 + $0x30] sm:$0xff]
        %v582 = vld [vmem:[%s574 + $0x38] sm:$0xff]
        %v583 = vld [vmem:[%s574 + $0x40] sm:$0xff]
        %v584 = vld [vmem:[%s574 + $0x48] sm:$0xff]
        %v585 = vld [vmem:[%s574 + $0x50] sm:$0xff]
        %v586 = vld [vmem:[%s574 + $0x58] sm:$0xff]
        %v587 = vld [vmem:[%s574 + $0x60] sm:$0xff]
        %v588 = vld [vmem:[%s574 + $0x68] sm:$0xff]
        %v589 = vld [vmem:[%s574 + $0x70] sm:$0xff]
        %v590 = vld [vmem:[%s574 + $0x78] sm:$0xff]
        %v591 = vld [vmem:[%s574 + $0x80] sm:$0xff]
        %v592 = vld [vmem:[%s574 + $0x88] sm:$0xff]
        %v594 = vsel %vm492, %v572, 0
        %v597 = vsel %vm492, %v573, 0
        %599 = vmatprep.subr.mxu0 0.0
        %600 = vmatpush1.msra.mxu0 0.0
        %601 = vmatprep.subr.mxu0 0.0
        %602 = vmatpush1.msra.mxu0 0.0
        %603 = vmatprep.subr.mxu0 0.0
        %604 = vmatpush1.msra.mxu0 0.0
        %605 = vmatprep.subr.mxu0 0.0
        %606 = vmatpush1.msra.mxu0 0.0
        %607 = vmatprep.subr.mxu0 0.0
        %608 = vmatpush1.msra.mxu0 0.0
        %609 = vmatprep.subr.mxu0 0.0
        %610 = vmatpush1.msra.mxu0 0.0
        %611 = vmatprep.subr.mxu0 0.0
        %612 = vmatpush1.msra.mxu0 0.0
        %613 = vmatprep.subr.mxu0 %v592
        %614 = vmatpush1.msra.mxu0 %v591
        %615 = vmatprep.subr.mxu0 %v590
        %616 = vmatpush1.msra.mxu0 %v589
        %617 = vmatprep.subr.mxu0 %v588
        %618 = vmatpush1.msra.mxu0 %v587
        %619 = vmatprep.subr.mxu0 %v586
        %620 = vmatpush1.msra.mxu0 %v585
        %621 = vmatprep.subr.mxu0 %v584
        %622 = vmatpush1.msra.mxu0 %v583
        %623 = vmatprep.subr.mxu0 %v582
        %624 = vmatpush1.msra.mxu0 %v581
        %625 = vmatprep.subr.mxu0 %v580
        %626 = vmatpush1.msra.mxu0 %v579
        %627 = vmatprep.subr.mxu0 %v578
        %628 = vmatpush1.msra.mxu0 %v577
        %629 = vmatprep.subr.mxu0 %v576
        %630 = vmatpush1.msra.mxu0 %v575
        %631 = vmatprep.subr.mxu0 0.0
        %632 = vmatpush2.msra.mxu0 0.0
        %633 = vmatprep.subr.mxu0 0.0
        %634 = vmatpush2.msra.mxu0 0.0
        %635 = vmatprep.subr.mxu0 0.0
        %636 = vmatpush2.msra.mxu0 0.0
        %637 = vmatprep.subr.mxu0 0.0
        %638 = vmatpush2.msra.mxu0 0.0
        %639 = vmatprep.subr.mxu0 0.0
        %640 = vmatpush2.msra.mxu0 0.0
        %641 = vmatprep.subr.mxu0 0.0
        %642 = vmatpush2.msra.mxu0 0.0
        %643 = vmatprep.subr.mxu0 0.0
        %644 = vmatpush2.msra.mxu0 0.0
        %645 = vmatprep.subr.mxu0 0.0
        %646 = vmatpush2.msra.mxu0 0.0
        %647 = vmatprep.subr.mxu0 0.0
        %648 = vmatpush2.msra.mxu0 0.0
        %649 = vmatprep.subr.mxu0 0.0
        %650 = vmatpush2.msra.mxu0 0.0
        %651 = vmatprep.subr.mxu0 0.0
        %652 = vmatpush2.msra.mxu0 0.0
        %653 = vmatprep.subr.mxu0 0.0
        %654 = vmatpush2.msra.mxu0 0.0
        %655 = vmatprep.subr.mxu0 0.0
        %656 = vmatpush2.msra.mxu0 0.0
        %657 = vmatprep.subr.mxu0 0.0
        %658 = vmatpush2.msra.mxu0 0.0
        %659 = vmatprep.subr.mxu0 0.0
        %660 = vmatpush2.msra.mxu0 0.0
        %661 = vmatprep.subr.mxu0 0.0
        %662 = vmatpush2.msra.mxu0 0.0
        %663 = vmatprep.mubr.f32.mxu0 0.0
        %664 = vmatmul.mubr.f32.gmra.mxu0 %v594
        %v665 = vpop.f32.mrf.mxu0
        %v666 = vadd.f32 0.0, %v665
        %v667 = vpop.f32.mrf.mxu0
        %v668 = vadd.f32 0.0, %v667
        %669 = vmatprep.mubr.f32.mxu0 0.0
        %670 = vmatmul.mubr.f32.gmra.mxu0 %v597
        %v671 = vpop.f32.mrf.mxu0
        %v672 = vadd.f32 0.0, %v671
        %v673 = vpop.f32.mrf.mxu0
        %v674 = vadd.f32 0.0, %v673
        %675 = vdwg.mxu0
        %v677 = vsel %vm492, %v552, 0
        %v680 = vsel %vm492, %v553, 0
        %682 = vmatprep.subr.mxu0 0.0
        %683 = vmatpush1.msra.mxu0 0.0
        %684 = vmatprep.subr.mxu0 0.0
        %685 = vmatpush1.msra.mxu0 0.0
        %686 = vmatprep.subr.mxu0 0.0
        %687 = vmatpush1.msra.mxu0 0.0
        %688 = vmatprep.subr.mxu0 0.0
        %689 = vmatpush1.msra.mxu0 0.0
        %690 = vmatprep.subr.mxu0 0.0
        %691 = vmatpush1.msra.mxu0 0.0
        %692 = vmatprep.subr.mxu0 0.0
        %693 = vmatpush1.msra.mxu0 0.0
        %694 = vmatprep.subr.mxu0 0.0
        %695 = vmatpush1.msra.mxu0 0.0
        %696 = vmatprep.subr.mxu0 %v571
        %697 = vmatpush1.msra.mxu0 %v570
        %698 = vmatprep.subr.mxu0 %v569
        %699 = vmatpush1.msra.mxu0 %v568
        %700 = vmatprep.subr.mxu0 %v567
        %701 = vmatpush1.msra.mxu0 %v566
        %702 = vmatprep.subr.mxu0 %v565
        %703 = vmatpush1.msra.mxu0 %v564
        %704 = vmatprep.subr.mxu0 %v563
        %705 = vmatpush1.msra.mxu0 %v562
        %706 = vmatprep.subr.mxu0 %v561
        %707 = vmatpush1.msra.mxu0 %v560
        %708 = vmatprep.subr.mxu0 %v559
        %709 = vmatpush1.msra.mxu0 %v558
        %710 = vmatprep.subr.mxu0 %v557
        %711 = vmatpush1.msra.mxu0 %v556
        %712 = vmatprep.subr.mxu0 %v555
        %713 = vmatpush1.msra.mxu0 %v554
        %714 = vmatprep.subr.mxu0 0.0
        %715 = vmatpush2.msra.mxu0 0.0
        %716 = vmatprep.subr.mxu0 0.0
        %717 = vmatpush2.msra.mxu0 0.0
        %718 = vmatprep.subr.mxu0 0.0
        %719 = vmatpush2.msra.mxu0 0.0
        %720 = vmatprep.subr.mxu0 0.0
        %721 = vmatpush2.msra.mxu0 0.0
        %722 = vmatprep.subr.mxu0 0.0
        %723 = vmatpush2.msra.mxu0 0.0
        %724 = vmatprep.subr.mxu0 0.0
        %725 = vmatpush2.msra.mxu0 0.0
        %726 = vmatprep.subr.mxu0 0.0
        %727 = vmatpush2.msra.mxu0 0.0
        %728 = vmatprep.subr.mxu0 0.0
        %729 = vmatpush2.msra.mxu0 0.0
        %730 = vmatprep.subr.mxu0 0.0
        %731 = vmatpush2.msra.mxu0 0.0
        %732 = vmatprep.subr.mxu0 0.0
        %733 = vmatpush2.msra.mxu0 0.0
        %734 = vmatprep.subr.mxu0 0.0
        %735 = vmatpush2.msra.mxu0 0.0
        %736 = vmatprep.subr.mxu0 0.0
        %737 = vmatpush2.msra.mxu0 0.0
        %738 = vmatprep.subr.mxu0 0.0
        %739 = vmatpush2.msra.mxu0 0.0
        %740 = vmatprep.subr.mxu0 0.0
        %741 = vmatpush2.msra.mxu0 0.0
        %742 = vmatprep.subr.mxu0 0.0
        %743 = vmatpush2.msra.mxu0 0.0
        %744 = vmatprep.subr.mxu0 0.0
        %745 = vmatpush2.msra.mxu0 0.0
        %746 = vmatprep.mubr.f32.mxu0 0.0
        %747 = vmatmul.mubr.f32.gmra.mxu0 %v677
        %v748 = vpop.f32.mrf.mxu0
        %v749 = vadd.f32 %v666, %v748
        %v750 = vpop.f32.mrf.mxu0
        %v751 = vadd.f32 %v668, %v750
        %752 = vmatprep.mubr.f32.mxu0 0.0
        %753 = vmatmul.mubr.f32.gmra.mxu0 %v680
        %v754 = vpop.f32.mrf.mxu0
        %v755 = vadd.f32 %v672, %v754
        %v756 = vpop.f32.mrf.mxu0
        %v757 = vadd.f32 %v674, %v756
        %758 = vdwg.mxu0
        %v759 = vld [vmem:[#allocation2 + $0x2] sm:$0xff]
        %v760 = vld [vmem:[#allocation2 + $0xa] sm:$0xff]
        %s761 = scalar_lea.vmem %s1, 288
        %v762 = vld [vmem:[%s761] sm:$0xff]
        %v763 = vld [vmem:[%s761 + $0x8] sm:$0xff]
        %v764 = vld [vmem:[%s761 + $0x10] sm:$0xff]
        %v765 = vld [vmem:[%s761 + $0x18] sm:$0xff]
        %v766 = vld [vmem:[%s761 + $0x20] sm:$0xff]
        %v767 = vld [vmem:[%s761 + $0x28] sm:$0xff]
        %v768 = vld [vmem:[%s761 + $0x30] sm:$0xff]
        %v769 = vld [vmem:[%s761 + $0x38] sm:$0xff]
        %v770 = vld [vmem:[%s761 + $0x40] sm:$0xff]
        %v771 = vld [vmem:[%s761 + $0x48] sm:$0xff]
        %v772 = vld [vmem:[%s761 + $0x50] sm:$0xff]
        %v773 = vld [vmem:[%s761 + $0x58] sm:$0xff]
        %v774 = vld [vmem:[%s761 + $0x60] sm:$0xff]
        %v775 = vld [vmem:[%s761 + $0x68] sm:$0xff]
        %v776 = vld [vmem:[%s761 + $0x70] sm:$0xff]
        %v777 = vld [vmem:[%s761 + $0x78] sm:$0xff]
        %v778 = vld [vmem:[%s761 + $0x80] sm:$0xff]
        %v779 = vld [vmem:[%s761 + $0x88] sm:$0xff]
        %v781 = vsel %vm492, %v759, 0
        %v784 = vsel %vm492, %v760, 0
        %786 = vmatprep.subr.mxu0 0.0
        %787 = vmatpush1.msra.mxu0 0.0
        %788 = vmatprep.subr.mxu0 0.0
        %789 = vmatpush1.msra.mxu0 0.0
        %790 = vmatprep.subr.mxu0 0.0
        %791 = vmatpush1.msra.mxu0 0.0
        %792 = vmatprep.subr.mxu0 0.0
        %793 = vmatpush1.msra.mxu0 0.0
        %794 = vmatprep.subr.mxu0 0.0
        %795 = vmatpush1.msra.mxu0 0.0
        %796 = vmatprep.subr.mxu0 0.0
        %797 = vmatpush1.msra.mxu0 0.0
        %798 = vmatprep.subr.mxu0 0.0
        %799 = vmatpush1.msra.mxu0 0.0
        %800 = vmatprep.subr.mxu0 %v779
        %801 = vmatpush1.msra.mxu0 %v778
        %802 = vmatprep.subr.mxu0 %v777
        %803 = vmatpush1.msra.mxu0 %v776
        %804 = vmatprep.subr.mxu0 %v775
        %805 = vmatpush1.msra.mxu0 %v774
        %806 = vmatprep.subr.mxu0 %v773
        %807 = vmatpush1.msra.mxu0 %v772
        %808 = vmatprep.subr.mxu0 %v771
        %809 = vmatpush1.msra.mxu0 %v770
        %810 = vmatprep.subr.mxu0 %v769
        %811 = vmatpush1.msra.mxu0 %v768
        %812 = vmatprep.subr.mxu0 %v767
        %813 = vmatpush1.msra.mxu0 %v766
        %814 = vmatprep.subr.mxu0 %v765
        %815 = vmatpush1.msra.mxu0 %v764
        %816 = vmatprep.subr.mxu0 %v763
        %817 = vmatpush1.msra.mxu0 %v762
        %818 = vmatprep.subr.mxu0 0.0
        %819 = vmatpush2.msra.mxu0 0.0
        %820 = vmatprep.subr.mxu0 0.0
        %821 = vmatpush2.msra.mxu0 0.0
        %822 = vmatprep.subr.mxu0 0.0
        %823 = vmatpush2.msra.mxu0 0.0
        %824 = vmatprep.subr.mxu0 0.0
        %825 = vmatpush2.msra.mxu0 0.0
        %826 = vmatprep.subr.mxu0 0.0
        %827 = vmatpush2.msra.mxu0 0.0
        %828 = vmatprep.subr.mxu0 0.0
        %829 = vmatpush2.msra.mxu0 0.0
        %830 = vmatprep.subr.mxu0 0.0
        %831 = vmatpush2.msra.mxu0 0.0
        %832 = vmatprep.subr.mxu0 0.0
        %833 = vmatpush2.msra.mxu0 0.0
        %834 = vmatprep.subr.mxu0 0.0
        %835 = vmatpush2.msra.mxu0 0.0
        %836 = vmatprep.subr.mxu0 0.0
        %837 = vmatpush2.msra.mxu0 0.0
        %838 = vmatprep.subr.mxu0 0.0
        %839 = vmatpush2.msra.mxu0 0.0
        %840 = vmatprep.subr.mxu0 0.0
        %841 = vmatpush2.msra.mxu0 0.0
        %842 = vmatprep.subr.mxu0 0.0
        %843 = vmatpush2.msra.mxu0 0.0
        %844 = vmatprep.subr.mxu0 0.0
        %845 = vmatpush2.msra.mxu0 0.0
        %846 = vmatprep.subr.mxu0 0.0
        %847 = vmatpush2.msra.mxu0 0.0
        %848 = vmatprep.subr.mxu0 0.0
        %849 = vmatpush2.msra.mxu0 0.0
        %850 = vmatprep.mubr.f32.mxu0 0.0
        %851 = vmatmul.mubr.f32.gmra.mxu0 %v781
        %v852 = vpop.f32.mrf.mxu0
        %v853 = vadd.f32 0.0, %v852
        %v854 = vpop.f32.mrf.mxu0
        %v855 = vadd.f32 0.0, %v854
        %856 = vmatprep.mubr.f32.mxu0 0.0
        %857 = vmatmul.mubr.f32.gmra.mxu0 %v784
        %v858 = vpop.f32.mrf.mxu0
        %v859 = vadd.f32 0.0, %v858
        %v860 = vpop.f32.mrf.mxu0
        %v861 = vadd.f32 0.0, %v860
        %862 = vdwg.mxu0
        %v863 = vadd.f32 %v749, %v853
        %v864 = vadd.f32 %v751, %v855
        %v865 = vadd.f32 %v755, %v859
        %v866 = vadd.f32 %v757, %v861
        %v867 = vld [vmem:[%s2] sm:$0x3]
        %v869 = vlaneseq
        %v870 = vshrl.u32 %v869, 7
        %v871 = vsub.s32 0, %v870
        %v872 = vrot.slane %v867, %v871
        %v873 = vlaneseq
        %v874 = vshrl.u32 %v873, 7
        %v875 = vsub.s32 1, %v874
        %v876 = vrot.slane %v867, %v875
        %v879 = vadd.f32 %v863, %v872
        %v880 = vadd.f32 %v864, %v876
        %v881 = vadd.f32 %v865, %v872
        %v882 = vadd.f32 %v866, %v876
        %v883 = vmax.f32 %v879, 0.0
        %v884 = vmax.f32 %v880, 0.0
        %v885 = vmax.f32 %v881, 0.0
        %v886 = vmax.f32 %v882, 0.0
        %v887 = vmax.f32 %v883, %v884
        %v888 = vmax.f32 %v885, %v886
        %889 = vst [vmem:[#allocation3] sm:$0xff] 0.0
        %vm890 = vcmask 261120
        %891 = vst.msk [vmem:[#allocation3 + $0x8] sm:$0xff] %vm890, 0.0
        %892 = vst [vmem:[#allocation3 + $0x10] sm:$0x3] 0.0
        %vm893 = vcmask 254976
        %894 = vst.msk [vmem:[#allocation3 + $0x18] sm:$0x3] %vm893, 0.0
        %v896 = vrot.slane %v887, 1
        %v898 = vmax.f32 %v887, %v896
        %900 = vrot.lane.b32.xlu0 %v898, 16
        %v901 = vpop.permute.xlu0 %900
        %vm903 = vcmask 1040512
        %904 = vst.msk [vmem:[#allocation3 + $0x1] sm:$0x1] %vm903, %v901
        %vm905 = vcmask 122880
        %906 = vst.msk [vmem:[#allocation3 + $0x9] sm:$0x1] %vm905, %v901
        %v907 = vrot.slane %v898, 2
        %908 = vrot.lane.b32.xlu0 %v907, 16
        %v909 = vpop.permute.xlu0 %908
        %911 = vst.msk [vmem:[#allocation3 + $0x2] sm:$0x1] %vm903, %v909
        %912 = vst.msk [vmem:[#allocation3 + $0xa] sm:$0x1] %vm905, %v909
        %v913 = vrot.slane %v898, 4
        %914 = vrot.lane.b32.xlu0 %v913, 16
        %v915 = vpop.permute.xlu0 %914
        %917 = vst.msk [vmem:[#allocation3 + $0x3] sm:$0x1] %vm903, %v915
        %918 = vst.msk [vmem:[#allocation3 + $0xb] sm:$0x1] %vm905, %v915
        %v919 = vrot.slane %v898, 6
        %920 = vrot.lane.b32.xlu0 %v919, 16
        %v921 = vpop.permute.xlu0 %920
        %923 = vst.msk [vmem:[#allocation3 + $0x4] sm:$0x1] %vm903, %v921
        %924 = vst.msk [vmem:[#allocation3 + $0xc] sm:$0x1] %vm905, %v921
        %v926 = vrot.slane %v888, 1
        %v928 = vmax.f32 %v888, %v926
        %930 = vrot.lane.b32.xlu0 %v928, 16
        %v931 = vpop.permute.xlu0 %930
        %933 = vst.msk [vmem:[#allocation3 + $0x5] sm:$0x1] %vm903, %v931
        %934 = vst.msk [vmem:[#allocation3 + $0xd] sm:$0x1] %vm905, %v931
        %v935 = vrot.slane %v928, 2
        %936 = vrot.lane.b32.xlu0 %v935, 16
        %v937 = vpop.permute.xlu0 %936
        %939 = vst.msk [vmem:[#allocation3 + $0x6] sm:$0x1] %vm903, %v937
        %940 = vst.msk [vmem:[#allocation3 + $0xe] sm:$0x1] %vm905, %v937
        %v941 = vrot.slane %v928, 4
        %942 = vrot.lane.b32.xlu0 %v941, 16
        %v943 = vpop.permute.xlu0 %942
        %945 = vst.msk [vmem:[#allocation3 + $0x7] sm:$0x1] %vm903, %v943
        %946 = vst.msk [vmem:[#allocation3 + $0xf] sm:$0x1] %vm905, %v943
        %v947 = vrot.slane %v928, 6
        %948 = vrot.lane.b32.xlu0 %v947, 16
        %v949 = vpop.permute.xlu0 %948
        %951 = vst.msk [vmem:[#allocation3 + $0x10] sm:$0x1] %vm903, %v949
        %952 = vst.msk [vmem:[#allocation3 + $0x18] sm:$0x1] %vm905, %v949
        %v953 = vld [vmem:[#allocation3] sm:$0xff]
        %v954 = vld [vmem:[#allocation3 + $0x8] sm:$0xff]
        %v955 = vld [vmem:[%s3] sm:$0xff]
        %v956 = vld [vmem:[%s3 + $0x8] sm:$0xff]
        %v957 = vld [vmem:[%s3 + $0x10] sm:$0xff]
        %v958 = vld [vmem:[%s3 + $0x18] sm:$0xff]
        %v959 = vld [vmem:[%s3 + $0x20] sm:$0xff]
        %v960 = vld [vmem:[%s3 + $0x28] sm:$0xff]
        %v961 = vld [vmem:[%s3 + $0x30] sm:$0xff]
        %v962 = vld [vmem:[%s3 + $0x38] sm:$0xff]
        %v963 = vld [vmem:[%s3 + $0x40] sm:$0xff]
        %v964 = vld [vmem:[%s3 + $0x48] sm:$0xff]
        %v965 = vld [vmem:[%s3 + $0x50] sm:$0xff]
        %v966 = vld [vmem:[%s3 + $0x58] sm:$0xff]
        %v967 = vld [vmem:[%s3 + $0x60] sm:$0xff]
        %v968 = vld [vmem:[%s3 + $0x68] sm:$0xff]
        %v969 = vld [vmem:[%s3 + $0x70] sm:$0xff]
        %v970 = vld [vmem:[%s3 + $0x78] sm:$0xff]
        %v971 = vld [vmem:[%s3 + $0x80] sm:$0xff]
        %v972 = vld [vmem:[%s3 + $0x88] sm:$0xff]
        %v973 = vld [vmem:[%s3 + $0x90] sm:$0xff]
        %v974 = vld [vmem:[%s3 + $0x98] sm:$0xff]
        %v975 = vld [vmem:[%s3 + $0xa0] sm:$0xff]
        %v976 = vld [vmem:[%s3 + $0xa8] sm:$0xff]
        %v977 = vld [vmem:[%s3 + $0xb0] sm:$0xff]
        %v978 = vld [vmem:[%s3 + $0xb8] sm:$0xff]
        %v979 = vld [vmem:[%s3 + $0xc0] sm:$0xff]
        %v980 = vld [vmem:[%s3 + $0xc8] sm:$0xff]
        %v981 = vld [vmem:[%s3 + $0xd0] sm:$0xff]
        %v982 = vld [vmem:[%s3 + $0xd8] sm:$0xff]
        %v983 = vld [vmem:[%s3 + $0xe0] sm:$0xff]
        %v984 = vld [vmem:[%s3 + $0xe8] sm:$0xff]
        %v985 = vld [vmem:[%s3 + $0xf0] sm:$0xff]
        %v986 = vld [vmem:[%s3 + $0xf8] sm:$0xff]
        %v987 = vld [vmem:[%s3 + $0x100] sm:$0xff]
        %v988 = vld [vmem:[%s3 + $0x108] sm:$0xff]
        %v989 = vld [vmem:[%s3 + $0x110] sm:$0xff]
        %v990 = vld [vmem:[%s3 + $0x118] sm:$0xff]
        %v991 = vld [vmem:[%s3 + $0x120] sm:$0xff]
        %v992 = vld [vmem:[%s3 + $0x128] sm:$0xff]
        %v993 = vld [vmem:[%s3 + $0x130] sm:$0xff]
        %v994 = vld [vmem:[%s3 + $0x138] sm:$0xff]
        %v995 = vld [vmem:[#allocation3] sm:$0xfe]
        %v996 = vld [vmem:[#allocation3 + $0x8] sm:$0xfe]
        %v997 = vld [vmem:[#allocation3 + $0x10] sm:$0x1]
        %v998 = vld [vmem:[#allocation3 + $0x18] sm:$0x1]
        %s999 = scalar_lea.vmem %s3, 320
        %v1000 = vld [vmem:[%s999] sm:$0xff]
        %v1001 = vld [vmem:[%s999 + $0x8] sm:$0xff]
        %v1002 = vld [vmem:[%s999 + $0x10] sm:$0xff]
        %v1003 = vld [vmem:[%s999 + $0x18] sm:$0xff]
        %v1004 = vld [vmem:[%s999 + $0x20] sm:$0xff]
        %v1005 = vld [vmem:[%s999 + $0x28] sm:$0xff]
        %v1006 = vld [vmem:[%s999 + $0x30] sm:$0xff]
        %v1007 = vld [vmem:[%s999 + $0x38] sm:$0xff]
        %v1008 = vld [vmem:[%s999 + $0x40] sm:$0xff]
        %v1009 = vld [vmem:[%s999 + $0x48] sm:$0xff]
        %v1010 = vld [vmem:[%s999 + $0x50] sm:$0xff]
        %v1011 = vld [vmem:[%s999 + $0x58] sm:$0xff]
        %v1012 = vld [vmem:[%s999 + $0x60] sm:$0xff]
        %v1013 = vld [vmem:[%s999 + $0x68] sm:$0xff]
        %v1014 = vld [vmem:[%s999 + $0x70] sm:$0xff]
        %v1015 = vld [vmem:[%s999 + $0x78] sm:$0xff]
        %v1016 = vld [vmem:[%s999 + $0x80] sm:$0xff]
        %v1017 = vld [vmem:[%s999 + $0x88] sm:$0xff]
        %v1018 = vld [vmem:[%s999 + $0x90] sm:$0xff]
        %v1019 = vld [vmem:[%s999 + $0x98] sm:$0xff]
        %v1020 = vld [vmem:[%s999 + $0xa0] sm:$0xff]
        %v1021 = vld [vmem:[%s999 + $0xa8] sm:$0xff]
        %v1022 = vld [vmem:[%s999 + $0xb0] sm:$0xff]
        %v1023 = vld [vmem:[%s999 + $0xb8] sm:$0xff]
        %v1024 = vld [vmem:[%s999 + $0xc0] sm:$0xff]
        %v1025 = vld [vmem:[%s999 + $0xc8] sm:$0xff]
        %v1026 = vld [vmem:[%s999 + $0xd0] sm:$0xff]
        %v1027 = vld [vmem:[%s999 + $0xd8] sm:$0xff]
        %v1028 = vld [vmem:[%s999 + $0xe0] sm:$0xff]
        %v1029 = vld [vmem:[%s999 + $0xe8] sm:$0xff]
        %v1030 = vld [vmem:[%s999 + $0xf0] sm:$0xff]
        %v1031 = vld [vmem:[%s999 + $0xf8] sm:$0xff]
        %v1032 = vld [vmem:[%s999 + $0x100] sm:$0xff]
        %v1033 = vld [vmem:[%s999 + $0x108] sm:$0xff]
        %v1034 = vld [vmem:[%s999 + $0x110] sm:$0xff]
        %v1035 = vld [vmem:[%s999 + $0x118] sm:$0xff]
        %v1036 = vld [vmem:[%s999 + $0x120] sm:$0xff]
        %v1037 = vld [vmem:[%s999 + $0x128] sm:$0xff]
        %v1038 = vld [vmem:[%s999 + $0x130] sm:$0xff]
        %v1039 = vld [vmem:[%s999 + $0x138] sm:$0xff]
        %vm1044 = vcmask 1046528
        %v1045 = vrot.slane %v995, 1
        %v1046 = vrot.slane %v997, 1
        %v1047 = vsel %vm1044, %v1045, %v1046
        %v1048 = vrot.slane %v996, 1
        %v1049 = vrot.slane %v998, 1
        %v1050 = vsel %vm1044, %v1048, %v1049
        %v1052 = vsel %vm890, %v1050, 0
        %1054 = vmatprep.subr.mxu0 %v1031
        %1055 = vmatpush1.msra.mxu0 %v1030
        %1056 = vmatprep.subr.mxu0 %v1029
        %1057 = vmatpush1.msra.mxu0 %v1028
        %1058 = vmatprep.subr.mxu0 %v1027
        %1059 = vmatpush1.msra.mxu0 %v1026
        %1060 = vmatprep.subr.mxu0 %v1025
        %1061 = vmatpush1.msra.mxu0 %v1024
        %1062 = vmatprep.subr.mxu0 %v1023
        %1063 = vmatpush1.msra.mxu0 %v1022
        %1064 = vmatprep.subr.mxu0 %v1021
        %1065 = vmatpush1.msra.mxu0 %v1020
        %1066 = vmatprep.subr.mxu0 %v1019
        %1067 = vmatpush1.msra.mxu0 %v1018
        %1068 = vmatprep.subr.mxu0 %v1017
        %1069 = vmatpush1.msra.mxu0 %v1016
        %1070 = vmatprep.subr.mxu0 %v1015
        %1071 = vmatpush1.msra.mxu0 %v1014
        %1072 = vmatprep.subr.mxu0 %v1013
        %1073 = vmatpush1.msra.mxu0 %v1012
        %1074 = vmatprep.subr.mxu0 %v1011
        %1075 = vmatpush1.msra.mxu0 %v1010
        %1076 = vmatprep.subr.mxu0 %v1009
        %1077 = vmatpush1.msra.mxu0 %v1008
        %1078 = vmatprep.subr.mxu0 %v1007
        %1079 = vmatpush1.msra.mxu0 %v1006
        %1080 = vmatprep.subr.mxu0 %v1005
        %1081 = vmatpush1.msra.mxu0 %v1004
        %1082 = vmatprep.subr.mxu0 %v1003
        %1083 = vmatpush1.msra.mxu0 %v1002
        %1084 = vmatprep.subr.mxu0 %v1001
        %1085 = vmatpush1.msra.mxu0 %v1000
        %1086 = vmatprep.subr.mxu0 0.0
        %1087 = vmatpush2.msra.mxu0 0.0
        %1088 = vmatprep.subr.mxu0 0.0
        %1089 = vmatpush2.msra.mxu0 0.0
        %1090 = vmatprep.subr.mxu0 0.0
        %1091 = vmatpush2.msra.mxu0 0.0
        %1092 = vmatprep.subr.mxu0 0.0
        %1093 = vmatpush2.msra.mxu0 0.0
        %1094 = vmatprep.subr.mxu0 0.0
        %1095 = vmatpush2.msra.mxu0 0.0
        %1096 = vmatprep.subr.mxu0 0.0
        %1097 = vmatpush2.msra.mxu0 0.0
        %1098 = vmatprep.subr.mxu0 0.0
        %1099 = vmatpush2.msra.mxu0 0.0
        %1100 = vmatprep.subr.mxu0 0.0
        %1101 = vmatpush2.msra.mxu0 0.0
        %1102 = vmatprep.subr.mxu0 0.0
        %1103 = vmatpush2.msra.mxu0 0.0
        %1104 = vmatprep.subr.mxu0 0.0
        %1105 = vmatpush2.msra.mxu0 0.0
        %1106 = vmatprep.subr.mxu0 0.0
        %1107 = vmatpush2.msra.mxu0 0.0
        %1108 = vmatprep.subr.mxu0 0.0
        %1109 = vmatpush2.msra.mxu0 0.0
        %1110 = vmatprep.subr.mxu0 %v1039
        %1111 = vmatpush2.msra.mxu0 %v1038
        %1112 = vmatprep.subr.mxu0 %v1037
        %1113 = vmatpush2.msra.mxu0 %v1036
        %1114 = vmatprep.subr.mxu0 %v1035
        %1115 = vmatpush2.msra.mxu0 %v1034
        %1116 = vmatprep.subr.mxu0 %v1033
        %1117 = vmatpush2.msra.mxu0 %v1032
        %1118 = vmatprep.mubr.f32.mxu0 %v1052
        %1119 = vmatmul.mubr.f32.gmra.mxu0 %v1047
        %v1120 = vpop.f32.mrf.mxu0
        %v1121 = vadd.f32 0.0, %v1120
        %v1122 = vpop.f32.mrf.mxu0
        %v1123 = vadd.f32 0.0, %v1122
        %1124 = vdwg.mxu0
        %v1126 = vsel %vm890, %v954, 0
        %1128 = vmatprep.subr.mxu0 %v986
        %1129 = vmatpush1.msra.mxu0 %v985
        %1130 = vmatprep.subr.mxu0 %v984
        %1131 = vmatpush1.msra.mxu0 %v983
        %1132 = vmatprep.subr.mxu0 %v982
        %1133 = vmatpush1.msra.mxu0 %v981
        %1134 = vmatprep.subr.mxu0 %v980
        %1135 = vmatpush1.msra.mxu0 %v979
        %1136 = vmatprep.subr.mxu0 %v978
        %1137 = vmatpush1.msra.mxu0 %v977
        %1138 = vmatprep.subr.mxu0 %v976
        %1139 = vmatpush1.msra.mxu0 %v975
        %1140 = vmatprep.subr.mxu0 %v974
        %1141 = vmatpush1.msra.mxu0 %v973
        %1142 = vmatprep.subr.mxu0 %v972
        %1143 = vmatpush1.msra.mxu0 %v971
        %1144 = vmatprep.subr.mxu0 %v970
        %1145 = vmatpush1.msra.mxu0 %v969
        %1146 = vmatprep.subr.mxu0 %v968
        %1147 = vmatpush1.msra.mxu0 %v967
        %1148 = vmatprep.subr.mxu0 %v966
        %1149 = vmatpush1.msra.mxu0 %v965
        %1150 = vmatprep.subr.mxu0 %v964
        %1151 = vmatpush1.msra.mxu0 %v963
        %1152 = vmatprep.subr.mxu0 %v962
        %1153 = vmatpush1.msra.mxu0 %v961
        %1154 = vmatprep.subr.mxu0 %v960
        %1155 = vmatpush1.msra.mxu0 %v959
        %1156 = vmatprep.subr.mxu0 %v958
        %1157 = vmatpush1.msra.mxu0 %v957
        %1158 = vmatprep.subr.mxu0 %v956
        %1159 = vmatpush1.msra.mxu0 %v955
        %1160 = vmatprep.subr.mxu0 0.0
        %1161 = vmatpush2.msra.mxu0 0.0
        %1162 = vmatprep.subr.mxu0 0.0
        %1163 = vmatpush2.msra.mxu0 0.0
        %1164 = vmatprep.subr.mxu0 0.0
        %1165 = vmatpush2.msra.mxu0 0.0
        %1166 = vmatprep.subr.mxu0 0.0
        %1167 = vmatpush2.msra.mxu0 0.0
        %1168 = vmatprep.subr.mxu0 0.0
        %1169 = vmatpush2.msra.mxu0 0.0
        %1170 = vmatprep.subr.mxu0 0.0
        %1171 = vmatpush2.msra.mxu0 0.0
        %1172 = vmatprep.subr.mxu0 0.0
        %1173 = vmatpush2.msra.mxu0 0.0
        %1174 = vmatprep.subr.mxu0 0.0
        %1175 = vmatpush2.msra.mxu0 0.0
        %1176 = vmatprep.subr.mxu0 0.0
        %1177 = vmatpush2.msra.mxu0 0.0
        %1178 = vmatprep.subr.mxu0 0.0
        %1179 = vmatpush2.msra.mxu0 0.0
        %1180 = vmatprep.subr.mxu0 0.0
        %1181 = vmatpush2.msra.mxu0 0.0
        %1182 = vmatprep.subr.mxu0 0.0
        %1183 = vmatpush2.msra.mxu0 0.0
        %1184 = vmatprep.subr.mxu0 %v994
        %1185 = vmatpush2.msra.mxu0 %v993
        %1186 = vmatprep.subr.mxu0 %v992
        %1187 = vmatpush2.msra.mxu0 %v991
        %1188 = vmatprep.subr.mxu0 %v990
        %1189 = vmatpush2.msra.mxu0 %v989
        %1190 = vmatprep.subr.mxu0 %v988
        %1191 = vmatpush2.msra.mxu0 %v987
        %1192 = vmatprep.mubr.f32.mxu0 %v1126
        %1193 = vmatmul.mubr.f32.gmra.mxu0 %v953
        %v1194 = vpop.f32.mrf.mxu0
        %v1195 = vadd.f32 %v1121, %v1194
        %v1196 = vpop.f32.mrf.mxu0
        %v1197 = vadd.f32 %v1123, %v1196
        %1198 = vdwg.mxu0
        %v1199 = vld [vmem:[#allocation3] sm:$0xfc]
        %v1200 = vld [vmem:[#allocation3 + $0x8] sm:$0xfc]
        %v1201 = vld [vmem:[#allocation3 + $0x10] sm:$0x3]
        %v1202 = vld [vmem:[#allocation3 + $0x18] sm:$0x3]
        %s1203 = scalar_lea.vmem %s3, 640
        %v1204 = vld [vmem:[%s1203] sm:$0xff]
        %v1205 = vld [vmem:[%s1203 + $0x8] sm:$0xff]
        %v1206 = vld [vmem:[%s1203 + $0x10] sm:$0xff]
        %v1207 = vld [vmem:[%s1203 + $0x18] sm:$0xff]
        %v1208 = vld [vmem:[%s1203 + $0x20] sm:$0xff]
        %v1209 = vld [vmem:[%s1203 + $0x28] sm:$0xff]
        %v1210 = vld [vmem:[%s1203 + $0x30] sm:$0xff]
        %v1211 = vld [vmem:[%s1203 + $0x38] sm:$0xff]
        %v1212 = vld [vmem:[%s1203 + $0x40] sm:$0xff]
        %v1213 = vld [vmem:[%s1203 + $0x48] sm:$0xff]
        %v1214 = vld [vmem:[%s1203 + $0x50] sm:$0xff]
        %v1215 = vld [vmem:[%s1203 + $0x58] sm:$0xff]
        %v1216 = vld [vmem:[%s1203 + $0x60] sm:$0xff]
        %v1217 = vld [vmem:[%s1203 + $0x68] sm:$0xff]
        %v1218 = vld [vmem:[%s1203 + $0x70] sm:$0xff]
        %v1219 = vld [vmem:[%s1203 + $0x78] sm:$0xff]
        %v1220 = vld [vmem:[%s1203 + $0x80] sm:$0xff]
        %v1221 = vld [vmem:[%s1203 + $0x88] sm:$0xff]
        %v1222 = vld [vmem:[%s1203 + $0x90] sm:$0xff]
        %v1223 = vld [vmem:[%s1203 + $0x98] sm:$0xff]
        %v1224 = vld [vmem:[%s1203 + $0xa0] sm:$0xff]
        %v1225 = vld [vmem:[%s1203 + $0xa8] sm:$0xff]
        %v1226 = vld [vmem:[%s1203 + $0xb0] sm:$0xff]
        %v1227 = vld [vmem:[%s1203 + $0xb8] sm:$0xff]
        %v1228 = vld [vmem:[%s1203 + $0xc0] sm:$0xff]
        %v1229 = vld [vmem:[%s1203 + $0xc8] sm:$0xff]
        %v1230 = vld [vmem:[%s1203 + $0xd0] sm:$0xff]
        %v1231 = vld [vmem:[%s1203 + $0xd8] sm:$0xff]
        %v1232 = vld [vmem:[%s1203 + $0xe0] sm:$0xff]
        %v1233 = vld [vmem:[%s1203 + $0xe8] sm:$0xff]
        %v1234 = vld [vmem:[%s1203 + $0xf0] sm:$0xff]
        %v1235 = vld [vmem:[%s1203 + $0xf8] sm:$0xff]
        %v1236 = vld [vmem:[%s1203 + $0x100] sm:$0xff]
        %v1237 = vld [vmem:[%s1203 + $0x108] sm:$0xff]
        %v1238 = vld [vmem:[%s1203 + $0x110] sm:$0xff]
        %v1239 = vld [vmem:[%s1203 + $0x118] sm:$0xff]
        %v1240 = vld [vmem:[%s1203 + $0x120] sm:$0xff]
        %v1241 = vld [vmem:[%s1203 + $0x128] sm:$0xff]
        %v1242 = vld [vmem:[%s1203 + $0x130] sm:$0xff]
        %v1243 = vld [vmem:[%s1203 + $0x138] sm:$0xff]
        %vm1248 = vcmask 1045504
        %v1249 = vrot.slane %v1199, 2
        %v1250 = vrot.slane %v1201, 2
        %v1251 = vsel %vm1248, %v1249, %v1250
        %v1252 = vrot.slane %v1200, 2
        %v1253 = vrot.slane %v1202, 2
        %v1254 = vsel %vm1248, %v1252, %v1253
        %v1256 = vsel %vm890, %v1254, 0
        %1258 = vmatprep.subr.mxu0 %v1235
        %1259 = vmatpush1.msra.mxu0 %v1234
        %1260 = vmatprep.subr.mxu0 %v1233
        %1261 = vmatpush1.msra.mxu0 %v1232
        %1262 = vmatprep.subr.mxu0 %v1231
        %1263 = vmatpush1.msra.mxu0 %v1230
        %1264 = vmatprep.subr.mxu0 %v1229
        %1265 = vmatpush1.msra.mxu0 %v1228
        %1266 = vmatprep.subr.mxu0 %v1227
        %1267 = vmatpush1.msra.mxu0 %v1226
        %1268 = vmatprep.subr.mxu0 %v1225
        %1269 = vmatpush1.msra.mxu0 %v1224
        %1270 = vmatprep.subr.mxu0 %v1223
        %1271 = vmatpush1.msra.mxu0 %v1222
        %1272 = vmatprep.subr.mxu0 %v1221
        %1273 = vmatpush1.msra.mxu0 %v1220
        %1274 = vmatprep.subr.mxu0 %v1219
        %1275 = vmatpush1.msra.mxu0 %v1218
        %1276 = vmatprep.subr.mxu0 %v1217
        %1277 = vmatpush1.msra.mxu0 %v1216
        %1278 = vmatprep.subr.mxu0 %v1215
        %1279 = vmatpush1.msra.mxu0 %v1214
        %1280 = vmatprep.subr.mxu0 %v1213
        %1281 = vmatpush1.msra.mxu0 %v1212
        %1282 = vmatprep.subr.mxu0 %v1211
        %1283 = vmatpush1.msra.mxu0 %v1210
        %1284 = vmatprep.subr.mxu0 %v1209
        %1285 = vmatpush1.msra.mxu0 %v1208
        %1286 = vmatprep.subr.mxu0 %v1207
        %1287 = vmatpush1.msra.mxu0 %v1206
        %1288 = vmatprep.subr.mxu0 %v1205
        %1289 = vmatpush1.msra.mxu0 %v1204
        %1290 = vmatprep.subr.mxu0 0.0
        %1291 = vmatpush2.msra.mxu0 0.0
        %1292 = vmatprep.subr.mxu0 0.0
        %1293 = vmatpush2.msra.mxu0 0.0
        %1294 = vmatprep.subr.mxu0 0.0
        %1295 = vmatpush2.msra.mxu0 0.0
        %1296 = vmatprep.subr.mxu0 0.0
        %1297 = vmatpush2.msra.mxu0 0.0
        %1298 = vmatprep.subr.mxu0 0.0
        %1299 = vmatpush2.msra.mxu0 0.0
        %1300 = vmatprep.subr.mxu0 0.0
        %1301 = vmatpush2.msra.mxu0 0.0
        %1302 = vmatprep.subr.mxu0 0.0
        %1303 = vmatpush2.msra.mxu0 0.0
        %1304 = vmatprep.subr.mxu0 0.0
        %1305 = vmatpush2.msra.mxu0 0.0
        %1306 = vmatprep.subr.mxu0 0.0
        %1307 = vmatpush2.msra.mxu0 0.0
        %1308 = vmatprep.subr.mxu0 0.0
        %1309 = vmatpush2.msra.mxu0 0.0
        %1310 = vmatprep.subr.mxu0 0.0
        %1311 = vmatpush2.msra.mxu0 0.0
        %1312 = vmatprep.subr.mxu0 0.0
        %1313 = vmatpush2.msra.mxu0 0.0
        %1314 = vmatprep.subr.mxu0 %v1243
        %1315 = vmatpush2.msra.mxu0 %v1242
        %1316 = vmatprep.subr.mxu0 %v1241
        %1317 = vmatpush2.msra.mxu0 %v1240
        %1318 = vmatprep.subr.mxu0 %v1239
        %1319 = vmatpush2.msra.mxu0 %v1238
        %1320 = vmatprep.subr.mxu0 %v1237
        %1321 = vmatpush2.msra.mxu0 %v1236
        %1322 = vmatprep.mubr.f32.mxu0 %v1256
        %1323 = vmatmul.mubr.f32.gmra.mxu0 %v1251
        %v1324 = vpop.f32.mrf.mxu0
        %v1325 = vadd.f32 0.0, %v1324
        %v1326 = vpop.f32.mrf.mxu0
        %v1327 = vadd.f32 0.0, %v1326
        %1328 = vdwg.mxu0
        %v1329 = vadd.f32 %v1195, %v1325
        %v1330 = vadd.f32 %v1197, %v1327
        %v1331 = vld [vmem:[%s4] sm:$0x3]
        %v1333 = vlaneseq
        %v1334 = vshrl.u32 %v1333, 7
        %v1335 = vsub.s32 0, %v1334
        %v1336 = vrot.slane %v1331, %v1335
        %v1337 = vlaneseq
        %v1338 = vshrl.u32 %v1337, 7
        %v1339 = vsub.s32 1, %v1338
        %v1340 = vrot.slane %v1331, %v1339
        %v1343 = vadd.f32 %v1329, %v1336
        %v1344 = vadd.f32 %v1330, %v1340
        %v1345 = vmax.f32 %v1343, 0.0
        %v1346 = vmax.f32 %v1344, 0.0
        %v1347 = vrot.slane %v1345, 4
        %v1348 = vadd.f32 %v1345, %v1347
        %v1349 = vrot.slane %v1348, 2
        %v1350 = vadd.f32 %v1348, %v1349
        %v1351 = vrot.slane %v1350, 1
        %v1352 = vadd.f32 %v1350, %v1351
        %v1353 = vrot.slane %v1346, 4
        %v1354 = vadd.f32 %v1346, %v1353
        %v1355 = vrot.slane %v1354, 2
        %v1356 = vadd.f32 %v1354, %v1355
        %v1357 = vrot.slane %v1356, 1
        %v1358 = vadd.f32 %v1356, %v1357
        %v1359 = vld [vmem:[%s5] sm:$0xff]
        %v1360 = vld [vmem:[%s5 + $0x8] sm:$0xff]
        %v1361 = vld [vmem:[%s5 + $0x10] sm:$0xff]
        %v1362 = vld [vmem:[%s5 + $0x18] sm:$0xff]
        %v1363 = vld [vmem:[%s5 + $0x20] sm:$0xff]
        %v1364 = vld [vmem:[%s5 + $0x28] sm:$0xff]
        %v1365 = vld [vmem:[%s5 + $0x30] sm:$0xff]
        %v1366 = vld [vmem:[%s5 + $0x38] sm:$0xff]
        %v1367 = vld [vmem:[%s5 + $0x40] sm:$0xff]
        %v1368 = vld [vmem:[%s5 + $0x48] sm:$0xff]
        %v1369 = vld [vmem:[%s5 + $0x50] sm:$0xff]
        %v1370 = vld [vmem:[%s5 + $0x58] sm:$0xff]
        %v1371 = vld [vmem:[%s5 + $0x60] sm:$0xff]
        %v1372 = vld [vmem:[%s5 + $0x68] sm:$0xff]
        %v1373 = vld [vmem:[%s5 + $0x70] sm:$0xff]
        %v1374 = vld [vmem:[%s5 + $0x78] sm:$0xff]
        %v1375 = vld [vmem:[%s5 + $0x80] sm:$0xff]
        %v1376 = vld [vmem:[%s5 + $0x88] sm:$0xff]
        %v1377 = vld [vmem:[%s5 + $0x90] sm:$0xff]
        %v1378 = vld [vmem:[%s5 + $0x98] sm:$0xff]
        %v1379 = vld [vmem:[%s5 + $0xa0] sm:$0xff]
        %v1380 = vld [vmem:[%s5 + $0xa8] sm:$0xff]
        %v1381 = vld [vmem:[%s5 + $0xb0] sm:$0xff]
        %v1382 = vld [vmem:[%s5 + $0xb8] sm:$0xff]
        %v1383 = vld [vmem:[%s5 + $0xc0] sm:$0xff]
        %v1384 = vld [vmem:[%s5 + $0xc8] sm:$0xff]
        %v1385 = vld [vmem:[%s5 + $0xd0] sm:$0xff]
        %v1386 = vld [vmem:[%s5 + $0xd8] sm:$0xff]
        %v1387 = vld [vmem:[%s5 + $0xe0] sm:$0xff]
        %v1388 = vld [vmem:[%s5 + $0xe8] sm:$0xff]
        %v1389 = vld [vmem:[%s5 + $0xf0] sm:$0xff]
        %v1390 = vld [vmem:[%s5 + $0xf8] sm:$0xff]
        %v1391 = vld [vmem:[%s6] sm:$0x1]
        %1392 = vmatprep.subr.mxu0 0.0
        %1393 = vmatpush1.msra.mxu0 %v1374
        %1394 = vmatprep.subr.mxu0 0.0
        %1395 = vmatpush1.msra.mxu0 %v1373
        %1396 = vmatprep.subr.mxu0 0.0
        %1397 = vmatpush1.msra.mxu0 %v1372
        %1398 = vmatprep.subr.mxu0 0.0
        %1399 = vmatpush1.msra.mxu0 %v1371
        %1400 = vmatprep.subr.mxu0 0.0
        %1401 = vmatpush1.msra.mxu0 %v1370
        %1402 = vmatprep.subr.mxu0 0.0
        %1403 = vmatpush1.msra.mxu0 %v1369
        %1404 = vmatprep.subr.mxu0 0.0
        %1405 = vmatpush1.msra.mxu0 %v1368
        %1406 = vmatprep.subr.mxu0 0.0
        %1407 = vmatpush1.msra.mxu0 %v1367
        %1408 = vmatprep.subr.mxu0 0.0
        %1409 = vmatpush1.msra.mxu0 %v1366
        %1410 = vmatprep.subr.mxu0 0.0
        %1411 = vmatpush1.msra.mxu0 %v1365
        %1412 = vmatprep.subr.mxu0 0.0
        %1413 = vmatpush1.msra.mxu0 %v1364
        %1414 = vmatprep.subr.mxu0 0.0
        %1415 = vmatpush1.msra.mxu0 %v1363
        %1416 = vmatprep.subr.mxu0 0.0
        %1417 = vmatpush1.msra.mxu0 %v1362
        %1418 = vmatprep.subr.mxu0 0.0
        %1419 = vmatpush1.msra.mxu0 %v1361
        %1420 = vmatprep.subr.mxu0 0.0
        %1421 = vmatpush1.msra.mxu0 %v1360
        %1422 = vmatprep.subr.mxu0 0.0
        %1423 = vmatpush1.msra.mxu0 %v1359
        %1424 = vmatprep.subr.mxu0 0.0
        %1425 = vmatpush2.msra.mxu0 %v1390
        %1426 = vmatprep.subr.mxu0 0.0
        %1427 = vmatpush2.msra.mxu0 %v1389
        %1428 = vmatprep.subr.mxu0 0.0
        %1429 = vmatpush2.msra.mxu0 %v1388
        %1430 = vmatprep.subr.mxu0 0.0
        %1431 = vmatpush2.msra.mxu0 %v1387
        %1432 = vmatprep.subr.mxu0 0.0
        %1433 = vmatpush2.msra.mxu0 %v1386
        %1434 = vmatprep.subr.mxu0 0.0
        %1435 = vmatpush2.msra.mxu0 %v1385
        %1436 = vmatprep.subr.mxu0 0.0
        %1437 = vmatpush2.msra.mxu0 %v1384
        %1438 = vmatprep.subr.mxu0 0.0
        %1439 = vmatpush2.msra.mxu0 %v1383
        %1440 = vmatprep.subr.mxu0 0.0
        %1441 = vmatpush2.msra.mxu0 %v1382
        %1442 = vmatprep.subr.mxu0 0.0
        %1443 = vmatpush2.msra.mxu0 %v1381
        %1444 = vmatprep.subr.mxu0 0.0
        %1445 = vmatpush2.msra.mxu0 %v1380
        %1446 = vmatprep.subr.mxu0 0.0
        %1447 = vmatpush2.msra.mxu0 %v1379
        %1448 = vmatprep.subr.mxu0 0.0
        %1449 = vmatpush2.msra.mxu0 %v1378
        %1450 = vmatprep.subr.mxu0 0.0
        %1451 = vmatpush2.msra.mxu0 %v1377
        %1452 = vmatprep.subr.mxu0 0.0
        %1453 = vmatpush2.msra.mxu0 %v1376
        %1454 = vmatprep.subr.mxu0 0.0
        %1455 = vmatpush2.msra.mxu0 %v1375
        %1456 = vmatprep.mubr.f32.mxu0 %v1358
        %1457 = vmatmul.mubr.f32.gmra.mxu0 %v1352
        %v1458 = vpop.f32.mrf.mxu0
        %v1459 = vadd.f32 %v1391, %v1458
        %v1460 = vpop.f32.mrf.mxu0
        %1461 = vdwg.mxu0
        %v1462 = vmax.f32 %v1459, -1.0
        %v1463 = vmin.f32 %v1462, 1.0
        %v1464 = vlaneseq
        %v1465 = vshrl.u32 %v1464, 7
        %v1466 = vcvt.s32.f32 %v1465
        %v1467 = vlaneseq
        %v1468 = vand.u32 %v1467, 127
        %v1469 = vcvt.s32.f32 %v1468
        %v1470 = vmul.f32 %v1466, 0.15625
        %v1471 = vsub.f32 %v1470, 0.3125
        %v1472 = vmul.f32 %v1471, 2.0
        %1474 = vrot.lane.b32.xlu0 %v1463, 127
        %v1475 = vpop.permute.xlu0 %1474
        %s1476 = vtos %v1475
        %v1477 = vstv %s1476
        %v1479 = vadd.f32 %v1477, %v1472
        %v1480 = vadd.f32 %v1479, 1.0
        %v1481 = vmul.f32 %v1480, 0.5
        %v1482 = vmul.f32 %v1481, 15.0
        %v1483 = vfloor.f32 %v1482
        %v1484 = vsub.f32 %v1482, %v1483
        %v1485 = vsub.f32 1.0, %v1484
        %vm1486 = vcmp.eq.f32.partialorder %v1469, %v1483
        %v1487 = vsel %vm1486, 1, 0
        %v1488 = vcvt.s32.f32 %v1487
        %v1489 = vmul.f32 %v1485, %v1488
        %v1490 = vadd.f32 %v1483, 1.0
        %vm1491 = vcmp.eq.f32.partialorder %v1469, %v1490
        %v1492 = vsel %vm1491, 1, 0
        %v1493 = vcvt.s32.f32 %v1492
        %v1494 = vmul.f32 %v1484, %v1493
        %v1495 = vadd.f32 %v1489, %v1494
        %vm1496 = vcmask 126976
        %1497 = vst.msk [vmem:[#allocation5] sm:$0x1f] %vm1496, %v1495
        %v1498 = vadd.s32 %v1465, 8
        %v1499 = vcvt.s32.f32 %v1498
        %v1500 = vmul.f32 %v1469, 0.15625
        %v1501 = vsub.f32 %v1500, 0.3125
        %v1502 = vmul.f32 %v1501, 2.0
        %s1503 = vtos %v1463
        %v1504 = vstv %s1503
        %v1506 = vadd.f32 %v1504, %v1502
        %v1507 = vadd.f32 %v1506, 1.0
        %v1508 = vmul.f32 %v1507, 0.5
        %v1509 = vmul.f32 %v1508, 15.0
        %v1510 = vfloor.f32 %v1509
        %v1511 = vsub.f32 %v1509, %v1510
        %v1512 = vsub.f32 1.0, %v1511
        %vm1513 = vcmp.eq.f32.partialorder %v1466, %v1510
        %vm1514 = vcmp.eq.f32.partialorder %v1499, %v1510
        %v1515 = vsel %vm1513, 1, 0
        %v1516 = vsel %vm1514, 1, 0
        %v1517 = vcvt.s32.f32 %v1515
        %v1518 = vcvt.s32.f32 %v1516
        %v1519 = vmul.f32 %v1512, %v1517
        %v1520 = vmul.f32 %v1512, %v1518
        %v1521 = vadd.f32 %v1510, 1.0
        %vm1522 = vcmp.eq.f32.partialorder %v1466, %v1521
        %vm1523 = vcmp.eq.f32.partialorder %v1499, %v1521
        %v1524 = vsel %vm1522, 1, 0
        %v1525 = vsel %vm1523, 1, 0
        %v1526 = vcvt.s32.f32 %v1524
        %v1527 = vcvt.s32.f32 %v1525
        %v1528 = vmul.f32 %v1511, %v1526
        %v1529 = vmul.f32 %v1511, %v1527
        %v1530 = vadd.f32 %v1519, %v1528
        %v1531 = vadd.f32 %v1520, %v1529
        %1532 = vrot.lane.b32.xlu0 %v1463, 125
        %v1533 = vpop.permute.xlu0 %1532
        %s1534 = vtos %v1533
        %v1535 = vstv %s1534
        %v1537 = vadd.f32 %v1535, %v1472
        %v1538 = vadd.f32 %v1537, 1.0
        %v1539 = vmul.f32 %v1538, 0.5
        %v1540 = vmul.f32 %v1539, 15.0
        %v1541 = vfloor.f32 %v1540
        %v1542 = vsub.f32 %v1540, %v1541
        %v1543 = vsub.f32 1.0, %v1542
        %vm1544 = vcmp.eq.f32.partialorder %v1469, %v1541
        %v1545 = vsel %vm1544, 1, 0
        %v1546 = vcvt.s32.f32 %v1545
        %v1547 = vmul.f32 %v1543, %v1546
        %v1548 = vadd.f32 %v1541, 1.0
        %vm1549 = vcmp.eq.f32.partialorder %v1469, %v1548
        %v1550 = vsel %vm1549, 1, 0
        %v1551 = vcvt.s32.f32 %v1550
        %v1552 = vmul.f32 %v1542, %v1551
        %v1553 = vadd.f32 %v1547, %v1552
        %1554 = vst.msk [vmem:[#allocation5 + $0x5] sm:$0x1f] %vm1496, %v1553
        %1555 = vrot.lane.b32.xlu0 %v1463, 126
        %v1556 = vpop.permute.xlu0 %1555
        %s1557 = vtos %v1556
        %v1558 = vstv %s1557
        %v1560 = vadd.f32 %v1558, %v1502
        %v1561 = vadd.f32 %v1560, 1.0
        %v1562 = vmul.f32 %v1561, 0.5
        %v1563 = vmul.f32 %v1562, 15.0
        %v1564 = vfloor.f32 %v1563
        %v1565 = vsub.f32 %v1563, %v1564
        %v1566 = vsub.f32 1.0, %v1565
        %vm1567 = vcmp.eq.f32.partialorder %v1466, %v1564
        %vm1568 = vcmp.eq.f32.partialorder %v1499, %v1564
        %v1569 = vsel %vm1567, 1, 0
        %v1570 = vsel %vm1568, 1, 0
        %v1571 = vcvt.s32.f32 %v1569
        %v1572 = vcvt.s32.f32 %v1570
        %v1573 = vmul.f32 %v1566, %v1571
        %v1574 = vmul.f32 %v1566, %v1572
        %v1575 = vadd.f32 %v1564, 1.0
        %vm1576 = vcmp.eq.f32.partialorder %v1466, %v1575
        %vm1577 = vcmp.eq.f32.partialorder %v1499, %v1575
        %v1578 = vsel %vm1576, 1, 0
        %v1579 = vsel %vm1577, 1, 0
        %v1580 = vcvt.s32.f32 %v1578
        %v1581 = vcvt.s32.f32 %v1579
        %v1582 = vmul.f32 %v1565, %v1580
        %v1583 = vmul.f32 %v1565, %v1581
        %v1584 = vadd.f32 %v1573, %v1582
        %v1585 = vadd.f32 %v1574, %v1583
        %1586 = vrot.lane.b32.xlu0 %v1463, 123
        %v1587 = vpop.permute.xlu0 %1586
        %s1588 = vtos %v1587
        %v1589 = vstv %s1588
        %v1591 = vadd.f32 %v1589, %v1472
        %v1592 = vadd.f32 %v1591, 1.0
        %v1593 = vmul.f32 %v1592, 0.5
        %v1594 = vmul.f32 %v1593, 15.0
        %v1595 = vfloor.f32 %v1594
        %v1596 = vsub.f32 %v1594, %v1595
        %v1597 = vsub.f32 1.0, %v1596
        %vm1598 = vcmp.eq.f32.partialorder %v1469, %v1595
        %v1599 = vsel %vm1598, 1, 0
        %v1600 = vcvt.s32.f32 %v1599
        %v1601 = vmul.f32 %v1597, %v1600
        %v1602 = vadd.f32 %v1595, 1.0
        %vm1603 = vcmp.eq.f32.partialorder %v1469, %v1602
        %v1604 = vsel %vm1603, 1, 0
        %v1605 = vcvt.s32.f32 %v1604
        %v1606 = vmul.f32 %v1596, %v1605
        %v1607 = vadd.f32 %v1601, %v1606
        %1608 = vst.msk [vmem:[#allocation5 + $0xa] sm:$0x1f] %vm1496, %v1607
        %1609 = vrot.lane.b32.xlu0 %v1463, 124
        %v1610 = vpop.permute.xlu0 %1609
        %s1611 = vtos %v1610
        %v1612 = vstv %s1611
        %v1614 = vadd.f32 %v1612, %v1502
        %v1615 = vadd.f32 %v1614, 1.0
        %v1616 = vmul.f32 %v1615, 0.5
        %v1617 = vmul.f32 %v1616, 15.0
        %v1618 = vfloor.f32 %v1617
        %v1619 = vsub.f32 %v1617, %v1618
        %v1620 = vsub.f32 1.0, %v1619
        %vm1621 = vcmp.eq.f32.partialorder %v1466, %v1618
        %vm1622 = vcmp.eq.f32.partialorder %v1499, %v1618
        %v1623 = vsel %vm1621, 1, 0
        %v1624 = vsel %vm1622, 1, 0
        %v1625 = vcvt.s32.f32 %v1623
        %v1626 = vcvt.s32.f32 %v1624
        %v1627 = vmul.f32 %v1620, %v1625
        %v1628 = vmul.f32 %v1620, %v1626
        %v1629 = vadd.f32 %v1618, 1.0
        %vm1630 = vcmp.eq.f32.partialorder %v1466, %v1629
        %vm1631 = vcmp.eq.f32.partialorder %v1499, %v1629
        %v1632 = vsel %vm1630, 1, 0
        %v1633 = vsel %vm1631, 1, 0
        %v1634 = vcvt.s32.f32 %v1632
        %v1635 = vcvt.s32.f32 %v1633
        %v1636 = vmul.f32 %v1619, %v1634
        %v1637 = vmul.f32 %v1619, %v1635
        %v1638 = vadd.f32 %v1627, %v1636
        %v1639 = vadd.f32 %v1628, %v1637
        %v1640 = vld [vmem:[#allocation5] sm:$0xff]
        %v1641 = vld [vmem:[#allocation5 + $0x8] sm:$0x7f]
        %v1642 = vld [vmem:[#allocation2 + $0x1] sm:$0xff]
        %v1643 = vld [vmem:[#allocation2 + $0x9] sm:$0xff]
        %vm1644 = vcmask 130048
        %v1646 = vsel %vm1644, %v1640, 0
        %v1649 = vsel %vm1644, %v1641, 0
        %1651 = vmatprep.subr.mxu0 0.0
        %1652 = vmatpush1.msra.mxu0 0.0
        %1653 = vmatprep.subr.mxu0 0.0
        %1654 = vmatpush1.msra.mxu0 0.0
        %1655 = vmatprep.subr.mxu0 0.0
        %1656 = vmatpush1.msra.mxu0 0.0
        %1657 = vmatprep.subr.mxu0 0.0
        %1658 = vmatpush1.msra.mxu0 0.0
        %1659 = vmatprep.subr.mxu0 0.0
        %1660 = vmatpush1.msra.mxu0 0.0
        %1661 = vmatprep.subr.mxu0 0.0
        %1662 = vmatpush1.msra.mxu0 0.0
        %1663 = vmatprep.subr.mxu0 0.0
        %1664 = vmatpush1.msra.mxu0 0.0
        %1665 = vmatprep.subr.mxu0 0.0
        %1666 = vmatpush1.msra.mxu0 0.0
        %1667 = vmatprep.subr.mxu0 0.0
        %1668 = vmatpush1.msra.mxu0 0.0
        %1669 = vmatprep.subr.mxu0 0.0
        %1670 = vmatpush1.msra.mxu0 0.0
        %1671 = vmatprep.subr.mxu0 0.0
        %1672 = vmatpush1.msra.mxu0 0.0
        %1673 = vmatprep.subr.mxu0 0.0
        %1674 = vmatpush1.msra.mxu0 0.0
        %1675 = vmatprep.subr.mxu0 0.0
        %1676 = vmatpush1.msra.mxu0 0.0
        %1677 = vmatprep.subr.mxu0 0.0
        %1678 = vmatpush1.msra.mxu0 0.0
        %1679 = vmatprep.subr.mxu0 0.0
        %1680 = vmatpush1.msra.mxu0 %v1643
        %1681 = vmatprep.subr.mxu0 0.0
        %1682 = vmatpush1.msra.mxu0 %v1642
        %1683 = vmatprep.subr.mxu0 0.0
        %1684 = vmatpush2.msra.mxu0 0.0
        %1685 = vmatprep.subr.mxu0 0.0
        %1686 = vmatpush2.msra.mxu0 0.0
        %1687 = vmatprep.subr.mxu0 0.0
        %1688 = vmatpush2.msra.mxu0 0.0
        %1689 = vmatprep.subr.mxu0 0.0
        %1690 = vmatpush2.msra.mxu0 0.0
        %1691 = vmatprep.subr.mxu0 0.0
        %1692 = vmatpush2.msra.mxu0 0.0
        %1693 = vmatprep.subr.mxu0 0.0
        %1694 = vmatpush2.msra.mxu0 0.0
        %1695 = vmatprep.subr.mxu0 0.0
        %1696 = vmatpush2.msra.mxu0 0.0
        %1697 = vmatprep.subr.mxu0 0.0
        %1698 = vmatpush2.msra.mxu0 0.0
        %1699 = vmatprep.subr.mxu0 0.0
        %1700 = vmatpush2.msra.mxu0 0.0
        %1701 = vmatprep.subr.mxu0 0.0
        %1702 = vmatpush2.msra.mxu0 0.0
        %1703 = vmatprep.subr.mxu0 0.0
        %1704 = vmatpush2.msra.mxu0 0.0
        %1705 = vmatprep.subr.mxu0 0.0
        %1706 = vmatpush2.msra.mxu0 0.0
        %1707 = vmatprep.subr.mxu0 0.0
        %1708 = vmatpush2.msra.mxu0 0.0
        %1709 = vmatprep.subr.mxu0 0.0
        %1710 = vmatpush2.msra.mxu0 0.0
        %1711 = vmatprep.subr.mxu0 0.0
        %1712 = vmatpush2.msra.mxu0 0.0
        %1713 = vmatprep.subr.mxu0 0.0
        %1714 = vmatpush2.msra.mxu0 0.0
        %1715 = vmatprep.mubr.f32.mxu0 0.0
        %1716 = vmatmul.mubr.f32.gmra.mxu0 %v1646
        %v1717 = vpop.f32.mrf.mxu0
        %v1718 = vadd.f32 0.0, %v1717
        %v1719 = vpop.f32.mrf.mxu0
        %1720 = vmatprep.mubr.f32.mxu0 0.0
        %1721 = vmatmul.mubr.f32.gmra.mxu0 %v1649
        %v1722 = vpop.f32.mrf.mxu0
        %v1723 = vadd.f32 0.0, %v1722
        %v1724 = vpop.f32.mrf.mxu0
        %1725 = vdwg.mxu0
        %vm1726 = vcmask 686080
        %1727 = vst.msk [vmem:[#allocation4] sm:$0x7f] %vm1726, 0.0
        %1729 = vrot.lane.b32.xlu0 %v1718, 127
        %v1730 = vpop.permute.xlu0 %1729
        %v1731 = vsel %vm1644, %v1730, 0
        %1733 = vmatprep.subr.mxu0 0.0
        %1734 = vmatpush1.msra.mxu0 0.0
        %1735 = vmatprep.subr.mxu0 0.0
        %1736 = vmatpush1.msra.mxu0 0.0
        %1737 = vmatprep.subr.mxu0 0.0
        %1738 = vmatpush1.msra.mxu0 0.0
        %1739 = vmatprep.subr.mxu0 0.0
        %1740 = vmatpush1.msra.mxu0 0.0
        %1741 = vmatprep.subr.mxu0 0.0
        %1742 = vmatpush1.msra.mxu0 0.0
        %1743 = vmatprep.subr.mxu0 0.0
        %1744 = vmatpush1.msra.mxu0 0.0
        %1745 = vmatprep.subr.mxu0 0.0
        %1746 = vmatpush1.msra.mxu0 0.0
        %1747 = vmatprep.subr.mxu0 0.0
        %1748 = vmatpush1.msra.mxu0 0.0
        %1749 = vmatprep.subr.mxu0 0.0
        %1750 = vmatpush1.msra.mxu0 0.0
        %1751 = vmatprep.subr.mxu0 0.0
        %1752 = vmatpush1.msra.mxu0 0.0
        %1753 = vmatprep.subr.mxu0 0.0
        %1754 = vmatpush1.msra.mxu0 0.0
        %1755 = vmatprep.subr.mxu0 0.0
        %1756 = vmatpush1.msra.mxu0 0.0
        %1757 = vmatprep.subr.mxu0 0.0
        %1758 = vmatpush1.msra.mxu0 0.0
        %1759 = vmatprep.subr.mxu0 0.0
        %1760 = vmatpush1.msra.mxu0 0.0
        %1761 = vmatprep.subr.mxu0 0.0
        %1762 = vmatpush1.msra.mxu0 %v1531
        %1763 = vmatprep.subr.mxu0 0.0
        %1764 = vmatpush1.msra.mxu0 %v1530
        %1765 = vmatprep.subr.mxu0 0.0
        %1766 = vmatpush2.msra.mxu0 0.0
        %1767 = vmatprep.subr.mxu0 0.0
        %1768 = vmatpush2.msra.mxu0 0.0
        %1769 = vmatprep.subr.mxu0 0.0
        %1770 = vmatpush2.msra.mxu0 0.0
        %1771 = vmatprep.subr.mxu0 0.0
        %1772 = vmatpush2.msra.mxu0 0.0
        %1773 = vmatprep.subr.mxu0 0.0
        %1774 = vmatpush2.msra.mxu0 0.0
        %1775 = vmatprep.subr.mxu0 0.0
        %1776 = vmatpush2.msra.mxu0 0.0
        %1777 = vmatprep.subr.mxu0 0.0
        %1778 = vmatpush2.msra.mxu0 0.0
        %1779 = vmatprep.subr.mxu0 0.0
        %1780 = vmatpush2.msra.mxu0 0.0
        %1781 = vmatprep.subr.mxu0 0.0
        %1782 = vmatpush2.msra.mxu0 0.0
        %1783 = vmatprep.subr.mxu0 0.0
        %1784 = vmatpush2.msra.mxu0 0.0
        %1785 = vmatprep.subr.mxu0 0.0
        %1786 = vmatpush2.msra.mxu0 0.0
        %1787 = vmatprep.subr.mxu0 0.0
        %1788 = vmatpush2.msra.mxu0 0.0
        %1789 = vmatprep.subr.mxu0 0.0
        %1790 = vmatpush2.msra.mxu0 0.0
        %1791 = vmatprep.subr.mxu0 0.0
        %1792 = vmatpush2.msra.mxu0 0.0
        %1793 = vmatprep.subr.mxu0 0.0
        %1794 = vmatpush2.msra.mxu0 0.0
        %1795 = vmatprep.subr.mxu0 0.0
        %1796 = vmatpush2.msra.mxu0 0.0
        %1797 = vmatprep.mubr.f32.mxu0 0.0
        %1798 = vmatmul.mubr.f32.gmra.mxu0 %v1731
        %v1799 = vpop.f32.mrf.mxu0
        %v1800 = vadd.f32 0.0, %v1799
        %v1801 = vpop.f32.mrf.mxu0
        %1802 = vdwg.mxu0
        %1804 = vrot.lane.b32.xlu0 %v1800, 1
        %v1805 = vpop.permute.xlu0 %1804
        %vm1807 = vcmask 45064
        %1808 = vst.msk [vmem:[#allocation4 + $0x1] sm:$0x1f] %vm1807, %v1805
        %1809 = vrot.lane.b32.xlu0 %v1718, 109
        %v1810 = vpop.permute.xlu0 %1809
        %v1811 = vsel %vm1644, %v1810, 0
        %1813 = vmatprep.subr.mxu0 0.0
        %1814 = vmatpush1.msra.mxu0 0.0
        %1815 = vmatprep.subr.mxu0 0.0
        %1816 = vmatpush1.msra.mxu0 0.0
        %1817 = vmatprep.subr.mxu0 0.0
        %1818 = vmatpush1.msra.mxu0 0.0
        %1819 = vmatprep.subr.mxu0 0.0
        %1820 = vmatpush1.msra.mxu0 0.0
        %1821 = vmatprep.subr.mxu0 0.0
        %1822 = vmatpush1.msra.mxu0 0.0
        %1823 = vmatprep.subr.mxu0 0.0
        %1824 = vmatpush1.msra.mxu0 0.0
        %1825 = vmatprep.subr.mxu0 0.0
        %1826 = vmatpush1.msra.mxu0 0.0
        %1827 = vmatprep.subr.mxu0 0.0
        %1828 = vmatpush1.msra.mxu0 0.0
        %1829 = vmatprep.subr.mxu0 0.0
        %1830 = vmatpush1.msra.mxu0 0.0
        %1831 = vmatprep.subr.mxu0 0.0
        %1832 = vmatpush1.msra.mxu0 0.0
        %1833 = vmatprep.subr.mxu0 0.0
        %1834 = vmatpush1.msra.mxu0 0.0
        %1835 = vmatprep.subr.mxu0 0.0
        %1836 = vmatpush1.msra.mxu0 0.0
        %1837 = vmatprep.subr.mxu0 0.0
        %1838 = vmatpush1.msra.mxu0 0.0
        %1839 = vmatprep.subr.mxu0 0.0
        %1840 = vmatpush1.msra.mxu0 0.0
        %1841 = vmatprep.subr.mxu0 0.0
        %1842 = vmatpush1.msra.mxu0 %v1531
        %1843 = vmatprep.subr.mxu0 0.0
        %1844 = vmatpush1.msra.mxu0 %v1530
        %1845 = vmatprep.subr.mxu0 0.0
        %1846 = vmatpush2.msra.mxu0 0.0
        %1847 = vmatprep.subr.mxu0 0.0
        %1848 = vmatpush2.msra.mxu0 0.0
        %1849 = vmatprep.subr.mxu0 0.0
        %1850 = vmatpush2.msra.mxu0 0.0
        %1851 = vmatprep.subr.mxu0 0.0
        %1852 = vmatpush2.msra.mxu0 0.0
        %1853 = vmatprep.subr.mxu0 0.0
        %1854 = vmatpush2.msra.mxu0 0.0
        %1855 = vmatprep.subr.mxu0 0.0
        %1856 = vmatpush2.msra.mxu0 0.0
        %1857 = vmatprep.subr.mxu0 0.0
        %1858 = vmatpush2.msra.mxu0 0.0
        %1859 = vmatprep.subr.mxu0 0.0
        %1860 = vmatpush2.msra.mxu0 0.0
        %1861 = vmatprep.subr.mxu0 0.0
        %1862 = vmatpush2.msra.mxu0 0.0
        %1863 = vmatprep.subr.mxu0 0.0
        %1864 = vmatpush2.msra.mxu0 0.0
        %1865 = vmatprep.subr.mxu0 0.0
        %1866 = vmatpush2.msra.mxu0 0.0
        %1867 = vmatprep.subr.mxu0 0.0
        %1868 = vmatpush2.msra.mxu0 0.0
        %1869 = vmatprep.subr.mxu0 0.0
        %1870 = vmatpush2.msra.mxu0 0.0
        %1871 = vmatprep.subr.mxu0 0.0
        %1872 = vmatpush2.msra.mxu0 0.0
        %1873 = vmatprep.subr.mxu0 0.0
        %1874 = vmatpush2.msra.mxu0 0.0
        %1875 = vmatprep.subr.mxu0 0.0
        %1876 = vmatpush2.msra.mxu0 0.0
        %1877 = vmatprep.mubr.f32.mxu0 0.0
        %1878 = vmatmul.mubr.f32.gmra.mxu0 %v1811
        %v1879 = vpop.f32.mrf.mxu0
        %v1880 = vadd.f32 0.0, %v1879
        %v1881 = vpop.f32.mrf.mxu0
        %1882 = vdwg.mxu0
        %1884 = vrot.lane.b32.xlu0 %v1880, 8
        %v1885 = vpop.permute.xlu0 %1884
        %vm1887 = vcmask 102464
        %1888 = vst.msk [vmem:[#allocation4 + $0x1] sm:$0x1f] %vm1887, %v1885
        %1889 = vrot.lane.b32.xlu0 %v1718, 91
        %v1890 = vpop.permute.xlu0 %1889
        %v1891 = vsel %vm1644, %v1890, 0
        %1893 = vmatprep.subr.mxu0 0.0
        %1894 = vmatpush1.msra.mxu0 0.0
        %1895 = vmatprep.subr.mxu0 0.0
        %1896 = vmatpush1.msra.mxu0 0.0
        %1897 = vmatprep.subr.mxu0 0.0
        %1898 = vmatpush1.msra.mxu0 0.0
        %1899 = vmatprep.subr.mxu0 0.0
        %1900 = vmatpush1.msra.mxu0 0.0
        %1901 = vmatprep.subr.mxu0 0.0
        %1902 = vmatpush1.msra.mxu0 0.0
        %1903 = vmatprep.subr.mxu0 0.0
        %1904 = vmatpush1.msra.mxu0 0.0
        %1905 = vmatprep.subr.mxu0 0.0
        %1906 = vmatpush1.msra.mxu0 0.0
        %1907 = vmatprep.subr.mxu0 0.0
        %1908 = vmatpush1.msra.mxu0 0.0
        %1909 = vmatprep.subr.mxu0 0.0
        %1910 = vmatpush1.msra.mxu0 0.0
        %1911 = vmatprep.subr.mxu0 0.0
        %1912 = vmatpush1.msra.mxu0 0.0
        %1913 = vmatprep.subr.mxu0 0.0
        %1914 = vmatpush1.msra.mxu0 0.0
        %1915 = vmatprep.subr.mxu0 0.0
        %1916 = vmatpush1.msra.mxu0 0.0
        %1917 = vmatprep.subr.mxu0 0.0
        %1918 = vmatpush1.msra.mxu0 0.0
        %1919 = vmatprep.subr.mxu0 0.0
        %1920 = vmatpush1.msra.mxu0 0.0
        %1921 = vmatprep.subr.mxu0 0.0
        %1922 = vmatpush1.msra.mxu0 %v1531
        %1923 = vmatprep.subr.mxu0 0.0
        %1924 = vmatpush1.msra.mxu0 %v1530
        %1925 = vmatprep.subr.mxu0 0.0
        %1926 = vmatpush2.msra.mxu0 0.0
        %1927 = vmatprep.subr.mxu0 0.0
        %1928 = vmatpush2.msra.mxu0 0.0
        %1929 = vmatprep.subr.mxu0 0.0
        %1930 = vmatpush2.msra.mxu0 0.0
        %1931 = vmatprep.subr.mxu0 0.0
        %1932 = vmatpush2.msra.mxu0 0.0
        %1933 = vmatprep.subr.mxu0 0.0
        %1934 = vmatpush2.msra.mxu0 0.0
        %1935 = vmatprep.subr.mxu0 0.0
        %1936 = vmatpush2.msra.mxu0 0.0
        %1937 = vmatprep.subr.mxu0 0.0
        %1938 = vmatpush2.msra.mxu0 0.0
        %1939 = vmatprep.subr.mxu0 0.0
        %1940 = vmatpush2.msra.mxu0 0.0
        %1941 = vmatprep.subr.mxu0 0.0
        %1942 = vmatpush2.msra.mxu0 0.0
        %1943 = vmatprep.subr.mxu0 0.0
        %1944 = vmatpush2.msra.mxu0 0.0
        %1945 = vmatprep.subr.mxu0 0.0
        %1946 = vmatpush2.msra.mxu0 0.0
        %1947 = vmatprep.subr.mxu0 0.0
        %1948 = vmatpush2.msra.mxu0 0.0
        %1949 = vmatprep.subr.mxu0 0.0
        %1950 = vmatpush2.msra.mxu0 0.0
        %1951 = vmatprep.subr.mxu0 0.0
        %1952 = vmatpush2.msra.mxu0 0.0
        %1953 = vmatprep.subr.mxu0 0.0
        %1954 = vmatpush2.msra.mxu0 0.0
        %1955 = vmatprep.subr.mxu0 0.0
        %1956 = vmatpush2.msra.mxu0 0.0
        %1957 = vmatprep.mubr.f32.mxu0 0.0
        %1958 = vmatmul.mubr.f32.gmra.mxu0 %v1891
        %v1959 = vpop.f32.mrf.mxu0
        %v1960 = vadd.f32 0.0, %v1959
        %v1961 = vpop.f32.mrf.mxu0
        %1962 = vdwg.mxu0
        %1964 = vrot.lane.b32.xlu0 %v1960, 15
        %v1965 = vpop.permute.xlu0 %1964
        %vm1967 = vcmask 159864
        %1968 = vst.msk [vmem:[#allocation4 + $0x1] sm:$0x1f] %vm1967, %v1965
        %1969 = vrot.lane.b32.xlu0 %v1718, 73
        %v1970 = vpop.permute.xlu0 %1969
        %v1971 = vsel %vm1644, %v1970, 0
        %1973 = vmatprep.subr.mxu0 0.0
        %1974 = vmatpush1.msra.mxu0 0.0
        %1975 = vmatprep.subr.mxu0 0.0
        %1976 = vmatpush1.msra.mxu0 0.0
        %1977 = vmatprep.subr.mxu0 0.0
        %1978 = vmatpush1.msra.mxu0 0.0
        %1979 = vmatprep.subr.mxu0 0.0
        %1980 = vmatpush1.msra.mxu0 0.0
        %1981 = vmatprep.subr.mxu0 0.0
        %1982 = vmatpush1.msra.mxu0 0.0
        %1983 = vmatprep.subr.mxu0 0.0
        %1984 = vmatpush1.msra.mxu0 0.0
        %1985 = vmatprep.subr.mxu0 0.0
        %1986 = vmatpush1.msra.mxu0 0.0
        %1987 = vmatprep.subr.mxu0 0.0
        %1988 = vmatpush1.msra.mxu0 0.0
        %1989 = vmatprep.subr.mxu0 0.0
        %1990 = vmatpush1.msra.mxu0 0.0
        %1991 = vmatprep.subr.mxu0 0.0
        %1992 = vmatpush1.msra.mxu0 0.0
        %1993 = vmatprep.subr.mxu0 0.0
        %1994 = vmatpush1.msra.mxu0 0.0
        %1995 = vmatprep.subr.mxu0 0.0
        %1996 = vmatpush1.msra.mxu0 0.0
        %1997 = vmatprep.subr.mxu0 0.0
        %1998 = vmatpush1.msra.mxu0 0.0
        %1999 = vmatprep.subr.mxu0 0.0
        %2000 = vmatpush1.msra.mxu0 0.0
        %2001 = vmatprep.subr.mxu0 0.0
        %2002 = vmatpush1.msra.mxu0 %v1531
        %2003 = vmatprep.subr.mxu0 0.0
        %2004 = vmatpush1.msra.mxu0 %v1530
        %2005 = vmatprep.subr.mxu0 0.0
        %2006 = vmatpush2.msra.mxu0 0.0
        %2007 = vmatprep.subr.mxu0 0.0
        %2008 = vmatpush2.msra.mxu0 0.0
        %2009 = vmatprep.subr.mxu0 0.0
        %2010 = vmatpush2.msra.mxu0 0.0
        %2011 = vmatprep.subr.mxu0 0.0
        %2012 = vmatpush2.msra.mxu0 0.0
        %2013 = vmatprep.subr.mxu0 0.0
        %2014 = vmatpush2.msra.mxu0 0.0
        %2015 = vmatprep.subr.mxu0 0.0
        %2016 = vmatpush2.msra.mxu0 0.0
        %2017 = vmatprep.subr.mxu0 0.0
        %2018 = vmatpush2.msra.mxu0 0.0
        %2019 = vmatprep.subr.mxu0 0.0
        %2020 = vmatpush2.msra.mxu0 0.0
        %2021 = vmatprep.subr.mxu0 0.0
        %2022 = vmatpush2.msra.mxu0 0.0
        %2023 = vmatprep.subr.mxu0 0.0
        %2024 = vmatpush2.msra.mxu0 0.0
        %2025 = vmatprep.subr.mxu0 0.0
        %2026 = vmatpush2.msra.mxu0 0.0
        %2027 = vmatprep.subr.mxu0 0.0
        %2028 = vmatpush2.msra.mxu0 0.0
        %2029 = vmatprep.subr.mxu0 0.0
        %2030 = vmatpush2.msra.mxu0 0.0
        %2031 = vmatprep.subr.mxu0 0.0
        %2032 = vmatpush2.msra.mxu0 0.0
        %2033 = vmatprep.subr.mxu0 0.0
        %2034 = vmatpush2.msra.mxu0 0.0
        %2035 = vmatprep.subr.mxu0 0.0
        %2036 = vmatpush2.msra.mxu0 0.0
        %2037 = vmatprep.mubr.f32.mxu0 0.0
        %2038 = vmatmul.mubr.f32.gmra.mxu0 %v1971
        %v2039 = vpop.f32.mrf.mxu0
        %v2040 = vadd.f32 0.0, %v2039
        %v2041 = vpop.f32.mrf.mxu0
        %2042 = vdwg.mxu0
        %2044 = vrot.lane.b32.xlu0 %v2040, 22
        %v2045 = vpop.permute.xlu0 %2044
        %vm2047 = vcmask 217264
        %2048 = vst.msk [vmem:[#allocation4 + $0x1] sm:$0x1f] %vm2047, %v2045
        %vm2050 = vcmask 1042432
        %v2051 = vrot.slane %v1718, 5
        %v2052 = vrot.slane %v1723, 5
        %v2053 = vsel %vm2050, %v2051, %v2052
        %2054 = vrot.lane.b32.xlu0 %v2053, 127
        %v2055 = vpop.permute.xlu0 %2054
        %v2056 = vsel %vm1644, %v2055, 0
        %2058 = vmatprep.subr.mxu0 0.0
        %2059 = vmatpush1.msra.mxu0 0.0
        %2060 = vmatprep.subr.mxu0 0.0
        %2061 = vmatpush1.msra.mxu0 0.0
        %2062 = vmatprep.subr.mxu0 0.0
        %2063 = vmatpush1.msra.mxu0 0.0
        %2064 = vmatprep.subr.mxu0 0.0
        %2065 = vmatpush1.msra.mxu0 0.0
        %2066 = vmatprep.subr.mxu0 0.0
        %2067 = vmatpush1.msra.mxu0 0.0
        %2068 = vmatprep.subr.mxu0 0.0
        %2069 = vmatpush1.msra.mxu0 0.0
        %2070 = vmatprep.subr.mxu0 0.0
        %2071 = vmatpush1.msra.mxu0 0.0
        %2072 = vmatprep.subr.mxu0 0.0
        %2073 = vmatpush1.msra.mxu0 0.0
        %2074 = vmatprep.subr.mxu0 0.0
        %2075 = vmatpush1.msra.mxu0 0.0
        %2076 = vmatprep.subr.mxu0 0.0
        %2077 = vmatpush1.msra.mxu0 0.0
        %2078 = vmatprep.subr.mxu0 0.0
        %2079 = vmatpush1.msra.mxu0 0.0
        %2080 = vmatprep.subr.mxu0 0.0
        %2081 = vmatpush1.msra.mxu0 0.0
        %2082 = vmatprep.subr.mxu0 0.0
        %2083 = vmatpush1.msra.mxu0 0.0
        %2084 = vmatprep.subr.mxu0 0.0
        %2085 = vmatpush1.msra.mxu0 0.0
        %2086 = vmatprep.subr.mxu0 0.0
        %2087 = vmatpush1.msra.mxu0 %v1585
        %2088 = vmatprep.subr.mxu0 0.0
        %2089 = vmatpush1.msra.mxu0 %v1584
        %2090 = vmatprep.subr.mxu0 0.0
        %2091 = vmatpush2.msra.mxu0 0.0
        %2092 = vmatprep.subr.mxu0 0.0
        %2093 = vmatpush2.msra.mxu0 0.0
        %2094 = vmatprep.subr.mxu0 0.0
        %2095 = vmatpush2.msra.mxu0 0.0
        %2096 = vmatprep.subr.mxu0 0.0
        %2097 = vmatpush2.msra.mxu0 0.0
        %2098 = vmatprep.subr.mxu0 0.0
        %2099 = vmatpush2.msra.mxu0 0.0
        %2100 = vmatprep.subr.mxu0 0.0
        %2101 = vmatpush2.msra.mxu0 0.0
        %2102 = vmatprep.subr.mxu0 0.0
        %2103 = vmatpush2.msra.mxu0 0.0
        %2104 = vmatprep.subr.mxu0 0.0
        %2105 = vmatpush2.msra.mxu0 0.0
        %2106 = vmatprep.subr.mxu0 0.0
        %2107 = vmatpush2.msra.mxu0 0.0
        %2108 = vmatprep.subr.mxu0 0.0
        %2109 = vmatpush2.msra.mxu0 0.0
        %2110 = vmatprep.subr.mxu0 0.0
        %2111 = vmatpush2.msra.mxu0 0.0
        %2112 = vmatprep.subr.mxu0 0.0
        %2113 = vmatpush2.msra.mxu0 0.0
        %2114 = vmatprep.subr.mxu0 0.0
        %2115 = vmatpush2.msra.mxu0 0.0
        %2116 = vmatprep.subr.mxu0 0.0
        %2117 = vmatpush2.msra.mxu0 0.0
        %2118 = vmatprep.subr.mxu0 0.0
        %2119 = vmatpush2.msra.mxu0 0.0
        %2120 = vmatprep.subr.mxu0 0.0
        %2121 = vmatpush2.msra.mxu0 0.0
        %2122 = vmatprep.mubr.f32.mxu0 0.0
        %2123 = vmatmul.mubr.f32.gmra.mxu0 %v2056
        %v2124 = vpop.f32.mrf.mxu0
        %v2125 = vadd.f32 0.0, %v2124
        %v2126 = vpop.f32.mrf.mxu0
        %2127 = vdwg.mxu0
        %2129 = vrot.lane.b32.xlu0 %v2125, 29
        %v2130 = vpop.permute.xlu0 %2129
        %vm2132 = vcmask 274664
        %2133 = vst.msk [vmem:[#allocation4 + $0x1] sm:$0x1f] %vm2132, %v2130
        %2134 = vrot.lane.b32.xlu0 %v2053, 109
        %v2135 = vpop.permute.xlu0 %2134
        %v2136 = vsel %vm1644, %v2135, 0
        %2138 = vmatprep.subr.mxu0 0.0
        %2139 = vmatpush1.msra.mxu0 0.0
        %2140 = vmatprep.subr.mxu0 0.0
        %2141 = vmatpush1.msra.mxu0 0.0
        %2142 = vmatprep.subr.mxu0 0.0
        %2143 = vmatpush1.msra.mxu0 0.0
        %2144 = vmatprep.subr.mxu0 0.0
        %2145 = vmatpush1.msra.mxu0 0.0
        %2146 = vmatprep.subr.mxu0 0.0
        %2147 = vmatpush1.msra.mxu0 0.0
        %2148 = vmatprep.subr.mxu0 0.0
        %2149 = vmatpush1.msra.mxu0 0.0
        %2150 = vmatprep.subr.mxu0 0.0
        %2151 = vmatpush1.msra.mxu0 0.0
        %2152 = vmatprep.subr.mxu0 0.0
        %2153 = vmatpush1.msra.mxu0 0.0
        %2154 = vmatprep.subr.mxu0 0.0
        %2155 = vmatpush1.msra.mxu0 0.0
        %2156 = vmatprep.subr.mxu0 0.0
        %2157 = vmatpush1.msra.mxu0 0.0
        %2158 = vmatprep.subr.mxu0 0.0
        %2159 = vmatpush1.msra.mxu0 0.0
        %2160 = vmatprep.subr.mxu0 0.0
        %2161 = vmatpush1.msra.mxu0 0.0
        %2162 = vmatprep.subr.mxu0 0.0
        %2163 = vmatpush1.msra.mxu0 0.0
        %2164 = vmatprep.subr.mxu0 0.0
        %2165 = vmatpush1.msra.mxu0 0.0
        %2166 = vmatprep.subr.mxu0 0.0
        %2167 = vmatpush1.msra.mxu0 %v1585
        %2168 = vmatprep.subr.mxu0 0.0
        %2169 = vmatpush1.msra.mxu0 %v1584
        %2170 = vmatprep.subr.mxu0 0.0
        %2171 = vmatpush2.msra.mxu0 0.0
        %2172 = vmatprep.subr.mxu0 0.0
        %2173 = vmatpush2.msra.mxu0 0.0
        %2174 = vmatprep.subr.mxu0 0.0
        %2175 = vmatpush2.msra.mxu0 0.0
        %2176 = vmatprep.subr.mxu0 0.0
        %2177 = vmatpush2.msra.mxu0 0.0
        %2178 = vmatprep.subr.mxu0 0.0
        %2179 = vmatpush2.msra.mxu0 0.0
        %2180 = vmatprep.subr.mxu0 0.0
        %2181 = vmatpush2.msra.mxu0 0.0
        %2182 = vmatprep.subr.mxu0 0.0
        %2183 = vmatpush2.msra.mxu0 0.0
        %2184 = vmatprep.subr.mxu0 0.0
        %2185 = vmatpush2.msra.mxu0 0.0
        %2186 = vmatprep.subr.mxu0 0.0
        %2187 = vmatpush2.msra.mxu0 0.0
        %2188 = vmatprep.subr.mxu0 0.0
        %2189 = vmatpush2.msra.mxu0 0.0
        %2190 = vmatprep.subr.mxu0 0.0
        %2191 = vmatpush2.msra.mxu0 0.0
        %2192 = vmatprep.subr.mxu0 0.0
        %2193 = vmatpush2.msra.mxu0 0.0
        %2194 = vmatprep.subr.mxu0 0.0
        %2195 = vmatpush2.msra.mxu0 0.0
        %2196 = vmatprep.subr.mxu0 0.0
        %2197 = vmatpush2.msra.mxu0 0.0
        %2198 = vmatprep.subr.mxu0 0.0
        %2199 = vmatpush2.msra.mxu0 0.0
        %2200 = vmatprep.subr.mxu0 0.0
        %2201 = vmatpush2.msra.mxu0 0.0
        %2202 = vmatprep.mubr.f32.mxu0 0.0
        %2203 = vmatmul.mubr.f32.gmra.mxu0 %v2136
        %v2204 = vpop.f32.mrf.mxu0
        %v2205 = vadd.f32 0.0, %v2204
        %v2206 = vpop.f32.mrf.mxu0
        %2207 = vdwg.mxu0
        %2209 = vrot.lane.b32.xlu0 %v2205, 36
        %v2210 = vpop.permute.xlu0 %2209
        %vm2212 = vcmask 332064
        %2213 = vst.msk [vmem:[#allocation4 + $0x1] sm:$0x1f] %vm2212, %v2210
        %2214 = vrot.lane.b32.xlu0 %v2053, 91
        %v2215 = vpop.permute.xlu0 %2214
        %v2216 = vsel %vm1644, %v2215, 0
        %2218 = vmatprep.subr.mxu0 0.0
        %2219 = vmatpush1.msra.mxu0 0.0
        %2220 = vmatprep.subr.mxu0 0.0
        %2221 = vmatpush1.msra.mxu0 0.0
        %2222 = vmatprep.subr.mxu0 0.0
        %2223 = vmatpush1.msra.mxu0 0.0
        %2224 = vmatprep.subr.mxu0 0.0
        %2225 = vmatpush1.msra.mxu0 0.0
        %2226 = vmatprep.subr.mxu0 0.0
        %2227 = vmatpush1.msra.mxu0 0.0
        %2228 = vmatprep.subr.mxu0 0.0
        %2229 = vmatpush1.msra.mxu0 0.0
        %2230 = vmatprep.subr.mxu0 0.0
        %2231 = vmatpush1.msra.mxu0 0.0
        %2232 = vmatprep.subr.mxu0 0.0
        %2233 = vmatpush1.msra.mxu0 0.0
        %2234 = vmatprep.subr.mxu0 0.0
        %2235 = vmatpush1.msra.mxu0 0.0
        %2236 = vmatprep.subr.mxu0 0.0
        %2237 = vmatpush1.msra.mxu0 0.0
        %2238 = vmatprep.subr.mxu0 0.0
        %2239 = vmatpush1.msra.mxu0 0.0
        %2240 = vmatprep.subr.mxu0 0.0
        %2241 = vmatpush1.msra.mxu0 0.0
        %2242 = vmatprep.subr.mxu0 0.0
        %2243 = vmatpush1.msra.mxu0 0.0
        %2244 = vmatprep.subr.mxu0 0.0
        %2245 = vmatpush1.msra.mxu0 0.0
        %2246 = vmatprep.subr.mxu0 0.0
        %2247 = vmatpush1.msra.mxu0 %v1585
        %2248 = vmatprep.subr.mxu0 0.0
        %2249 = vmatpush1.msra.mxu0 %v1584
        %2250 = vmatprep.subr.mxu0 0.0
        %2251 = vmatpush2.msra.mxu0 0.0
        %2252 = vmatprep.subr.mxu0 0.0
        %2253 = vmatpush2.msra.mxu0 0.0
        %2254 = vmatprep.subr.mxu0 0.0
        %2255 = vmatpush2.msra.mxu0 0.0
        %2256 = vmatprep.subr.mxu0 0.0
        %2257 = vmatpush2.msra.mxu0 0.0
        %2258 = vmatprep.subr.mxu0 0.0
        %2259 = vmatpush2.msra.mxu0 0.0
        %2260 = vmatprep.subr.mxu0 0.0
        %2261 = vmatpush2.msra.mxu0 0.0
        %2262 = vmatprep.subr.mxu0 0.0
        %2263 = vmatpush2.msra.mxu0 0.0
        %2264 = vmatprep.subr.mxu0 0.0
        %2265 = vmatpush2.msra.mxu0 0.0
        %2266 = vmatprep.subr.mxu0 0.0
        %2267 = vmatpush2.msra.mxu0 0.0
        %2268 = vmatprep.subr.mxu0 0.0
        %2269 = vmatpush2.msra.mxu0 0.0
        %2270 = vmatprep.subr.mxu0 0.0
        %2271 = vmatpush2.msra.mxu0 0.0
        %2272 = vmatprep.subr.mxu0 0.0
        %2273 = vmatpush2.msra.mxu0 0.0
        %2274 = vmatprep.subr.mxu0 0.0
        %2275 = vmatpush2.msra.mxu0 0.0
        %2276 = vmatprep.subr.mxu0 0.0
        %2277 = vmatpush2.msra.mxu0 0.0
        %2278 = vmatprep.subr.mxu0 0.0
        %2279 = vmatpush2.msra.mxu0 0.0
        %2280 = vmatprep.subr.mxu0 0.0
        %2281 = vmatpush2.msra.mxu0 0.0
        %2282 = vmatprep.mubr.f32.mxu0 0.0
        %2283 = vmatmul.mubr.f32.gmra.mxu0 %v2216
        %v2284 = vpop.f32.mrf.mxu0
        %v2285 = vadd.f32 0.0, %v2284
        %v2286 = vpop.f32.mrf.mxu0
        %2287 = vdwg.mxu0
        %2289 = vrot.lane.b32.xlu0 %v2285, 43
        %v2290 = vpop.permute.xlu0 %2289
        %vm2292 = vcmask 389464
        %2293 = vst.msk [vmem:[#allocation4 + $0x1] sm:$0x1f] %vm2292, %v2290
        %2294 = vrot.lane.b32.xlu0 %v2053, 73
        %v2295 = vpop.permute.xlu0 %2294
        %v2296 = vsel %vm1644, %v2295, 0
        %2298 = vmatprep.subr.mxu0 0.0
        %2299 = vmatpush1.msra.mxu0 0.0
        %2300 = vmatprep.subr.mxu0 0.0
        %2301 = vmatpush1.msra.mxu0 0.0
        %2302 = vmatprep.subr.mxu0 0.0
        %2303 = vmatpush1.msra.mxu0 0.0
        %2304 = vmatprep.subr.mxu0 0.0
        %2305 = vmatpush1.msra.mxu0 0.0
        %2306 = vmatprep.subr.mxu0 0.0
        %2307 = vmatpush1.msra.mxu0 0.0
        %2308 = vmatprep.subr.mxu0 0.0
        %2309 = vmatpush1.msra.mxu0 0.0
        %2310 = vmatprep.subr.mxu0 0.0
        %2311 = vmatpush1.msra.mxu0 0.0
        %2312 = vmatprep.subr.mxu0 0.0
        %2313 = vmatpush1.msra.mxu0 0.0
        %2314 = vmatprep.subr.mxu0 0.0
        %2315 = vmatpush1.msra.mxu0 0.0
        %2316 = vmatprep.subr.mxu0 0.0
        %2317 = vmatpush1.msra.mxu0 0.0
        %2318 = vmatprep.subr.mxu0 0.0
        %2319 = vmatpush1.msra.mxu0 0.0
        %2320 = vmatprep.subr.mxu0 0.0
        %2321 = vmatpush1.msra.mxu0 0.0
        %2322 = vmatprep.subr.mxu0 0.0
        %2323 = vmatpush1.msra.mxu0 0.0
        %2324 = vmatprep.subr.mxu0 0.0
        %2325 = vmatpush1.msra.mxu0 0.0
        %2326 = vmatprep.subr.mxu0 0.0
        %2327 = vmatpush1.msra.mxu0 %v1585
        %2328 = vmatprep.subr.mxu0 0.0
        %2329 = vmatpush1.msra.mxu0 %v1584
        %2330 = vmatprep.subr.mxu0 0.0
        %2331 = vmatpush2.msra.mxu0 0.0
        %2332 = vmatprep.subr.mxu0 0.0
        %2333 = vmatpush2.msra.mxu0 0.0
        %2334 = vmatprep.subr.mxu0 0.0
        %2335 = vmatpush2.msra.mxu0 0.0
        %2336 = vmatprep.subr.mxu0 0.0
        %2337 = vmatpush2.msra.mxu0 0.0
        %2338 = vmatprep.subr.mxu0 0.0
        %2339 = vmatpush2.msra.mxu0 0.0
        %2340 = vmatprep.subr.mxu0 0.0
        %2341 = vmatpush2.msra.mxu0 0.0
        %2342 = vmatprep.subr.mxu0 0.0
        %2343 = vmatpush2.msra.mxu0 0.0
        %2344 = vmatprep.subr.mxu0 0.0
        %2345 = vmatpush2.msra.mxu0 0.0
        %2346 = vmatprep.subr.mxu0 0.0
        %2347 = vmatpush2.msra.mxu0 0.0
        %2348 = vmatprep.subr.mxu0 0.0
        %2349 = vmatpush2.msra.mxu0 0.0
        %2350 = vmatprep.subr.mxu0 0.0
        %2351 = vmatpush2.msra.mxu0 0.0
        %2352 = vmatprep.subr.mxu0 0.0
        %2353 = vmatpush2.msra.mxu0 0.0
        %2354 = vmatprep.subr.mxu0 0.0
        %2355 = vmatpush2.msra.mxu0 0.0
        %2356 = vmatprep.subr.mxu0 0.0
        %2357 = vmatpush2.msra.mxu0 0.0
        %2358 = vmatprep.subr.mxu0 0.0
        %2359 = vmatpush2.msra.mxu0 0.0
        %2360 = vmatprep.subr.mxu0 0.0
        %2361 = vmatpush2.msra.mxu0 0.0
        %2362 = vmatprep.mubr.f32.mxu0 0.0
        %2363 = vmatmul.mubr.f32.gmra.mxu0 %v2296
        %v2364 = vpop.f32.mrf.mxu0
        %v2365 = vadd.f32 0.0, %v2364
        %v2366 = vpop.f32.mrf.mxu0
        %2367 = vdwg.mxu0
        %2369 = vrot.lane.b32.xlu0 %v2365, 50
        %v2370 = vpop.permute.xlu0 %2369
        %vm2372 = vcmask 446864
        %2373 = vst.msk [vmem:[#allocation4 + $0x1] sm:$0x1f] %vm2372, %v2370
        %v2374 = vrot.slane %v1723, 2
        %2375 = vrot.lane.b32.xlu0 %v2374, 127
        %v2376 = vpop.permute.xlu0 %2375
        %v2377 = vsel %vm1644, %v2376, 0
        %2379 = vmatprep.subr.mxu0 0.0
        %2380 = vmatpush1.msra.mxu0 0.0
        %2381 = vmatprep.subr.mxu0 0.0
        %2382 = vmatpush1.msra.mxu0 0.0
        %2383 = vmatprep.subr.mxu0 0.0
        %2384 = vmatpush1.msra.mxu0 0.0
        %2385 = vmatprep.subr.mxu0 0.0
        %2386 = vmatpush1.msra.mxu0 0.0
        %2387 = vmatprep.subr.mxu0 0.0
        %2388 = vmatpush1.msra.mxu0 0.0
        %2389 = vmatprep.subr.mxu0 0.0
        %2390 = vmatpush1.msra.mxu0 0.0
        %2391 = vmatprep.subr.mxu0 0.0
        %2392 = vmatpush1.msra.mxu0 0.0
        %2393 = vmatprep.subr.mxu0 0.0
        %2394 = vmatpush1.msra.mxu0 0.0
        %2395 = vmatprep.subr.mxu0 0.0
        %2396 = vmatpush1.msra.mxu0 0.0
        %2397 = vmatprep.subr.mxu0 0.0
        %2398 = vmatpush1.msra.mxu0 0.0
        %2399 = vmatprep.subr.mxu0 0.0
        %2400 = vmatpush1.msra.mxu0 0.0
        %2401 = vmatprep.subr.mxu0 0.0
        %2402 = vmatpush1.msra.mxu0 0.0
        %2403 = vmatprep.subr.mxu0 0.0
        %2404 = vmatpush1.msra.mxu0 0.0
        %2405 = vmatprep.subr.mxu0 0.0
        %2406 = vmatpush1.msra.mxu0 0.0
        %2407 = vmatprep.subr.mxu0 0.0
        %2408 = vmatpush1.msra.mxu0 %v1639
        %2409 = vmatprep.subr.mxu0 0.0
        %2410 = vmatpush1.msra.mxu0 %v1638
        %2411 = vmatprep.subr.mxu0 0.0
        %2412 = vmatpush2.msra.mxu0 0.0
        %2413 = vmatprep.subr.mxu0 0.0
        %2414 = vmatpush2.msra.mxu0 0.0
        %2415 = vmatprep.subr.mxu0 0.0
        %2416 = vmatpush2.msra.mxu0 0.0
        %2417 = vmatprep.subr.mxu0 0.0
        %2418 = vmatpush2.msra.mxu0 0.0
        %2419 = vmatprep.subr.mxu0 0.0
        %2420 = vmatpush2.msra.mxu0 0.0
        %2421 = vmatprep.subr.mxu0 0.0
        %2422 = vmatpush2.msra.mxu0 0.0
        %2423 = vmatprep.subr.mxu0 0.0
        %2424 = vmatpush2.msra.mxu0 0.0
        %2425 = vmatprep.subr.mxu0 0.0
        %2426 = vmatpush2.msra.mxu0 0.0
        %2427 = vmatprep.subr.mxu0 0.0
        %2428 = vmatpush2.msra.mxu0 0.0
        %2429 = vmatprep.subr.mxu0 0.0
        %2430 = vmatpush2.msra.mxu0 0.0
        %2431 = vmatprep.subr.mxu0 0.0
        %2432 = vmatpush2.msra.mxu0 0.0
        %2433 = vmatprep.subr.mxu0 0.0
        %2434 = vmatpush2.msra.mxu0 0.0
        %2435 = vmatprep.subr.mxu0 0.0
        %2436 = vmatpush2.msra.mxu0 0.0
        %2437 = vmatprep.subr.mxu0 0.0
        %2438 = vmatpush2.msra.mxu0 0.0
        %2439 = vmatprep.subr.mxu0 0.0
        %2440 = vmatpush2.msra.mxu0 0.0
        %2441 = vmatprep.subr.mxu0 0.0
        %2442 = vmatpush2.msra.mxu0 0.0
        %2443 = vmatprep.mubr.f32.mxu0 0.0
        %2444 = vmatmul.mubr.f32.gmra.mxu0 %v2377
        %v2445 = vpop.f32.mrf.mxu0
        %v2446 = vadd.f32 0.0, %v2445
        %v2447 = vpop.f32.mrf.mxu0
        %2448 = vdwg.mxu0
        %2450 = vrot.lane.b32.xlu0 %v2446, 57
        %v2451 = vpop.permute.xlu0 %2450
        %vm2453 = vcmask 504264
        %2454 = vst.msk [vmem:[#allocation4 + $0x1] sm:$0x1f] %vm2453, %v2451
        %2455 = vrot.lane.b32.xlu0 %v2374, 109
        %v2456 = vpop.permute.xlu0 %2455
        %v2457 = vsel %vm1644, %v2456, 0
        %2459 = vmatprep.subr.mxu0 0.0
        %2460 = vmatpush1.msra.mxu0 0.0
        %2461 = vmatprep.subr.mxu0 0.0
        %2462 = vmatpush1.msra.mxu0 0.0
        %2463 = vmatprep.subr.mxu0 0.0
        %2464 = vmatpush1.msra.mxu0 0.0
        %2465 = vmatprep.subr.mxu0 0.0
        %2466 = vmatpush1.msra.mxu0 0.0
        %2467 = vmatprep.subr.mxu0 0.0
        %2468 = vmatpush1.msra.mxu0 0.0
        %2469 = vmatprep.subr.mxu0 0.0
        %2470 = vmatpush1.msra.mxu0 0.0
        %2471 = vmatprep.subr.mxu0 0.0
        %2472 = vmatpush1.msra.mxu0 0.0
        %2473 = vmatprep.subr.mxu0 0.0
        %2474 = vmatpush1.msra.mxu0 0.0
        %2475 = vmatprep.subr.mxu0 0.0
        %2476 = vmatpush1.msra.mxu0 0.0
        %2477 = vmatprep.subr.mxu0 0.0
        %2478 = vmatpush1.msra.mxu0 0.0
        %2479 = vmatprep.subr.mxu0 0.0
        %2480 = vmatpush1.msra.mxu0 0.0
        %2481 = vmatprep.subr.mxu0 0.0
        %2482 = vmatpush1.msra.mxu0 0.0
        %2483 = vmatprep.subr.mxu0 0.0
        %2484 = vmatpush1.msra.mxu0 0.0
        %2485 = vmatprep.subr.mxu0 0.0
        %2486 = vmatpush1.msra.mxu0 0.0
        %2487 = vmatprep.subr.mxu0 0.0
        %2488 = vmatpush1.msra.mxu0 %v1639
        %2489 = vmatprep.subr.mxu0 0.0
        %2490 = vmatpush1.msra.mxu0 %v1638
        %2491 = vmatprep.subr.mxu0 0.0
        %2492 = vmatpush2.msra.mxu0 0.0
        %2493 = vmatprep.subr.mxu0 0.0
        %2494 = vmatpush2.msra.mxu0 0.0
        %2495 = vmatprep.subr.mxu0 0.0
        %2496 = vmatpush2.msra.mxu0 0.0
        %2497 = vmatprep.subr.mxu0 0.0
        %2498 = vmatpush2.msra.mxu0 0.0
        %2499 = vmatprep.subr.mxu0 0.0
        %2500 = vmatpush2.msra.mxu0 0.0
        %2501 = vmatprep.subr.mxu0 0.0
        %2502 = vmatpush2.msra.mxu0 0.0
        %2503 = vmatprep.subr.mxu0 0.0
        %2504 = vmatpush2.msra.mxu0 0.0
        %2505 = vmatprep.subr.mxu0 0.0
        %2506 = vmatpush2.msra.mxu0 0.0
        %2507 = vmatprep.subr.mxu0 0.0
        %2508 = vmatpush2.msra.mxu0 0.0
        %2509 = vmatprep.subr.mxu0 0.0
        %2510 = vmatpush2.msra.mxu0 0.0
        %2511 = vmatprep.subr.mxu0 0.0
        %2512 = vmatpush2.msra.mxu0 0.0
        %2513 = vmatprep.subr.mxu0 0.0
        %2514 = vmatpush2.msra.mxu0 0.0
        %2515 = vmatprep.subr.mxu0 0.0
        %2516 = vmatpush2.msra.mxu0 0.0
        %2517 = vmatprep.subr.mxu0 0.0
        %2518 = vmatpush2.msra.mxu0 0.0
        %2519 = vmatprep.subr.mxu0 0.0
        %2520 = vmatpush2.msra.mxu0 0.0
        %2521 = vmatprep.subr.mxu0 0.0
        %2522 = vmatpush2.msra.mxu0 0.0
        %2523 = vmatprep.mubr.f32.mxu0 0.0
        %2524 = vmatmul.mubr.f32.gmra.mxu0 %v2457
        %v2525 = vpop.f32.mrf.mxu0
        %v2526 = vadd.f32 0.0, %v2525
        %v2527 = vpop.f32.mrf.mxu0
        %2528 = vdwg.mxu0
        %2530 = vrot.lane.b32.xlu0 %v2526, 64
        %v2531 = vpop.permute.xlu0 %2530
        %vm2533 = vcmask 561664
        %2534 = vst.msk [vmem:[#allocation4 + $0x1] sm:$0x1f] %vm2533, %v2531
        %2535 = vrot.lane.b32.xlu0 %v2374, 91
        %v2536 = vpop.permute.xlu0 %2535
        %v2537 = vsel %vm1644, %v2536, 0
        %2539 = vmatprep.subr.mxu0 0.0
        %2540 = vmatpush1.msra.mxu0 0.0
        %2541 = vmatprep.subr.mxu0 0.0
        %2542 = vmatpush1.msra.mxu0 0.0
        %2543 = vmatprep.subr.mxu0 0.0
        %2544 = vmatpush1.msra.mxu0 0.0
        %2545 = vmatprep.subr.mxu0 0.0
        %2546 = vmatpush1.msra.mxu0 0.0
        %2547 = vmatprep.subr.mxu0 0.0
        %2548 = vmatpush1.msra.mxu0 0.0
        %2549 = vmatprep.subr.mxu0 0.0
        %2550 = vmatpush1.msra.mxu0 0.0
        %2551 = vmatprep.subr.mxu0 0.0
        %2552 = vmatpush1.msra.mxu0 0.0
        %2553 = vmatprep.subr.mxu0 0.0
        %2554 = vmatpush1.msra.mxu0 0.0
        %2555 = vmatprep.subr.mxu0 0.0
        %2556 = vmatpush1.msra.mxu0 0.0
        %2557 = vmatprep.subr.mxu0 0.0
        %2558 = vmatpush1.msra.mxu0 0.0
        %2559 = vmatprep.subr.mxu0 0.0
        %2560 = vmatpush1.msra.mxu0 0.0
        %2561 = vmatprep.subr.mxu0 0.0
        %2562 = vmatpush1.msra.mxu0 0.0
        %2563 = vmatprep.subr.mxu0 0.0
        %2564 = vmatpush1.msra.mxu0 0.0
        %2565 = vmatprep.subr.mxu0 0.0
        %2566 = vmatpush1.msra.mxu0 0.0
        %2567 = vmatprep.subr.mxu0 0.0
        %2568 = vmatpush1.msra.mxu0 %v1639
        %2569 = vmatprep.subr.mxu0 0.0
        %2570 = vmatpush1.msra.mxu0 %v1638
        %2571 = vmatprep.subr.mxu0 0.0
        %2572 = vmatpush2.msra.mxu0 0.0
        %2573 = vmatprep.subr.mxu0 0.0
        %2574 = vmatpush2.msra.mxu0 0.0
        %2575 = vmatprep.subr.mxu0 0.0
        %2576 = vmatpush2.msra.mxu0 0.0
        %2577 = vmatprep.subr.mxu0 0.0
        %2578 = vmatpush2.msra.mxu0 0.0
        %2579 = vmatprep.subr.mxu0 0.0
        %2580 = vmatpush2.msra.mxu0 0.0
        %2581 = vmatprep.subr.mxu0 0.0
        %2582 = vmatpush2.msra.mxu0 0.0
        %2583 = vmatprep.subr.mxu0 0.0
        %2584 = vmatpush2.msra.mxu0 0.0
        %2585 = vmatprep.subr.mxu0 0.0
        %2586 = vmatpush2.msra.mxu0 0.0
        %2587 = vmatprep.subr.mxu0 0.0
        %2588 = vmatpush2.msra.mxu0 0.0
        %2589 = vmatprep.subr.mxu0 0.0
        %2590 = vmatpush2.msra.mxu0 0.0
        %2591 = vmatprep.subr.mxu0 0.0
        %2592 = vmatpush2.msra.mxu0 0.0
        %2593 = vmatprep.subr.mxu0 0.0
        %2594 = vmatpush2.msra.mxu0 0.0
        %2595 = vmatprep.subr.mxu0 0.0
        %2596 = vmatpush2.msra.mxu0 0.0
        %2597 = vmatprep.subr.mxu0 0.0
        %2598 = vmatpush2.msra.mxu0 0.0
        %2599 = vmatprep.subr.mxu0 0.0
        %2600 = vmatpush2.msra.mxu0 0.0
        %2601 = vmatprep.subr.mxu0 0.0
        %2602 = vmatpush2.msra.mxu0 0.0
        %2603 = vmatprep.mubr.f32.mxu0 0.0
        %2604 = vmatmul.mubr.f32.gmra.mxu0 %v2537
        %v2605 = vpop.f32.mrf.mxu0
        %v2606 = vadd.f32 0.0, %v2605
        %v2607 = vpop.f32.mrf.mxu0
        %2608 = vdwg.mxu0
        %2610 = vrot.lane.b32.xlu0 %v2606, 71
        %v2611 = vpop.permute.xlu0 %2610
        %vm2613 = vcmask 619064
        %2614 = vst.msk [vmem:[#allocation4 + $0x1] sm:$0x1f] %vm2613, %v2611
        %2615 = vrot.lane.b32.xlu0 %v2374, 73
        %v2616 = vpop.permute.xlu0 %2615
        %v2617 = vsel %vm1644, %v2616, 0
        %2619 = vmatprep.subr.mxu0 0.0
        %2620 = vmatpush1.msra.mxu0 0.0
        %2621 = vmatprep.subr.mxu0 0.0
        %2622 = vmatpush1.msra.mxu0 0.0
        %2623 = vmatprep.subr.mxu0 0.0
        %2624 = vmatpush1.msra.mxu0 0.0
        %2625 = vmatprep.subr.mxu0 0.0
        %2626 = vmatpush1.msra.mxu0 0.0
        %2627 = vmatprep.subr.mxu0 0.0
        %2628 = vmatpush1.msra.mxu0 0.0
        %2629 = vmatprep.subr.mxu0 0.0
        %2630 = vmatpush1.msra.mxu0 0.0
        %2631 = vmatprep.subr.mxu0 0.0
        %2632 = vmatpush1.msra.mxu0 0.0
        %2633 = vmatprep.subr.mxu0 0.0
        %2634 = vmatpush1.msra.mxu0 0.0
        %2635 = vmatprep.subr.mxu0 0.0
        %2636 = vmatpush1.msra.mxu0 0.0
        %2637 = vmatprep.subr.mxu0 0.0
        %2638 = vmatpush1.msra.mxu0 0.0
        %2639 = vmatprep.subr.mxu0 0.0
        %2640 = vmatpush1.msra.mxu0 0.0
        %2641 = vmatprep.subr.mxu0 0.0
        %2642 = vmatpush1.msra.mxu0 0.0
        %2643 = vmatprep.subr.mxu0 0.0
        %2644 = vmatpush1.msra.mxu0 0.0
        %2645 = vmatprep.subr.mxu0 0.0
        %2646 = vmatpush1.msra.mxu0 0.0
        %2647 = vmatprep.subr.mxu0 0.0
        %2648 = vmatpush1.msra.mxu0 %v1639
        %2649 = vmatprep.subr.mxu0 0.0
        %2650 = vmatpush1.msra.mxu0 %v1638
        %2651 = vmatprep.subr.mxu0 0.0
        %2652 = vmatpush2.msra.mxu0 0.0
        %2653 = vmatprep.subr.mxu0 0.0
        %2654 = vmatpush2.msra.mxu0 0.0
        %2655 = vmatprep.subr.mxu0 0.0
        %2656 = vmatpush2.msra.mxu0 0.0
        %2657 = vmatprep.subr.mxu0 0.0
        %2658 = vmatpush2.msra.mxu0 0.0
        %2659 = vmatprep.subr.mxu0 0.0
        %2660 = vmatpush2.msra.mxu0 0.0
        %2661 = vmatprep.subr.mxu0 0.0
        %2662 = vmatpush2.msra.mxu0 0.0
        %2663 = vmatprep.subr.mxu0 0.0
        %2664 = vmatpush2.msra.mxu0 0.0
        %2665 = vmatprep.subr.mxu0 0.0
        %2666 = vmatpush2.msra.mxu0 0.0
        %2667 = vmatprep.subr.mxu0 0.0
        %2668 = vmatpush2.msra.mxu0 0.0
        %2669 = vmatprep.subr.mxu0 0.0
        %2670 = vmatpush2.msra.mxu0 0.0
        %2671 = vmatprep.subr.mxu0 0.0
        %2672 = vmatpush2.msra.mxu0 0.0
        %2673 = vmatprep.subr.mxu0 0.0
        %2674 = vmatpush2.msra.mxu0 0.0
        %2675 = vmatprep.subr.mxu0 0.0
        %2676 = vmatpush2.msra.mxu0 0.0
        %2677 = vmatprep.subr.mxu0 0.0
        %2678 = vmatpush2.msra.mxu0 0.0
        %2679 = vmatprep.subr.mxu0 0.0
        %2680 = vmatpush2.msra.mxu0 0.0
        %2681 = vmatprep.subr.mxu0 0.0
        %2682 = vmatpush2.msra.mxu0 0.0
        %2683 = vmatprep.mubr.f32.mxu0 0.0
        %2684 = vmatmul.mubr.f32.gmra.mxu0 %v2617
        %v2685 = vpop.f32.mrf.mxu0
        %v2686 = vadd.f32 0.0, %v2685
        %v2687 = vpop.f32.mrf.mxu0
        %2688 = vdwg.mxu0
        %2690 = vrot.lane.b32.xlu0 %v2686, 78
        %v2691 = vpop.permute.xlu0 %2690
        %vm2693 = vcmask 676464
        %2694 = vst.msk [vmem:[#allocation4 + $0x1] sm:$0x1f] %vm2693, %v2691
        %v2695 = vld [vmem:[#allocation4] sm:$0x1f]
        %v2696 = vld [vmem:[%s7] sm:$0xff]
        %v2697 = vld [vmem:[%s7 + $0x8] sm:$0xff]
        %v2698 = vld [vmem:[%s7 + $0x10] sm:$0xff]
        %v2699 = vld [vmem:[%s7 + $0x18] sm:$0xff]
        %v2700 = vld [vmem:[%s7 + $0x20] sm:$0xff]
        %v2701 = vld [vmem:[%s7 + $0x28] sm:$0xff]
        %v2702 = vld [vmem:[%s7 + $0x30] sm:$0xff]
        %v2703 = vld [vmem:[%s7 + $0x38] sm:$0xff]
        %v2704 = vld [vmem:[%s7 + $0x40] sm:$0xff]
        %v2705 = vld [vmem:[%s7 + $0x48] sm:$0xff]
        %v2706 = vld [vmem:[%s7 + $0x50] sm:$0xf]
        %v2707 = vld [vmem:[#allocation4 + $0x1] sm:$0x1f]
        %s2708 = scalar_lea.vmem %s7, 88
        %v2709 = vld [vmem:[%s2708] sm:$0xff]
        %v2710 = vld [vmem:[%s2708 + $0x8] sm:$0xff]
        %v2711 = vld [vmem:[%s2708 + $0x10] sm:$0xff]
        %v2712 = vld [vmem:[%s2708 + $0x18] sm:$0xff]
        %v2713 = vld [vmem:[%s2708 + $0x20] sm:$0xff]
        %v2714 = vld [vmem:[%s2708 + $0x28] sm:$0xff]
        %v2715 = vld [vmem:[%s2708 + $0x30] sm:$0xff]
        %v2716 = vld [vmem:[%s2708 + $0x38] sm:$0xff]
        %v2717 = vld [vmem:[%s2708 + $0x40] sm:$0xff]
        %v2718 = vld [vmem:[%s2708 + $0x48] sm:$0xff]
        %v2719 = vld [vmem:[%s2708 + $0x50] sm:$0xf]
        %vm2720 = vcmask 687104
        %v2722 = vsel %vm2720, %v2707, 0
        %vm2724 = vcmask 1043456
        %v2726 = vsel %vm2724, %v2719, 0
        %2728 = vmatprep.subr.mxu0 0.0
        %2729 = vmatpush1.msra.mxu0 0.0
        %2730 = vmatprep.subr.mxu0 0.0
        %2731 = vmatpush1.msra.mxu0 0.0
        %2732 = vmatprep.subr.mxu0 0.0
        %2733 = vmatpush1.msra.mxu0 0.0
        %2734 = vmatprep.subr.mxu0 0.0
        %2735 = vmatpush1.msra.mxu0 0.0
        %2736 = vmatprep.subr.mxu0 0.0
        %2737 = vmatpush1.msra.mxu0 0.0
        %2738 = vmatprep.subr.mxu0 0.0
        %2739 = vmatpush1.msra.mxu0 %v2726
        %2740 = vmatprep.subr.mxu0 0.0
        %2741 = vmatpush1.msra.mxu0 %v2718
        %2742 = vmatprep.subr.mxu0 0.0
        %2743 = vmatpush1.msra.mxu0 %v2717
        %2744 = vmatprep.subr.mxu0 0.0
        %2745 = vmatpush1.msra.mxu0 %v2716
        %2746 = vmatprep.subr.mxu0 0.0
        %2747 = vmatpush1.msra.mxu0 %v2715
        %2748 = vmatprep.subr.mxu0 0.0
        %2749 = vmatpush1.msra.mxu0 %v2714
        %2750 = vmatprep.subr.mxu0 0.0
        %2751 = vmatpush1.msra.mxu0 %v2713
        %2752 = vmatprep.subr.mxu0 0.0
        %2753 = vmatpush1.msra.mxu0 %v2712
        %2754 = vmatprep.subr.mxu0 0.0
        %2755 = vmatpush1.msra.mxu0 %v2711
        %2756 = vmatprep.subr.mxu0 0.0
        %2757 = vmatpush1.msra.mxu0 %v2710
        %2758 = vmatprep.subr.mxu0 0.0
        %2759 = vmatpush1.msra.mxu0 %v2709
        %2760 = vmatprep.subr.mxu0 0.0
        %2761 = vmatpush2.msra.mxu0 0.0
        %2762 = vmatprep.subr.mxu0 0.0
        %2763 = vmatpush2.msra.mxu0 0.0
        %2764 = vmatprep.subr.mxu0 0.0
        %2765 = vmatpush2.msra.mxu0 0.0
        %2766 = vmatprep.subr.mxu0 0.0
        %2767 = vmatpush2.msra.mxu0 0.0
        %2768 = vmatprep.subr.mxu0 0.0
        %2769 = vmatpush2.msra.mxu0 0.0
        %2770 = vmatprep.subr.mxu0 0.0
        %2771 = vmatpush2.msra.mxu0 0.0
        %2772 = vmatprep.subr.mxu0 0.0
        %2773 = vmatpush2.msra.mxu0 0.0
        %2774 = vmatprep.subr.mxu0 0.0
        %2775 = vmatpush2.msra.mxu0 0.0
        %2776 = vmatprep.subr.mxu0 0.0
        %2777 = vmatpush2.msra.mxu0 0.0
        %2778 = vmatprep.subr.mxu0 0.0
        %2779 = vmatpush2.msra.mxu0 0.0
        %2780 = vmatprep.subr.mxu0 0.0
        %2781 = vmatpush2.msra.mxu0 0.0
        %2782 = vmatprep.subr.mxu0 0.0
        %2783 = vmatpush2.msra.mxu0 0.0
        %2784 = vmatprep.subr.mxu0 0.0
        %2785 = vmatpush2.msra.mxu0 0.0
        %2786 = vmatprep.subr.mxu0 0.0
        %2787 = vmatpush2.msra.mxu0 0.0
        %2788 = vmatprep.subr.mxu0 0.0
        %2789 = vmatpush2.msra.mxu0 0.0
        %2790 = vmatprep.subr.mxu0 0.0
        %2791 = vmatpush2.msra.mxu0 0.0
        %2792 = vmatprep.mubr.f32.mxu0 0.0
        %2793 = vmatmul.mubr.f32.gmra.mxu0 %v2722
        %v2794 = vpop.f32.mrf.mxu0
        %v2795 = vadd.f32 0.0, %v2794
        %v2796 = vpop.f32.mrf.mxu0
        %2797 = vdwg.mxu0
        %v2799 = vsel %vm2720, %v2695, 0
        %v2802 = vsel %vm2724, %v2706, 0
        %2804 = vmatprep.subr.mxu0 0.0
        %2805 = vmatpush1.msra.mxu0 0.0
        %2806 = vmatprep.subr.mxu0 0.0
        %2807 = vmatpush1.msra.mxu0 0.0
        %2808 = vmatprep.subr.mxu0 0.0
        %2809 = vmatpush1.msra.mxu0 0.0
        %2810 = vmatprep.subr.mxu0 0.0
        %2811 = vmatpush1.msra.mxu0 0.0
        %2812 = vmatprep.subr.mxu0 0.0
        %2813 = vmatpush1.msra.mxu0 0.0
        %2814 = vmatprep.subr.mxu0 0.0
        %2815 = vmatpush1.msra.mxu0 %v2802
        %2816 = vmatprep.subr.mxu0 0.0
        %2817 = vmatpush1.msra.mxu0 %v2705
        %2818 = vmatprep.subr.mxu0 0.0
        %2819 = vmatpush1.msra.mxu0 %v2704
        %2820 = vmatprep.subr.mxu0 0.0
        %2821 = vmatpush1.msra.mxu0 %v2703
        %2822 = vmatprep.subr.mxu0 0.0
        %2823 = vmatpush1.msra.mxu0 %v2702
        %2824 = vmatprep.subr.mxu0 0.0
        %2825 = vmatpush1.msra.mxu0 %v2701
        %2826 = vmatprep.subr.mxu0 0.0
        %2827 = vmatpush1.msra.mxu0 %v2700
        %2828 = vmatprep.subr.mxu0 0.0
        %2829 = vmatpush1.msra.mxu0 %v2699
        %2830 = vmatprep.subr.mxu0 0.0
        %2831 = vmatpush1.msra.mxu0 %v2698
        %2832 = vmatprep.subr.mxu0 0.0
        %2833 = vmatpush1.msra.mxu0 %v2697
        %2834 = vmatprep.subr.mxu0 0.0
        %2835 = vmatpush1.msra.mxu0 %v2696
        %2836 = vmatprep.subr.mxu0 0.0
        %2837 = vmatpush2.msra.mxu0 0.0
        %2838 = vmatprep.subr.mxu0 0.0
        %2839 = vmatpush2.msra.mxu0 0.0
        %2840 = vmatprep.subr.mxu0 0.0
        %2841 = vmatpush2.msra.mxu0 0.0
        %2842 = vmatprep.subr.mxu0 0.0
        %2843 = vmatpush2.msra.mxu0 0.0
        %2844 = vmatprep.subr.mxu0 0.0
        %2845 = vmatpush2.msra.mxu0 0.0
        %2846 = vmatprep.subr.mxu0 0.0
        %2847 = vmatpush2.msra.mxu0 0.0
        %2848 = vmatprep.subr.mxu0 0.0
        %2849 = vmatpush2.msra.mxu0 0.0
        %2850 = vmatprep.subr.mxu0 0.0
        %2851 = vmatpush2.msra.mxu0 0.0
        %2852 = vmatprep.subr.mxu0 0.0
        %2853 = vmatpush2.msra.mxu0 0.0
        %2854 = vmatprep.subr.mxu0 0.0
        %2855 = vmatpush2.msra.mxu0 0.0
        %2856 = vmatprep.subr.mxu0 0.0
        %2857 = vmatpush2.msra.mxu0 0.0
        %2858 = vmatprep.subr.mxu0 0.0
        %2859 = vmatpush2.msra.mxu0 0.0
        %2860 = vmatprep.subr.mxu0 0.0
        %2861 = vmatpush2.msra.mxu0 0.0
        %2862 = vmatprep.subr.mxu0 0.0
        %2863 = vmatpush2.msra.mxu0 0.0
        %2864 = vmatprep.subr.mxu0 0.0
        %2865 = vmatpush2.msra.mxu0 0.0
        %2866 = vmatprep.subr.mxu0 0.0
        %2867 = vmatpush2.msra.mxu0 0.0
        %2868 = vmatprep.mubr.f32.mxu0 0.0
        %2869 = vmatmul.mubr.f32.gmra.mxu0 %v2799
        %v2870 = vpop.f32.mrf.mxu0
        %v2871 = vadd.f32 %v2795, %v2870
        %v2872 = vpop.f32.mrf.mxu0
        %2873 = vdwg.mxu0
        %v2874 = vld [vmem:[#allocation4 + $0x2] sm:$0x1f]
        %s2875 = scalar_lea.vmem %s7, 176
        %v2876 = vld [vmem:[%s2875] sm:$0xff]
        %v2877 = vld [vmem:[%s2875 + $0x8] sm:$0xff]
        %v2878 = vld [vmem:[%s2875 + $0x10] sm:$0xff]
        %v2879 = vld [vmem:[%s2875 + $0x18] sm:$0xff]
        %v2880 = vld [vmem:[%s2875 + $0x20] sm:$0xff]
        %v2881 = vld [vmem:[%s2875 + $0x28] sm:$0xff]
        %v2882 = vld [vmem:[%s2875 + $0x30] sm:$0xff]
        %v2883 = vld [vmem:[%s2875 + $0x38] sm:$0xff]
        %v2884 = vld [vmem:[%s2875 + $0x40] sm:$0xff]
        %v2885 = vld [vmem:[%s2875 + $0x48] sm:$0xff]
        %v2886 = vld [vmem:[%s2875 + $0x50] sm:$0xf]
        %v2888 = vsel %vm2720, %v2874, 0
        %v2891 = vsel %vm2724, %v2886, 0
        %2893 = vmatprep.subr.mxu0 0.0
        %2894 = vmatpush1.msra.mxu0 0.0
        %2895 = vmatprep.subr.mxu0 0.0
        %2896 = vmatpush1.msra.mxu0 0.0
        %2897 = vmatprep.subr.mxu0 0.0
        %2898 = vmatpush1.msra.mxu0 0.0
        %2899 = vmatprep.subr.mxu0 0.0
        %2900 = vmatpush1.msra.mxu0 0.0
        %2901 = vmatprep.subr.mxu0 0.0
        %2902 = vmatpush1.msra.mxu0 0.0
        %2903 = vmatprep.subr.mxu0 0.0
        %2904 = vmatpush1.msra.mxu0 %v2891
        %2905 = vmatprep.subr.mxu0 0.0
        %2906 = vmatpush1.msra.mxu0 %v2885
        %2907 = vmatprep.subr.mxu0 0.0
        %2908 = vmatpush1.msra.mxu0 %v2884
        %2909 = vmatprep.subr.mxu0 0.0
        %2910 = vmatpush1.msra.mxu0 %v2883
        %2911 = vmatprep.subr.mxu0 0.0
        %2912 = vmatpush1.msra.mxu0 %v2882
        %2913 = vmatprep.subr.mxu0 0.0
        %2914 = vmatpush1.msra.mxu0 %v2881
        %2915 = vmatprep.subr.mxu0 0.0
        %2916 = vmatpush1.msra.mxu0 %v2880
        %2917 = vmatprep.subr.mxu0 0.0
        %2918 = vmatpush1.msra.mxu0 %v2879
        %2919 = vmatprep.subr.mxu0 0.0
        %2920 = vmatpush1.msra.mxu0 %v2878
        %2921 = vmatprep.subr.mxu0 0.0
        %2922 = vmatpush1.msra.mxu0 %v2877
        %2923 = vmatprep.subr.mxu0 0.0
        %2924 = vmatpush1.msra.mxu0 %v2876
        %2925 = vmatprep.subr.mxu0 0.0
        %2926 = vmatpush2.msra.mxu0 0.0
        %2927 = vmatprep.subr.mxu0 0.0
        %2928 = vmatpush2.msra.mxu0 0.0
        %2929 = vmatprep.subr.mxu0 0.0
        %2930 = vmatpush2.msra.mxu0 0.0
        %2931 = vmatprep.subr.mxu0 0.0
        %2932 = vmatpush2.msra.mxu0 0.0
        %2933 = vmatprep.subr.mxu0 0.0
        %2934 = vmatpush2.msra.mxu0 0.0
        %2935 = vmatprep.subr.mxu0 0.0
        %2936 = vmatpush2.msra.mxu0 0.0
        %2937 = vmatprep.subr.mxu0 0.0
        %2938 = vmatpush2.msra.mxu0 0.0
        %2939 = vmatprep.subr.mxu0 0.0
        %2940 = vmatpush2.msra.mxu0 0.0
        %2941 = vmatprep.subr.mxu0 0.0
        %2942 = vmatpush2.msra.mxu0 0.0
        %2943 = vmatprep.subr.mxu0 0.0
        %2944 = vmatpush2.msra.mxu0 0.0
        %2945 = vmatprep.subr.mxu0 0.0
        %2946 = vmatpush2.msra.mxu0 0.0
        %2947 = vmatprep.subr.mxu0 0.0
        %2948 = vmatpush2.msra.mxu0 0.0
        %2949 = vmatprep.subr.mxu0 0.0
        %2950 = vmatpush2.msra.mxu0 0.0
        %2951 = vmatprep.subr.mxu0 0.0
        %2952 = vmatpush2.msra.mxu0 0.0
        %2953 = vmatprep.subr.mxu0 0.0
        %2954 = vmatpush2.msra.mxu0 0.0
        %2955 = vmatprep.subr.mxu0 0.0
        %2956 = vmatpush2.msra.mxu0 0.0
        %2957 = vmatprep.mubr.f32.mxu0 0.0
        %2958 = vmatmul.mubr.f32.gmra.mxu0 %v2888
        %v2959 = vpop.f32.mrf.mxu0
        %v2960 = vadd.f32 0.0, %v2959
        %v2961 = vpop.f32.mrf.mxu0
        %2962 = vdwg.mxu0
        %v2963 = vadd.f32 %v2871, %v2960
        %v2964 = vld [vmem:[%s8] sm:$0x1]
        %v2966 = vlaneseq
        %v2967 = vshrl.u32 %v2966, 7
        %v2968 = vsub.s32 0, %v2967
        %v2969 = vrot.slane %v2964, %v2968
        %v2971 = vadd.f32 %v2963, %v2969
        %v2972 = vmax.f32 %v2971, 0.0
        %v2973 = vld [vmem:[%s9] sm:$0xff]
        %v2974 = vld [vmem:[%s9 + $0x8] sm:$0xff]
        %v2975 = vld [vmem:[%s9 + $0x10] sm:$0xff]
        %v2976 = vld [vmem:[%s9 + $0x18] sm:$0xff]
        %v2977 = vld [vmem:[%s9 + $0x20] sm:$0xff]
        %v2978 = vld [vmem:[%s9 + $0x28] sm:$0xff]
        %v2979 = vld [vmem:[%s9 + $0x30] sm:$0xff]
        %v2980 = vld [vmem:[%s9 + $0x38] sm:$0xff]
        %v2981 = vld [vmem:[%s9 + $0x40] sm:$0xff]
        %v2982 = vld [vmem:[%s9 + $0x48] sm:$0xff]
        %v2983 = vld [vmem:[%s9 + $0x50] sm:$0xff]
        %v2984 = vld [vmem:[%s9 + $0x58] sm:$0xff]
        %v2985 = vld [vmem:[%s9 + $0x60] sm:$0xff]
        %v2986 = vld [vmem:[%s9 + $0x68] sm:$0xff]
        %v2987 = vld [vmem:[%s9 + $0x70] sm:$0xff]
        %v2988 = vld [vmem:[%s9 + $0x78] sm:$0xff]
        %v2989 = vld [vmem:[%s9 + $0x80] sm:$0xff]
        %v2990 = vld [vmem:[%s9 + $0x88] sm:$0xff]
        %v2991 = vld [vmem:[%s9 + $0x90] sm:$0xff]
        %v2992 = vld [vmem:[%s9 + $0x98] sm:$0xff]
        %v2993 = vld [vmem:[%s9 + $0xa0] sm:$0xff]
        %v2994 = vld [vmem:[%s9 + $0xa8] sm:$0xff]
        %v2995 = vld [vmem:[%s9 + $0xb0] sm:$0xff]
        %v2996 = vld [vmem:[%s9 + $0xb8] sm:$0xff]
        %v2997 = vld [vmem:[%s9 + $0xc0] sm:$0xff]
        %v2998 = vld [vmem:[%s9 + $0xc8] sm:$0xff]
        %v2999 = vld [vmem:[%s9 + $0xd0] sm:$0xff]
        %v3000 = vld [vmem:[%s9 + $0xd8] sm:$0xff]
        %v3001 = vld [vmem:[%s9 + $0xe0] sm:$0xff]
        %v3002 = vld [vmem:[%s9 + $0xe8] sm:$0xff]
        %s3003 = scalar_lea.vmem %s9, 240
        %v3004 = vld [vmem:[%s3003] sm:$0xff]
        %v3005 = vld [vmem:[%s3003 + $0x8] sm:$0xff]
        %v3006 = vld [vmem:[%s3003 + $0x10] sm:$0xff]
        %v3007 = vld [vmem:[%s3003 + $0x18] sm:$0xff]
        %v3008 = vld [vmem:[%s3003 + $0x20] sm:$0xff]
        %v3009 = vld [vmem:[%s3003 + $0x28] sm:$0xff]
        %v3010 = vld [vmem:[%s3003 + $0x30] sm:$0xff]
        %v3011 = vld [vmem:[%s3003 + $0x38] sm:$0xff]
        %v3012 = vld [vmem:[%s3003 + $0x40] sm:$0xff]
        %v3013 = vld [vmem:[%s3003 + $0x48] sm:$0xff]
        %v3014 = vld [vmem:[%s3003 + $0x50] sm:$0xff]
        %v3015 = vld [vmem:[%s3003 + $0x58] sm:$0xff]
        %v3016 = vld [vmem:[%s3003 + $0x60] sm:$0xff]
        %v3017 = vld [vmem:[%s3003 + $0x68] sm:$0xff]
        %v3018 = vld [vmem:[%s3003 + $0x70] sm:$0xff]
        %v3019 = vld [vmem:[%s3003 + $0x78] sm:$0xff]
        %v3020 = vld [vmem:[%s3003 + $0x80] sm:$0xff]
        %v3021 = vld [vmem:[%s3003 + $0x88] sm:$0xff]
        %v3022 = vld [vmem:[%s3003 + $0x90] sm:$0xff]
        %v3023 = vld [vmem:[%s3003 + $0x98] sm:$0xff]
        %v3024 = vld [vmem:[%s3003 + $0xa0] sm:$0xff]
        %v3025 = vld [vmem:[%s3003 + $0xa8] sm:$0xff]
        %v3026 = vld [vmem:[%s3003 + $0xb0] sm:$0xff]
        %v3027 = vld [vmem:[%s3003 + $0xb8] sm:$0xff]
        %v3028 = vld [vmem:[%s3003 + $0xc0] sm:$0xff]
        %v3029 = vld [vmem:[%s3003 + $0xc8] sm:$0xff]
        %v3030 = vld [vmem:[%s3003 + $0xd0] sm:$0xff]
        %v3031 = vld [vmem:[%s3003 + $0xd8] sm:$0xff]
        %v3032 = vld [vmem:[%s3003 + $0xe0] sm:$0xff]
        %v3033 = vld [vmem:[%s3003 + $0xe8] sm:$0xff]
        %v3035 = vrot.slane %v2972, 1
        %vm3036 = vcmask 982016
        %v3037 = vsel %vm3036, %v3035, 0
        %3039 = vmatprep.subr.mxu0 0.0
        %3040 = vmatpush1.msra.mxu0 0.0
        %3041 = vmatprep.subr.mxu0 %v3033
        %3042 = vmatpush1.msra.mxu0 %v3032
        %3043 = vmatprep.subr.mxu0 %v3031
        %3044 = vmatpush1.msra.mxu0 %v3030
        %3045 = vmatprep.subr.mxu0 %v3029
        %3046 = vmatpush1.msra.mxu0 %v3028
        %3047 = vmatprep.subr.mxu0 %v3027
        %3048 = vmatpush1.msra.mxu0 %v3026
        %3049 = vmatprep.subr.mxu0 %v3025
        %3050 = vmatpush1.msra.mxu0 %v3024
        %3051 = vmatprep.subr.mxu0 %v3023
        %3052 = vmatpush1.msra.mxu0 %v3022
        %3053 = vmatprep.subr.mxu0 %v3021
        %3054 = vmatpush1.msra.mxu0 %v3020
        %3055 = vmatprep.subr.mxu0 %v3019
        %3056 = vmatpush1.msra.mxu0 %v3018
        %3057 = vmatprep.subr.mxu0 %v3017
        %3058 = vmatpush1.msra.mxu0 %v3016
        %3059 = vmatprep.subr.mxu0 %v3015
        %3060 = vmatpush1.msra.mxu0 %v3014
        %3061 = vmatprep.subr.mxu0 %v3013
        %3062 = vmatpush1.msra.mxu0 %v3012
        %3063 = vmatprep.subr.mxu0 %v3011
        %3064 = vmatpush1.msra.mxu0 %v3010
        %3065 = vmatprep.subr.mxu0 %v3009
        %3066 = vmatpush1.msra.mxu0 %v3008
        %3067 = vmatprep.subr.mxu0 %v3007
        %3068 = vmatpush1.msra.mxu0 %v3006
        %3069 = vmatprep.subr.mxu0 %v3005
        %3070 = vmatpush1.msra.mxu0 %v3004
        %3071 = vmatprep.subr.mxu0 0.0
        %3072 = vmatpush2.msra.mxu0 0.0
        %3073 = vmatprep.subr.mxu0 0.0
        %3074 = vmatpush2.msra.mxu0 0.0
        %3075 = vmatprep.subr.mxu0 0.0
        %3076 = vmatpush2.msra.mxu0 0.0
        %3077 = vmatprep.subr.mxu0 0.0
        %3078 = vmatpush2.msra.mxu0 0.0
        %3079 = vmatprep.subr.mxu0 0.0
        %3080 = vmatpush2.msra.mxu0 0.0
        %3081 = vmatprep.subr.mxu0 0.0
        %3082 = vmatpush2.msra.mxu0 0.0
        %3083 = vmatprep.subr.mxu0 0.0
        %3084 = vmatpush2.msra.mxu0 0.0
        %3085 = vmatprep.subr.mxu0 0.0
        %3086 = vmatpush2.msra.mxu0 0.0
        %3087 = vmatprep.subr.mxu0 0.0
        %3088 = vmatpush2.msra.mxu0 0.0
        %3089 = vmatprep.subr.mxu0 0.0
        %3090 = vmatpush2.msra.mxu0 0.0
        %3091 = vmatprep.subr.mxu0 0.0
        %3092 = vmatpush2.msra.mxu0 0.0
        %3093 = vmatprep.subr.mxu0 0.0
        %3094 = vmatpush2.msra.mxu0 0.0
        %3095 = vmatprep.subr.mxu0 0.0
        %3096 = vmatpush2.msra.mxu0 0.0
        %3097 = vmatprep.subr.mxu0 0.0
        %3098 = vmatpush2.msra.mxu0 0.0
        %3099 = vmatprep.subr.mxu0 0.0
        %3100 = vmatpush2.msra.mxu0 0.0
        %3101 = vmatprep.subr.mxu0 0.0
        %3102 = vmatpush2.msra.mxu0 0.0
        %3103 = vmatprep.mubr.f32.mxu0 0.0
        %3104 = vmatmul.mubr.f32.gmra.mxu0 %v3037
        %v3105 = vpop.f32.mrf.mxu0
        %v3106 = vadd.f32 0.0, %v3105
        %v3107 = vpop.f32.mrf.mxu0
        %v3108 = vadd.f32 0.0, %v3107
        %3109 = vdwg.mxu0
        %v3110 = vsel %vm3036, %v2972, 0
        %3112 = vmatprep.subr.mxu0 0.0
        %3113 = vmatpush1.msra.mxu0 0.0
        %3114 = vmatprep.subr.mxu0 %v3002
        %3115 = vmatpush1.msra.mxu0 %v3001
        %3116 = vmatprep.subr.mxu0 %v3000
        %3117 = vmatpush1.msra.mxu0 %v2999
        %3118 = vmatprep.subr.mxu0 %v2998
        %3119 = vmatpush1.msra.mxu0 %v2997
        %3120 = vmatprep.subr.mxu0 %v2996
        %3121 = vmatpush1.msra.mxu0 %v2995
        %3122 = vmatprep.subr.mxu0 %v2994
        %3123 = vmatpush1.msra.mxu0 %v2993
        %3124 = vmatprep.subr.mxu0 %v2992
        %3125 = vmatpush1.msra.mxu0 %v2991
        %3126 = vmatprep.subr.mxu0 %v2990
        %3127 = vmatpush1.msra.mxu0 %v2989
        %3128 = vmatprep.subr.mxu0 %v2988
        %3129 = vmatpush1.msra.mxu0 %v2987
        %3130 = vmatprep.subr.mxu0 %v2986
        %3131 = vmatpush1.msra.mxu0 %v2985
        %3132 = vmatprep.subr.mxu0 %v2984
        %3133 = vmatpush1.msra.mxu0 %v2983
        %3134 = vmatprep.subr.mxu0 %v2982
        %3135 = vmatpush1.msra.mxu0 %v2981
        %3136 = vmatprep.subr.mxu0 %v2980
        %3137 = vmatpush1.msra.mxu0 %v2979
        %3138 = vmatprep.subr.mxu0 %v2978
        %3139 = vmatpush1.msra.mxu0 %v2977
        %3140 = vmatprep.subr.mxu0 %v2976
        %3141 = vmatpush1.msra.mxu0 %v2975
        %3142 = vmatprep.subr.mxu0 %v2974
        %3143 = vmatpush1.msra.mxu0 %v2973
        %3144 = vmatprep.subr.mxu0 0.0
        %3145 = vmatpush2.msra.mxu0 0.0
        %3146 = vmatprep.subr.mxu0 0.0
        %3147 = vmatpush2.msra.mxu0 0.0
        %3148 = vmatprep.subr.mxu0 0.0
        %3149 = vmatpush2.msra.mxu0 0.0
        %3150 = vmatprep.subr.mxu0 0.0
        %3151 = vmatpush2.msra.mxu0 0.0
        %3152 = vmatprep.subr.mxu0 0.0
        %3153 = vmatpush2.msra.mxu0 0.0
        %3154 = vmatprep.subr.mxu0 0.0
        %3155 = vmatpush2.msra.mxu0 0.0
        %3156 = vmatprep.subr.mxu0 0.0
        %3157 = vmatpush2.msra.mxu0 0.0
        %3158 = vmatprep.subr.mxu0 0.0
        %3159 = vmatpush2.msra.mxu0 0.0
        %3160 = vmatprep.subr.mxu0 0.0
        %3161 = vmatpush2.msra.mxu0 0.0
        %3162 = vmatprep.subr.mxu0 0.0
        %3163 = vmatpush2.msra.mxu0 0.0
        %3164 = vmatprep.subr.mxu0 0.0
        %3165 = vmatpush2.msra.mxu0 0.0
        %3166 = vmatprep.subr.mxu0 0.0
        %3167 = vmatpush2.msra.mxu0 0.0
        %3168 = vmatprep.subr.mxu0 0.0
        %3169 = vmatpush2.msra.mxu0 0.0
        %3170 = vmatprep.subr.mxu0 0.0
        %3171 = vmatpush2.msra.mxu0 0.0
        %3172 = vmatprep.subr.mxu0 0.0
        %3173 = vmatpush2.msra.mxu0 0.0
        %3174 = vmatprep.subr.mxu0 0.0
        %3175 = vmatpush2.msra.mxu0 0.0
        %3176 = vmatprep.mubr.f32.mxu0 0.0
        %3177 = vmatmul.mubr.f32.gmra.mxu0 %v3110
        %v3178 = vpop.f32.mrf.mxu0
        %v3179 = vadd.f32 %v3106, %v3178
        %v3180 = vpop.f32.mrf.mxu0
        %v3181 = vadd.f32 %v3108, %v3180
        %3182 = vdwg.mxu0
        %s3183 = scalar_lea.vmem %s9, 480
        %v3184 = vld [vmem:[%s3183] sm:$0xff]
        %v3185 = vld [vmem:[%s3183 + $0x8] sm:$0xff]
        %v3186 = vld [vmem:[%s3183 + $0x10] sm:$0xff]
        %v3187 = vld [vmem:[%s3183 + $0x18] sm:$0xff]
        %v3188 = vld [vmem:[%s3183 + $0x20] sm:$0xff]
        %v3189 = vld [vmem:[%s3183 + $0x28] sm:$0xff]
        %v3190 = vld [vmem:[%s3183 + $0x30] sm:$0xff]
        %v3191 = vld [vmem:[%s3183 + $0x38] sm:$0xff]
        %v3192 = vld [vmem:[%s3183 + $0x40] sm:$0xff]
        %v3193 = vld [vmem:[%s3183 + $0x48] sm:$0xff]
        %v3194 = vld [vmem:[%s3183 + $0x50] sm:$0xff]
        %v3195 = vld [vmem:[%s3183 + $0x58] sm:$0xff]
        %v3196 = vld [vmem:[%s3183 + $0x60] sm:$0xff]
        %v3197 = vld [vmem:[%s3183 + $0x68] sm:$0xff]
        %v3198 = vld [vmem:[%s3183 + $0x70] sm:$0xff]
        %v3199 = vld [vmem:[%s3183 + $0x78] sm:$0xff]
        %v3200 = vld [vmem:[%s3183 + $0x80] sm:$0xff]
        %v3201 = vld [vmem:[%s3183 + $0x88] sm:$0xff]
        %v3202 = vld [vmem:[%s3183 + $0x90] sm:$0xff]
        %v3203 = vld [vmem:[%s3183 + $0x98] sm:$0xff]
        %v3204 = vld [vmem:[%s3183 + $0xa0] sm:$0xff]
        %v3205 = vld [vmem:[%s3183 + $0xa8] sm:$0xff]
        %v3206 = vld [vmem:[%s3183 + $0xb0] sm:$0xff]
        %v3207 = vld [vmem:[%s3183 + $0xb8] sm:$0xff]
        %v3208 = vld [vmem:[%s3183 + $0xc0] sm:$0xff]
        %v3209 = vld [vmem:[%s3183 + $0xc8] sm:$0xff]
        %v3210 = vld [vmem:[%s3183 + $0xd0] sm:$0xff]
        %v3211 = vld [vmem:[%s3183 + $0xd8] sm:$0xff]
        %v3212 = vld [vmem:[%s3183 + $0xe0] sm:$0xff]
        %v3213 = vld [vmem:[%s3183 + $0xe8] sm:$0xff]
        %v3214 = vrot.slane %v2972, 2
        %v3215 = vsel %vm3036, %v3214, 0
        %3217 = vmatprep.subr.mxu0 0.0
        %3218 = vmatpush1.msra.mxu0 0.0
        %3219 = vmatprep.subr.mxu0 %v3213
        %3220 = vmatpush1.msra.mxu0 %v3212
        %3221 = vmatprep.subr.mxu0 %v3211
        %3222 = vmatpush1.msra.mxu0 %v3210
        %3223 = vmatprep.subr.mxu0 %v3209
        %3224 = vmatpush1.msra.mxu0 %v3208
        %3225 = vmatprep.subr.mxu0 %v3207
        %3226 = vmatpush1.msra.mxu0 %v3206
        %3227 = vmatprep.subr.mxu0 %v3205
        %3228 = vmatpush1.msra.mxu0 %v3204
        %3229 = vmatprep.subr.mxu0 %v3203
        %3230 = vmatpush1.msra.mxu0 %v3202
        %3231 = vmatprep.subr.mxu0 %v3201
        %3232 = vmatpush1.msra.mxu0 %v3200
        %3233 = vmatprep.subr.mxu0 %v3199
        %3234 = vmatpush1.msra.mxu0 %v3198
        %3235 = vmatprep.subr.mxu0 %v3197
        %3236 = vmatpush1.msra.mxu0 %v3196
        %3237 = vmatprep.subr.mxu0 %v3195
        %3238 = vmatpush1.msra.mxu0 %v3194
        %3239 = vmatprep.subr.mxu0 %v3193
        %3240 = vmatpush1.msra.mxu0 %v3192
        %3241 = vmatprep.subr.mxu0 %v3191
        %3242 = vmatpush1.msra.mxu0 %v3190
        %3243 = vmatprep.subr.mxu0 %v3189
        %3244 = vmatpush1.msra.mxu0 %v3188
        %3245 = vmatprep.subr.mxu0 %v3187
        %3246 = vmatpush1.msra.mxu0 %v3186
        %3247 = vmatprep.subr.mxu0 %v3185
        %3248 = vmatpush1.msra.mxu0 %v3184
        %3249 = vmatprep.subr.mxu0 0.0
        %3250 = vmatpush2.msra.mxu0 0.0
        %3251 = vmatprep.subr.mxu0 0.0
        %3252 = vmatpush2.msra.mxu0 0.0
        %3253 = vmatprep.subr.mxu0 0.0
        %3254 = vmatpush2.msra.mxu0 0.0
        %3255 = vmatprep.subr.mxu0 0.0
        %3256 = vmatpush2.msra.mxu0 0.0
        %3257 = vmatprep.subr.mxu0 0.0
        %3258 = vmatpush2.msra.mxu0 0.0
        %3259 = vmatprep.subr.mxu0 0.0
        %3260 = vmatpush2.msra.mxu0 0.0
        %3261 = vmatprep.subr.mxu0 0.0
        %3262 = vmatpush2.msra.mxu0 0.0
        %3263 = vmatprep.subr.mxu0 0.0
        %3264 = vmatpush2.msra.mxu0 0.0
        %3265 = vmatprep.subr.mxu0 0.0
        %3266 = vmatpush2.msra.mxu0 0.0
        %3267 = vmatprep.subr.mxu0 0.0
        %3268 = vmatpush2.msra.mxu0 0.0
        %3269 = vmatprep.subr.mxu0 0.0
        %3270 = vmatpush2.msra.mxu0 0.0
        %3271 = vmatprep.subr.mxu0 0.0
        %3272 = vmatpush2.msra.mxu0 0.0
        %3273 = vmatprep.subr.mxu0 0.0
        %3274 = vmatpush2.msra.mxu0 0.0
        %3275 = vmatprep.subr.mxu0 0.0
        %3276 = vmatpush2.msra.mxu0 0.0
        %3277 = vmatprep.subr.mxu0 0.0
        %3278 = vmatpush2.msra.mxu0 0.0
        %3279 = vmatprep.subr.mxu0 0.0
        %3280 = vmatpush2.msra.mxu0 0.0
        %3281 = vmatprep.mubr.f32.mxu0 0.0
        %3282 = vmatmul.mubr.f32.gmra.mxu0 %v3215
        %v3283 = vpop.f32.mrf.mxu0
        %v3284 = vadd.f32 0.0, %v3283
        %v3285 = vpop.f32.mrf.mxu0
        %v3286 = vadd.f32 0.0, %v3285
        %3287 = vdwg.mxu0
        %v3288 = vadd.f32 %v3179, %v3284
        %v3289 = vadd.f32 %v3181, %v3286
        %s3290 = scalar_lea.vmem %s9, 720
        %v3291 = vld [vmem:[%s3290] sm:$0xff]
        %v3292 = vld [vmem:[%s3290 + $0x8] sm:$0xff]
        %v3293 = vld [vmem:[%s3290 + $0x10] sm:$0xff]
        %v3294 = vld [vmem:[%s3290 + $0x18] sm:$0xff]
        %v3295 = vld [vmem:[%s3290 + $0x20] sm:$0xff]
        %v3296 = vld [vmem:[%s3290 + $0x28] sm:$0xff]
        %v3297 = vld [vmem:[%s3290 + $0x30] sm:$0xff]
        %v3298 = vld [vmem:[%s3290 + $0x38] sm:$0xff]
        %v3299 = vld [vmem:[%s3290 + $0x40] sm:$0xff]
        %v3300 = vld [vmem:[%s3290 + $0x48] sm:$0xff]
        %v3301 = vld [vmem:[%s3290 + $0x50] sm:$0xff]
        %v3302 = vld [vmem:[%s3290 + $0x58] sm:$0xff]
        %v3303 = vld [vmem:[%s3290 + $0x60] sm:$0xff]
        %v3304 = vld [vmem:[%s3290 + $0x68] sm:$0xff]
        %v3305 = vld [vmem:[%s3290 + $0x70] sm:$0xff]
        %v3306 = vld [vmem:[%s3290 + $0x78] sm:$0xff]
        %v3307 = vld [vmem:[%s3290 + $0x80] sm:$0xff]
        %v3308 = vld [vmem:[%s3290 + $0x88] sm:$0xff]
        %v3309 = vld [vmem:[%s3290 + $0x90] sm:$0xff]
        %v3310 = vld [vmem:[%s3290 + $0x98] sm:$0xff]
        %v3311 = vld [vmem:[%s3290 + $0xa0] sm:$0xff]
        %v3312 = vld [vmem:[%s3290 + $0xa8] sm:$0xff]
        %v3313 = vld [vmem:[%s3290 + $0xb0] sm:$0xff]
        %v3314 = vld [vmem:[%s3290 + $0xb8] sm:$0xff]
        %v3315 = vld [vmem:[%s3290 + $0xc0] sm:$0xff]
        %v3316 = vld [vmem:[%s3290 + $0xc8] sm:$0xff]
        %v3317 = vld [vmem:[%s3290 + $0xd0] sm:$0xff]
        %v3318 = vld [vmem:[%s3290 + $0xd8] sm:$0xff]
        %v3319 = vld [vmem:[%s3290 + $0xe0] sm:$0xff]
        %v3320 = vld [vmem:[%s3290 + $0xe8] sm:$0xff]
        %v3321 = vrot.slane %v2972, 3
        %v3322 = vsel %vm3036, %v3321, 0
        %3324 = vmatprep.subr.mxu0 0.0
        %3325 = vmatpush1.msra.mxu0 0.0
        %3326 = vmatprep.subr.mxu0 %v3320
        %3327 = vmatpush1.msra.mxu0 %v3319
        %3328 = vmatprep.subr.mxu0 %v3318
        %3329 = vmatpush1.msra.mxu0 %v3317
        %3330 = vmatprep.subr.mxu0 %v3316
        %3331 = vmatpush1.msra.mxu0 %v3315
        %3332 = vmatprep.subr.mxu0 %v3314
        %3333 = vmatpush1.msra.mxu0 %v3313
        %3334 = vmatprep.subr.mxu0 %v3312
        %3335 = vmatpush1.msra.mxu0 %v3311
        %3336 = vmatprep.subr.mxu0 %v3310
        %3337 = vmatpush1.msra.mxu0 %v3309
        %3338 = vmatprep.subr.mxu0 %v3308
        %3339 = vmatpush1.msra.mxu0 %v3307
        %3340 = vmatprep.subr.mxu0 %v3306
        %3341 = vmatpush1.msra.mxu0 %v3305
        %3342 = vmatprep.subr.mxu0 %v3304
        %3343 = vmatpush1.msra.mxu0 %v3303
        %3344 = vmatprep.subr.mxu0 %v3302
        %3345 = vmatpush1.msra.mxu0 %v3301
        %3346 = vmatprep.subr.mxu0 %v3300
        %3347 = vmatpush1.msra.mxu0 %v3299
        %3348 = vmatprep.subr.mxu0 %v3298
        %3349 = vmatpush1.msra.mxu0 %v3297
        %3350 = vmatprep.subr.mxu0 %v3296
        %3351 = vmatpush1.msra.mxu0 %v3295
        %3352 = vmatprep.subr.mxu0 %v3294
        %3353 = vmatpush1.msra.mxu0 %v3293
        %3354 = vmatprep.subr.mxu0 %v3292
        %3355 = vmatpush1.msra.mxu0 %v3291
        %3356 = vmatprep.subr.mxu0 0.0
        %3357 = vmatpush2.msra.mxu0 0.0
        %3358 = vmatprep.subr.mxu0 0.0
        %3359 = vmatpush2.msra.mxu0 0.0
        %3360 = vmatprep.subr.mxu0 0.0
        %3361 = vmatpush2.msra.mxu0 0.0
        %3362 = vmatprep.subr.mxu0 0.0
        %3363 = vmatpush2.msra.mxu0 0.0
        %3364 = vmatprep.subr.mxu0 0.0
        %3365 = vmatpush2.msra.mxu0 0.0
        %3366 = vmatprep.subr.mxu0 0.0
        %3367 = vmatpush2.msra.mxu0 0.0
        %3368 = vmatprep.subr.mxu0 0.0
        %3369 = vmatpush2.msra.mxu0 0.0
        %3370 = vmatprep.subr.mxu0 0.0
        %3371 = vmatpush2.msra.mxu0 0.0
        %3372 = vmatprep.subr.mxu0 0.0
        %3373 = vmatpush2.msra.mxu0 0.0
        %3374 = vmatprep.subr.mxu0 0.0
        %3375 = vmatpush2.msra.mxu0 0.0
        %3376 = vmatprep.subr.mxu0 0.0
        %3377 = vmatpush2.msra.mxu0 0.0
        %3378 = vmatprep.subr.mxu0 0.0
        %3379 = vmatpush2.msra.mxu0 0.0
        %3380 = vmatprep.subr.mxu0 0.0
        %3381 = vmatpush2.msra.mxu0 0.0
        %3382 = vmatprep.subr.mxu0 0.0
        %3383 = vmatpush2.msra.mxu0 0.0
        %3384 = vmatprep.subr.mxu0 0.0
        %3385 = vmatpush2.msra.mxu0 0.0
        %3386 = vmatprep.subr.mxu0 0.0
        %3387 = vmatpush2.msra.mxu0 0.0
        %3388 = vmatprep.mubr.f32.mxu0 0.0
        %3389 = vmatmul.mubr.f32.gmra.mxu0 %v3322
        %v3390 = vpop.f32.mrf.mxu0
        %v3391 = vadd.f32 0.0, %v3390
        %v3392 = vpop.f32.mrf.mxu0
        %v3393 = vadd.f32 0.0, %v3392
        %3394 = vdwg.mxu0
        %v3395 = vadd.f32 %v3288, %v3391
        %v3396 = vadd.f32 %v3289, %v3393
        %s3397 = scalar_lea.vmem %s9, 960
        %v3398 = vld [vmem:[%s3397] sm:$0xff]
        %v3399 = vld [vmem:[%s3397 + $0x8] sm:$0xff]
        %v3400 = vld [vmem:[%s3397 + $0x10] sm:$0xff]
        %v3401 = vld [vmem:[%s3397 + $0x18] sm:$0xff]
        %v3402 = vld [vmem:[%s3397 + $0x20] sm:$0xff]
        %v3403 = vld [vmem:[%s3397 + $0x28] sm:$0xff]
        %v3404 = vld [vmem:[%s3397 + $0x30] sm:$0xff]
        %v3405 = vld [vmem:[%s3397 + $0x38] sm:$0xff]
        %v3406 = vld [vmem:[%s3397 + $0x40] sm:$0xff]
        %v3407 = vld [vmem:[%s3397 + $0x48] sm:$0xff]
        %v3408 = vld [vmem:[%s3397 + $0x50] sm:$0xff]
        %v3409 = vld [vmem:[%s3397 + $0x58] sm:$0xff]
        %v3410 = vld [vmem:[%s3397 + $0x60] sm:$0xff]
        %v3411 = vld [vmem:[%s3397 + $0x68] sm:$0xff]
        %v3412 = vld [vmem:[%s3397 + $0x70] sm:$0xff]
        %v3413 = vld [vmem:[%s3397 + $0x78] sm:$0xff]
        %v3414 = vld [vmem:[%s3397 + $0x80] sm:$0xff]
        %v3415 = vld [vmem:[%s3397 + $0x88] sm:$0xff]
        %v3416 = vld [vmem:[%s3397 + $0x90] sm:$0xff]
        %v3417 = vld [vmem:[%s3397 + $0x98] sm:$0xff]
        %v3418 = vld [vmem:[%s3397 + $0xa0] sm:$0xff]
        %v3419 = vld [vmem:[%s3397 + $0xa8] sm:$0xff]
        %v3420 = vld [vmem:[%s3397 + $0xb0] sm:$0xff]
        %v3421 = vld [vmem:[%s3397 + $0xb8] sm:$0xff]
        %v3422 = vld [vmem:[%s3397 + $0xc0] sm:$0xff]
        %v3423 = vld [vmem:[%s3397 + $0xc8] sm:$0xff]
        %v3424 = vld [vmem:[%s3397 + $0xd0] sm:$0xff]
        %v3425 = vld [vmem:[%s3397 + $0xd8] sm:$0xff]
        %v3426 = vld [vmem:[%s3397 + $0xe0] sm:$0xff]
        %v3427 = vld [vmem:[%s3397 + $0xe8] sm:$0xff]
        %v3428 = vrot.slane %v2972, 4
        %v3429 = vsel %vm3036, %v3428, 0
        %3431 = vmatprep.subr.mxu0 0.0
        %3432 = vmatpush1.msra.mxu0 0.0
        %3433 = vmatprep.subr.mxu0 %v3427
        %3434 = vmatpush1.msra.mxu0 %v3426
        %3435 = vmatprep.subr.mxu0 %v3425
        %3436 = vmatpush1.msra.mxu0 %v3424
        %3437 = vmatprep.subr.mxu0 %v3423
        %3438 = vmatpush1.msra.mxu0 %v3422
        %3439 = vmatprep.subr.mxu0 %v3421
        %3440 = vmatpush1.msra.mxu0 %v3420
        %3441 = vmatprep.subr.mxu0 %v3419
        %3442 = vmatpush1.msra.mxu0 %v3418
        %3443 = vmatprep.subr.mxu0 %v3417
        %3444 = vmatpush1.msra.mxu0 %v3416
        %3445 = vmatprep.subr.mxu0 %v3415
        %3446 = vmatpush1.msra.mxu0 %v3414
        %3447 = vmatprep.subr.mxu0 %v3413
        %3448 = vmatpush1.msra.mxu0 %v3412
        %3449 = vmatprep.subr.mxu0 %v3411
        %3450 = vmatpush1.msra.mxu0 %v3410
        %3451 = vmatprep.subr.mxu0 %v3409
        %3452 = vmatpush1.msra.mxu0 %v3408
        %3453 = vmatprep.subr.mxu0 %v3407
        %3454 = vmatpush1.msra.mxu0 %v3406
        %3455 = vmatprep.subr.mxu0 %v3405
        %3456 = vmatpush1.msra.mxu0 %v3404
        %3457 = vmatprep.subr.mxu0 %v3403
        %3458 = vmatpush1.msra.mxu0 %v3402
        %3459 = vmatprep.subr.mxu0 %v3401
        %3460 = vmatpush1.msra.mxu0 %v3400
        %3461 = vmatprep.subr.mxu0 %v3399
        %3462 = vmatpush1.msra.mxu0 %v3398
        %3463 = vmatprep.subr.mxu0 0.0
        %3464 = vmatpush2.msra.mxu0 0.0
        %3465 = vmatprep.subr.mxu0 0.0
        %3466 = vmatpush2.msra.mxu0 0.0
        %3467 = vmatprep.subr.mxu0 0.0
        %3468 = vmatpush2.msra.mxu0 0.0
        %3469 = vmatprep.subr.mxu0 0.0
        %3470 = vmatpush2.msra.mxu0 0.0
        %3471 = vmatprep.subr.mxu0 0.0
        %3472 = vmatpush2.msra.mxu0 0.0
        %3473 = vmatprep.subr.mxu0 0.0
        %3474 = vmatpush2.msra.mxu0 0.0
        %3475 = vmatprep.subr.mxu0 0.0
        %3476 = vmatpush2.msra.mxu0 0.0
        %3477 = vmatprep.subr.mxu0 0.0
        %3478 = vmatpush2.msra.mxu0 0.0
        %3479 = vmatprep.subr.mxu0 0.0
        %3480 = vmatpush2.msra.mxu0 0.0
        %3481 = vmatprep.subr.mxu0 0.0
        %3482 = vmatpush2.msra.mxu0 0.0
        %3483 = vmatprep.subr.mxu0 0.0
        %3484 = vmatpush2.msra.mxu0 0.0
        %3485 = vmatprep.subr.mxu0 0.0
        %3486 = vmatpush2.msra.mxu0 0.0
        %3487 = vmatprep.subr.mxu0 0.0
        %3488 = vmatpush2.msra.mxu0 0.0
        %3489 = vmatprep.subr.mxu0 0.0
        %3490 = vmatpush2.msra.mxu0 0.0
        %3491 = vmatprep.subr.mxu0 0.0
        %3492 = vmatpush2.msra.mxu0 0.0
        %3493 = vmatprep.subr.mxu0 0.0
        %3494 = vmatpush2.msra.mxu0 0.0
        %3495 = vmatprep.mubr.f32.mxu0 0.0
        %3496 = vmatmul.mubr.f32.gmra.mxu0 %v3429
        %v3497 = vpop.f32.mrf.mxu0
        %v3498 = vadd.f32 0.0, %v3497
        %v3499 = vpop.f32.mrf.mxu0
        %v3500 = vadd.f32 0.0, %v3499
        %3501 = vdwg.mxu0
        %v3502 = vadd.f32 %v3395, %v3498
        %v3503 = vadd.f32 %v3396, %v3500
        %v3504 = vld [vmem:[%s10] sm:$0x3]
        %v3506 = vlaneseq
        %v3507 = vshrl.u32 %v3506, 7
        %v3508 = vsub.s32 0, %v3507
        %v3509 = vrot.slane %v3504, %v3508
        %v3510 = vlaneseq
        %v3511 = vshrl.u32 %v3510, 7
        %v3512 = vsub.s32 1, %v3511
        %v3513 = vrot.slane %v3504, %v3512
        %v3516 = vadd.f32 %v3502, %v3509
        %v3517 = vadd.f32 %v3503, %v3513
        %v3518 = vmax.f32 %v3516, 0.0
        %v3519 = vmax.f32 %v3517, 0.0
        %v3520 = vld [vmem:[%s11] sm:$0xff]
        %v3521 = vld [vmem:[%s11 + $0x8] sm:$0xff]
        %v3522 = vld [vmem:[%s11 + $0x10] sm:$0xff]
        %v3523 = vld [vmem:[%s11 + $0x18] sm:$0xff]
        %v3524 = vld [vmem:[%s11 + $0x20] sm:$0xff]
        %v3525 = vld [vmem:[%s11 + $0x28] sm:$0xff]
        %v3526 = vld [vmem:[%s11 + $0x30] sm:$0xff]
        %v3527 = vld [vmem:[%s11 + $0x38] sm:$0xff]
        %v3528 = vld [vmem:[%s11 + $0x40] sm:$0xff]
        %v3529 = vld [vmem:[%s11 + $0x48] sm:$0xff]
        %v3530 = vld [vmem:[%s11 + $0x50] sm:$0xff]
        %v3531 = vld [vmem:[%s11 + $0x58] sm:$0xff]
        %v3532 = vld [vmem:[%s11 + $0x60] sm:$0xff]
        %v3533 = vld [vmem:[%s11 + $0x68] sm:$0xff]
        %v3534 = vld [vmem:[%s11 + $0x70] sm:$0xff]
        %v3535 = vld [vmem:[%s11 + $0x78] sm:$0xff]
        %v3536 = vld [vmem:[%s11 + $0x80] sm:$0xff]
        %v3537 = vld [vmem:[%s11 + $0x88] sm:$0xff]
        %v3538 = vld [vmem:[%s11 + $0x90] sm:$0xff]
        %v3539 = vld [vmem:[%s11 + $0x98] sm:$0xff]
        %v3540 = vld [vmem:[%s11 + $0xa0] sm:$0xff]
        %v3541 = vld [vmem:[%s11 + $0xa8] sm:$0xff]
        %v3542 = vld [vmem:[%s11 + $0xb0] sm:$0xff]
        %v3543 = vld [vmem:[%s11 + $0xb8] sm:$0xff]
        %v3544 = vld [vmem:[%s11 + $0xc0] sm:$0xff]
        %v3545 = vld [vmem:[%s11 + $0xc8] sm:$0xff]
        %v3546 = vld [vmem:[%s11 + $0xd0] sm:$0xff]
        %v3547 = vld [vmem:[%s11 + $0xd8] sm:$0xff]
        %v3548 = vld [vmem:[%s11 + $0xe0] sm:$0xff]
        %v3549 = vld [vmem:[%s11 + $0xe8] sm:$0xff]
        %v3550 = vld [vmem:[%s11 + $0xf0] sm:$0xff]
        %v3551 = vld [vmem:[%s11 + $0xf8] sm:$0xff]
        %v3552 = vld [vmem:[%s11 + $0x100] sm:$0xff]
        %v3553 = vld [vmem:[%s11 + $0x108] sm:$0xff]
        %v3554 = vld [vmem:[%s11 + $0x110] sm:$0xff]
        %v3555 = vld [vmem:[%s11 + $0x118] sm:$0xff]
        %v3556 = vld [vmem:[%s11 + $0x120] sm:$0xff]
        %v3557 = vld [vmem:[%s11 + $0x128] sm:$0xff]
        %v3558 = vld [vmem:[%s11 + $0x130] sm:$0xff]
        %v3559 = vld [vmem:[%s11 + $0x138] sm:$0xff]
        %v3560 = vld [vmem:[%s11 + $0x140] sm:$0xff]
        %v3561 = vld [vmem:[%s11 + $0x148] sm:$0xff]
        %v3562 = vld [vmem:[%s11 + $0x150] sm:$0xff]
        %v3563 = vld [vmem:[%s11 + $0x158] sm:$0xff]
        %v3564 = vld [vmem:[%s11 + $0x160] sm:$0xff]
        %v3565 = vld [vmem:[%s11 + $0x168] sm:$0xff]
        %v3566 = vld [vmem:[%s11 + $0x170] sm:$0xff]
        %v3567 = vld [vmem:[%s11 + $0x178] sm:$0xff]
        %v3568 = vld [vmem:[%s12] sm:$0x3]
        %v3570 = vlaneseq
        %v3571 = vshrl.u32 %v3570, 7
        %v3572 = vsub.s32 0, %v3571
        %v3573 = vrot.slane %v3568, %v3572
        %v3574 = vlaneseq
        %v3575 = vshrl.u32 %v3574, 7
        %v3576 = vsub.s32 1, %v3575
        %v3577 = vrot.slane %v3568, %v3576
        %vm3580 = vcmask 523264
        %v3582 = vsel %vm3580, %v3519, 0
        %3584 = vmatprep.subr.mxu0 %v3551
        %3585 = vmatpush1.msra.mxu0 %v3550
        %3586 = vmatprep.subr.mxu0 %v3549
        %3587 = vmatpush1.msra.mxu0 %v3548
        %3588 = vmatprep.subr.mxu0 %v3547
        %3589 = vmatpush1.msra.mxu0 %v3546
        %3590 = vmatprep.subr.mxu0 %v3545
        %3591 = vmatpush1.msra.mxu0 %v3544
        %3592 = vmatprep.subr.mxu0 %v3543
        %3593 = vmatpush1.msra.mxu0 %v3542
        %3594 = vmatprep.subr.mxu0 %v3541
        %3595 = vmatpush1.msra.mxu0 %v3540
        %3596 = vmatprep.subr.mxu0 %v3539
        %3597 = vmatpush1.msra.mxu0 %v3538
        %3598 = vmatprep.subr.mxu0 %v3537
        %3599 = vmatpush1.msra.mxu0 %v3536
        %3600 = vmatprep.subr.mxu0 %v3535
        %3601 = vmatpush1.msra.mxu0 %v3534
        %3602 = vmatprep.subr.mxu0 %v3533
        %3603 = vmatpush1.msra.mxu0 %v3532
        %3604 = vmatprep.subr.mxu0 %v3531
        %3605 = vmatpush1.msra.mxu0 %v3530
        %3606 = vmatprep.subr.mxu0 %v3529
        %3607 = vmatpush1.msra.mxu0 %v3528
        %3608 = vmatprep.subr.mxu0 %v3527
        %3609 = vmatpush1.msra.mxu0 %v3526
        %3610 = vmatprep.subr.mxu0 %v3525
        %3611 = vmatpush1.msra.mxu0 %v3524
        %3612 = vmatprep.subr.mxu0 %v3523
        %3613 = vmatpush1.msra.mxu0 %v3522
        %3614 = vmatprep.subr.mxu0 %v3521
        %3615 = vmatpush1.msra.mxu0 %v3520
        %3616 = vmatprep.subr.mxu0 0.0
        %3617 = vmatpush2.msra.mxu0 0.0
        %3618 = vmatprep.subr.mxu0 0.0
        %3619 = vmatpush2.msra.mxu0 0.0
        %3620 = vmatprep.subr.mxu0 0.0
        %3621 = vmatpush2.msra.mxu0 0.0
        %3622 = vmatprep.subr.mxu0 0.0
        %3623 = vmatpush2.msra.mxu0 0.0
        %3624 = vmatprep.subr.mxu0 0.0
        %3625 = vmatpush2.msra.mxu0 0.0
        %3626 = vmatprep.subr.mxu0 0.0
        %3627 = vmatpush2.msra.mxu0 0.0
        %3628 = vmatprep.subr.mxu0 0.0
        %3629 = vmatpush2.msra.mxu0 0.0
        %3630 = vmatprep.subr.mxu0 0.0
        %3631 = vmatpush2.msra.mxu0 0.0
        %3632 = vmatprep.subr.mxu0 %v3567
        %3633 = vmatpush2.msra.mxu0 %v3566
        %3634 = vmatprep.subr.mxu0 %v3565
        %3635 = vmatpush2.msra.mxu0 %v3564
        %3636 = vmatprep.subr.mxu0 %v3563
        %3637 = vmatpush2.msra.mxu0 %v3562
        %3638 = vmatprep.subr.mxu0 %v3561
        %3639 = vmatpush2.msra.mxu0 %v3560
        %3640 = vmatprep.subr.mxu0 %v3559
        %3641 = vmatpush2.msra.mxu0 %v3558
        %3642 = vmatprep.subr.mxu0 %v3557
        %3643 = vmatpush2.msra.mxu0 %v3556
        %3644 = vmatprep.subr.mxu0 %v3555
        %3645 = vmatpush2.msra.mxu0 %v3554
        %3646 = vmatprep.subr.mxu0 %v3553
        %3647 = vmatpush2.msra.mxu0 %v3552
        %3648 = vmatprep.mubr.f32.mxu0 %v3582
        %3649 = vmatmul.mubr.f32.gmra.mxu0 %v3518
        %v3650 = vpop.f32.mrf.mxu0
        %v3651 = vadd.f32 %v3573, %v3650
        %v3652 = vpop.f32.mrf.mxu0
        %v3653 = vadd.f32 %v3577, %v3652
        %3654 = vdwg.mxu0
        %v3655 = vld [vmem:[%s13] sm:$0xff]
        %v3656 = vld [vmem:[%s13 + $0x8] sm:$0xff]
        %v3657 = vld [vmem:[%s13 + $0x10] sm:$0xff]
        %v3658 = vld [vmem:[%s13 + $0x18] sm:$0xff]
        %v3659 = vld [vmem:[%s13 + $0x20] sm:$0xff]
        %v3660 = vld [vmem:[%s13 + $0x28] sm:$0xff]
        %v3661 = vld [vmem:[%s13 + $0x30] sm:$0xff]
        %v3662 = vld [vmem:[%s13 + $0x38] sm:$0xff]
        %v3663 = vld [vmem:[%s13 + $0x40] sm:$0xff]
        %v3664 = vld [vmem:[%s13 + $0x48] sm:$0xff]
        %v3665 = vld [vmem:[%s13 + $0x50] sm:$0xff]
        %v3666 = vld [vmem:[%s13 + $0x58] sm:$0xff]
        %v3667 = vld [vmem:[%s13 + $0x60] sm:$0xff]
        %v3668 = vld [vmem:[%s13 + $0x68] sm:$0xff]
        %v3669 = vld [vmem:[%s13 + $0x70] sm:$0xff]
        %v3670 = vld [vmem:[%s13 + $0x78] sm:$0xff]
        %v3671 = vld [vmem:[%s13 + $0x80] sm:$0xff]
        %v3672 = vld [vmem:[%s13 + $0x88] sm:$0xff]
        %v3673 = vld [vmem:[%s13 + $0x90] sm:$0xff]
        %v3674 = vld [vmem:[%s13 + $0x98] sm:$0xff]
        %v3675 = vld [vmem:[%s13 + $0xa0] sm:$0xff]
        %v3676 = vld [vmem:[%s13 + $0xa8] sm:$0xff]
        %v3677 = vld [vmem:[%s13 + $0xb0] sm:$0xff]
        %v3678 = vld [vmem:[%s13 + $0xb8] sm:$0xff]
        %v3679 = vld [vmem:[%s14] sm:$0x1]
        %v3681 = vsel %vm3580, %v3653, 0
        %3683 = vmatprep.subr.mxu0 0.0
        %3684 = vmatpush1.msra.mxu0 %v3670
        %3685 = vmatprep.subr.mxu0 0.0
        %3686 = vmatpush1.msra.mxu0 %v3669
        %3687 = vmatprep.subr.mxu0 0.0
        %3688 = vmatpush1.msra.mxu0 %v3668
        %3689 = vmatprep.subr.mxu0 0.0
        %3690 = vmatpush1.msra.mxu0 %v3667
        %3691 = vmatprep.subr.mxu0 0.0
        %3692 = vmatpush1.msra.mxu0 %v3666
        %3693 = vmatprep.subr.mxu0 0.0
        %3694 = vmatpush1.msra.mxu0 %v3665
        %3695 = vmatprep.subr.mxu0 0.0
        %3696 = vmatpush1.msra.mxu0 %v3664
        %3697 = vmatprep.subr.mxu0 0.0
        %3698 = vmatpush1.msra.mxu0 %v3663
        %3699 = vmatprep.subr.mxu0 0.0
        %3700 = vmatpush1.msra.mxu0 %v3662
        %3701 = vmatprep.subr.mxu0 0.0
        %3702 = vmatpush1.msra.mxu0 %v3661
        %3703 = vmatprep.subr.mxu0 0.0
        %3704 = vmatpush1.msra.mxu0 %v3660
        %3705 = vmatprep.subr.mxu0 0.0
        %3706 = vmatpush1.msra.mxu0 %v3659
        %3707 = vmatprep.subr.mxu0 0.0
        %3708 = vmatpush1.msra.mxu0 %v3658
        %3709 = vmatprep.subr.mxu0 0.0
        %3710 = vmatpush1.msra.mxu0 %v3657
        %3711 = vmatprep.subr.mxu0 0.0
        %3712 = vmatpush1.msra.mxu0 %v3656
        %3713 = vmatprep.subr.mxu0 0.0
        %3714 = vmatpush1.msra.mxu0 %v3655
        %3715 = vmatprep.subr.mxu0 0.0
        %3716 = vmatpush2.msra.mxu0 0.0
        %3717 = vmatprep.subr.mxu0 0.0
        %3718 = vmatpush2.msra.mxu0 0.0
        %3719 = vmatprep.subr.mxu0 0.0
        %3720 = vmatpush2.msra.mxu0 0.0
        %3721 = vmatprep.subr.mxu0 0.0
        %3722 = vmatpush2.msra.mxu0 0.0
        %3723 = vmatprep.subr.mxu0 0.0
        %3724 = vmatpush2.msra.mxu0 0.0
        %3725 = vmatprep.subr.mxu0 0.0
        %3726 = vmatpush2.msra.mxu0 0.0
        %3727 = vmatprep.subr.mxu0 0.0
        %3728 = vmatpush2.msra.mxu0 0.0
        %3729 = vmatprep.subr.mxu0 0.0
        %3730 = vmatpush2.msra.mxu0 0.0
        %3731 = vmatprep.subr.mxu0 0.0
        %3732 = vmatpush2.msra.mxu0 %v3678
        %3733 = vmatprep.subr.mxu0 0.0
        %3734 = vmatpush2.msra.mxu0 %v3677
        %3735 = vmatprep.subr.mxu0 0.0
        %3736 = vmatpush2.msra.mxu0 %v3676
        %3737 = vmatprep.subr.mxu0 0.0
        %3738 = vmatpush2.msra.mxu0 %v3675
        %3739 = vmatprep.subr.mxu0 0.0
        %3740 = vmatpush2.msra.mxu0 %v3674
        %3741 = vmatprep.subr.mxu0 0.0
        %3742 = vmatpush2.msra.mxu0 %v3673
        %3743 = vmatprep.subr.mxu0 0.0
        %3744 = vmatpush2.msra.mxu0 %v3672
        %3745 = vmatprep.subr.mxu0 0.0
        %3746 = vmatpush2.msra.mxu0 %v3671
        %3747 = vmatprep.mubr.f32.mxu0 %v3681
        %3748 = vmatmul.mubr.f32.gmra.mxu0 %v3651
        %v3749 = vpop.f32.mrf.mxu0
        %v3750 = vadd.f32 %v3679, %v3749
        %v3751 = vpop.f32.mrf.mxu0
        %3752 = vdwg.mxu0
        %vm3753 = vcmask 73728
        %3754 = vst.msk [vmem:[%s486] sm:$0x1] %vm3753, %v3750
        %s3755 = sand.u32 %s357, 1
        %s3756 = scalar_lea.sflag [#allocation7], %s3755
        %s3757 = sand.u32 %s357, 1
        %s3758 = scalar_lea.vmem [#allocation6], %s3757
        // Predicated region
        $region81: #{keypoint_patch_forward.1} parent=79 // pred_check
          %p3759 = pneg %p367
        $region82: #{keypoint_patch_forward.1} parent=79 // pred_check_branch
          %3761 = sbr.rel (%p3759) target = $region84
        $region83: #{keypoint_patch_forward.1} parent=79 // pred_region
          %s3763 = ssub.s32 16, 16
          %3764 = vsyncadd %s3756, %s3763
          %s3765 = smul.addr %s29, 16
          %s3766 = scalar_lea.hbm %s15, %s3765
          %s3768 = sshll.u32 %s3758, 4
          %s3769 = int_to_ptr.vmem [resolvable:$true] %s3768
          %3771 = dma.vmem_to_hbm [thread:$0]  %s3769, 16, %s3766, %s3756
        $region84: #{keypoint_patch_forward.1} parent=79 // pred_fallthru
          _
      $region80: #{keypoint_patch_forward.1} parent=5 // pred_fallthru
        _
      %p3772 = scmp.le.s32.totalorder 2, %s24
      // Predicated region
      $region85: #{keypoint_patch_forward.1} parent=5 // pred_check
        %p3773 = pneg %p3772
      $region86: #{keypoint_patch_forward.1} parent=5 // pred_check_branch
        %3775 = sbr.rel (%p3773) target = $region88
      $region87: #{keypoint_patch_forward.1} parent=5 // pred_region
        %s3776 = ssub.s32 %s24, 2
        // Predicated region
        $region89: #{keypoint_patch_forward.1} parent=87 // pred_check
          %p3777 = pneg %p373
        $region90: #{keypoint_patch_forward.1} parent=87 // pred_check_branch
          %3779 = sbr.rel (%p3777) target = $region92
        $region91: #{keypoint_patch_forward.1} parent=87 // pred_region
          %s3780 = sand.u32 %s358, 1
          %s3781 = scalar_lea.sflag [#allocation7], %s3780
          %s3782 = sand.u32 %s358, 1
          %s3783 = scalar_lea.vmem [#allocation6], %s3782
          %3784 = dma.done %s3781, 16
        $region92: #{keypoint_patch_forward.1} parent=87 // pred_fallthru
          _
      $region88: #{keypoint_patch_forward.1} parent=5 // pred_fallthru
        _
    $region6: #{keypoint_patch_forward.1} parent=1 // loop_footer
      %s28 = sadd.s32 1, %s24
    $region7: #{keypoint_patch_forward.1} parent=1 // loop_footer_branch
      %23 = sbr.rel target = $region3
    $region8: #{keypoint_patch_forward.1} parent=1 // loop_exit
      _
    %3785 = vsyncpa [#allocation7], 1
    %s3786 = scalar_lea.sflag [#allocation7], 1
    %3787 = vsyncpa %s3786, 1

</llo_original>
